<compile_context>
chip_gen: v7x
topology: tpu7x:2x2x1
jax: 0.10.0
libtpu: 0.0.40
codegen_flags: <defaults>
</compile_context>

<pallas_src>
import functools
import math

import jax
import jax.numpy as jnp
from jax.experimental import pallas as pl
from jax.experimental.pallas import tpu as pltpu


# ------------------------------ small helpers --------------------------------

def _round_up(x, m):
    return (x + m - 1) // m * m


def _pick_tile(size, preferred):
    # Largest preferred tile that divides `size`; fall back to the full dim
    # (full-extent blocks are always legal regardless of (8,128) divisibility).
    for t in preferred:
        if t <= size and size % t == 0:
            return t
    return size


def _pad_rows(x, rows):
    if x.shape[0] == rows:
        return x
    return jnp.pad(x, ((0, rows - x.shape[0]), (0, 0)))


def _choose_tiles(M, K, tn, has_ln, has_res, budget=24 << 20):
    """Pick (tm, tk) so the double-buffered working set stays under `budget`."""
    def usage(tm, tk):
        u = 2 * 2 * (tm * tk + tk * tn + tm * tn)      # x, w, out: bf16, double-buffered
        if has_res:
            u += 2 * 2 * tm * tn                       # residual
        u += 4 * tm * tn                               # f32 accumulator
        if has_ln:
            u += 2 * tm * K + 2 * 2 * 2 * K            # LN cache + gamma/beta
        return u

    if has_ln:                                         # LN needs the full row
        tk_opts = [K]
    else:
        tk_opts = [t for t in (K, 2048, 1024, 512, 256, 128)
                   if 0 < t <= K and K % t == 0] or [K]
    m_cap = _round_up(M, 8)
    tm_opts = [t for t in (512, 256, 128, 64, 32, 16, 8) if t <= m_cap] or [m_cap]

    for tm in tm_opts:
        for tk in tk_opts:
            if usage(tm, tk) <= budget:
                return tm, tk
    return tm_opts[-1], tk_opts[-1]


# ----------------------------- Pallas kernels --------------------------------

def _fused_matmul_kernel(*refs, has_ln, has_bias, has_out_ln, has_residual,
                         activation):
    # refs = (x, w, [ln_g, ln_b], [bias], [out_g, out_b], [residual],
    #         out, acc_scratch, [xln_scratch])
    it = iter(refs)
    x_ref = next(it)
    w_ref = next(it)
    g_ref = next(it) if has_ln else None
    bln_ref = next(it) if has_ln else None
    bias_ref = next(it) if has_bias else None
    og_ref = next(it) if has_out_ln else None
    ob_ref = next(it) if has_out_ln else None
    res_ref = next(it) if has_residual else None
    o_ref = next(it)
    acc_ref = next(it)
    xln_ref = next(it) if has_ln else None

    k_idx = pl.program_id(2)

    @pl.when(k_idx == 0)
    def _():
        acc_ref[...] = jnp.zeros_like(acc_ref)

    if has_ln:
        # LN (eps=1e-5) fused on the full-K row; computed once at j==0 and
        # cached in VMEM for the rest of the N sweep of this row tile.
        @pl.when(pl.program_id(1) == 0)
        def _():
            xf = x_ref[...].astype(jnp.float32)
            mean = jnp.mean(xf, axis=-1, keepdims=True)
            var = jnp.mean(jnp.square(xf - mean), axis=-1, keepdims=True)
            xn = (xf - mean) * jax.lax.rsqrt(var + 1e-5)
            xln_ref[...] = (xn * g_ref[...].astype(jnp.float32)
                            + bln_ref[...].astype(jnp.float32)).astype(xln_ref.dtype)
        x = xln_ref[...]
    else:
        x = x_ref[...]

    acc_ref[...] += jnp.dot(x, w_ref[...], preferred_element_type=jnp.float32)

    @pl.when(k_idx == pl.num_programs(2) - 1)
    def _():
        acc = acc_ref[...]
        if has_bias:
            acc = acc + bias_ref[...].astype(jnp.float32)
        if activation == "gelu":  # exact erf GELU (PyTorch nn.GELU default)
            acc = 0.5 * acc * (1.0 + jax.lax.erf(acc * (1.0 / math.sqrt(2.0))))
        if has_out_ln:            # output-side LayerNorm (requires tn == N)
            mean = jnp.mean(acc, axis=-1, keepdims=True)
            var = jnp.mean(jnp.square(acc - mean), axis=-1, keepdims=True)
            acc = (acc - mean) * jax.lax.rsqrt(var + 1e-5)
            acc = acc * og_ref[...].astype(jnp.float32) + ob_ref[...].astype(jnp.float32)
        if has_residual:
            acc = acc + res_ref[...].astype(jnp.float32)
        o_ref[...] = acc.astype(o_ref.dtype)


def _attention_kernel(q_ref, k_ref, v_ref, o_ref, *, group_heads, dim_head, scale):
    # One (batch, head-group) per grid step. Q/K/V blocks are 128-lane-aligned
    # slabs of `group_heads` heads; output is stored lane-dense per group.
    q_all = q_ref[0] * jnp.array(scale, dtype=q_ref.dtype)   # fold softmax scale (bf16)
    k_all = k_ref[0]
    v_all = v_ref[0]
    outs = []
    for h in range(group_heads):                              # small bounded unroll
        lo = h * dim_head
        q = q_all[:, lo:lo + dim_head]
        k = k_all[:, lo:lo + dim_head]
        v = v_all[:, lo:lo + dim_head]
        s = jax.lax.dot_general(q, k, (((1,), (1,)), ((), ())),
                                preferred_element_type=jnp.float32)
        m = jnp.max(s, axis=-1, keepdims=True)
        p = jnp.exp(s - m)
        p = p * pl.reciprocal(jnp.sum(p, axis=-1, keepdims=True), approx=True)
        outs.append(jnp.dot(p.astype(v.dtype), v,
                            preferred_element_type=jnp.float32).astype(o_ref.dtype))
    o_ref[0] = outs[0] if group_heads == 1 else jnp.concatenate(outs, axis=-1)


# -------------------------------- wrappers ------------------------------------

def fused_linear(x, w, b=None, *, ln=None, out_ln=None, residual=None,
                 activation=None, out_dtype=None):
    """o = [LN(x)] @ w [+ b] [GELU] [LN_out] [+ residual], tiled with f32 acc."""
    M, K = x.shape
    N = w.shape[1]
    out_dtype = x.dtype if out_dtype is None else out_dtype

    has_ln = ln is not None
    has_out_ln = out_ln is not None
    has_bias = b is not None
    has_res = residual is not None

    tn = N if has_out_ln else _pick_tile(N, (512, 256, 128))
    tm, tk = _choose_tiles(M, K, tn, has_ln, has_res)

    # Only pad when a single row tile exceeds M (tiny inputs, e.g. the cls head);
    # otherwise a cdiv grid handles the partial boundary block (rows are
    # independent; overhang rows are never written back).
    padded = M < tm
    xin = _pad_rows(x, tm) if padded else x
    rin = (_pad_rows(residual, tm) if padded else residual) if has_res else None
    mp = xin.shape[0]

    inputs = [xin, w]
    in_specs = [pl.BlockSpec((tm, tk), lambda i, j, k: (i, k)),
                pl.BlockSpec((tk, tn), lambda i, j, k: (k, j))]
    if has_ln:
        g, beta = ln
        inputs += [g.reshape(1, K), beta.reshape(1, K)]
        in_specs += [pl.BlockSpec((1, tk), lambda i, j, k: (0, k)),
                     pl.BlockSpec((1, tk), lambda i, j, k: (0, k))]
    if has_bias:
        inputs.append(b.reshape(1, N))
        in_specs.append(pl.BlockSpec((1, tn), lambda i, j, k: (0, j)))
    if has_out_ln:
        og, ob = out_ln
        inputs += [og.reshape(1, N), ob.reshape(1, N)]
        in_specs += [pl.BlockSpec((1, tn), lambda i, j, k: (0, j)),
                     pl.BlockSpec((1, tn), lambda i, j, k: (0, j))]
    if has_res:
        inputs.append(rin)
        in_specs.append(pl.BlockSpec((tm, tn), lambda i, j, k: (i, j)))

    scratch = [pltpu.VMEM((tm, tn), jnp.float32)]
    if has_ln:
        scratch.append(pltpu.VMEM((tm, K), w.dtype))          # cached LN(x) tile

    # Keep the full N sweep on one core when the LN cache is live (it is filled
    # at j==0); otherwise both M and N axes are megacore-parallel.
    sems = (("parallel", "arbitrary", "arbitrary") if has_ln
            else ("parallel", "parallel", "arbitrary"))

    out = pl.pallas_call(
        functools.partial(_fused_matmul_kernel, has_ln=has_ln, has_bias=has_bias,
                          has_out_ln=has_out_ln, has_residual=has_res,
                          activation=activation),
        out_shape=jax.ShapeDtypeStruct((mp, N), out_dtype),
        grid=(pl.cdiv(mp, tm), N // tn, K // tk),
        in_specs=in_specs,
        out_specs=pl.BlockSpec((tm, tn), lambda i, j, k: (i, j)),
        scratch_shapes=scratch,
        compiler_params=pltpu.CompilerParams(
            dimension_semantics=sems,
            vmem_limit_bytes=48 * 1024 * 1024),
    )(*inputs)
    return out[:M] if padded else out


def attention(qkv, *, batch, seq, heads, dim_head, scale):
    inner = heads * dim_head
    qkv3 = qkv.reshape(batch, seq, 3 * inner)                  # free reshape

    # 128-lane-aligned head groups when possible (dim_head 32/64 -> 4/2 heads).
    if inner % 128 == 0 and 128 % dim_head == 0:
        gl = 128
    else:
        gl = inner
    n_groups = inner // gl
    group_heads = gl // dim_head

    out = pl.pallas_call(
        functools.partial(_attention_kernel, group_heads=group_heads,
                          dim_head=dim_head, scale=scale),
        out_shape=jax.ShapeDtypeStruct((batch, seq, inner), qkv.dtype),
        grid=(batch, n_groups),
        in_specs=[pl.BlockSpec((1, seq, gl), lambda b, g: (b, 0, g)),
                  pl.BlockSpec((1, seq, gl), lambda b, g: (b, 0, n_groups + g)),
                  pl.BlockSpec((1, seq, gl), lambda b, g: (b, 0, 2 * n_groups + g))],
        out_specs=pl.BlockSpec((1, seq, gl), lambda b, g: (b, 0, g)),
        compiler_params=pltpu.CompilerParams(
            dimension_semantics=("parallel", "parallel")),
    )(qkv3, qkv3, qkv3)
    return out.reshape(batch * seq, inner)                      # free reshape


# ------------------------------- parameters -----------------------------------

def init_vit_params(key, *, image_size, patch_size, channels, dim, depth,
                    heads, dim_head, mlp_dim, num_classes, dtype=jnp.bfloat16):
    num_patches = (image_size // patch_size) ** 2
    patch_dim = channels * patch_size * patch_size
    inner_dim = heads * dim_head
    keys = jax.random.split(key, 8 + depth)

    def nrm(k, shape, scale=0.02):
        return (scale * jax.random.normal(k, shape)).astype(dtype)

    params = dict(
        patch_ln1_g=jnp.ones((patch_dim,), dtype), patch_ln1_b=jnp.zeros((patch_dim,), dtype),
        patch_w=nrm(keys[0], (patch_dim, dim)), patch_b=jnp.zeros((dim,), dtype),
        patch_ln2_g=jnp.ones((dim,), dtype), patch_ln2_b=jnp.zeros((dim,), dtype),
        cls_token=nrm(keys[1], (1, 1, dim)),
        pos_embedding=nrm(keys[2], (1, num_patches + 1, dim)),
        final_ln_g=jnp.ones((dim,), dtype), final_ln_b=jnp.zeros((dim,), dtype),
        head_w=nrm(keys[3], (dim, num_classes)), head_b=jnp.zeros((num_classes,), dtype),
        layers=[],
    )
    for l in range(depth):
        lk = jax.random.split(keys[8 + l], 4)
        params["layers"].append(dict(
            attn_ln_g=jnp.ones((dim,), dtype), attn_ln_b=jnp.zeros((dim,), dtype),
            w_qkv=nrm(lk[0], (dim, 3 * inner_dim)),                      # bias=False
            w_out=nrm(lk[1], (inner_dim, dim)), b_out=jnp.zeros((dim,), dtype),
            ff_ln_g=jnp.ones((dim,), dtype), ff_ln_b=jnp.zeros((dim,), dtype),
            w_ff1=nrm(lk[2], (dim, mlp_dim)), b_ff1=jnp.zeros((mlp_dim,), dtype),
            w_ff2=nrm(lk[3], (mlp_dim, dim)), b_ff2=jnp.zeros((dim,), dtype),
        ))
    return params


# --------------------------------- forward -------------------------------------

def vit_feature_extractor(x, params, *, patch_size, heads, dim_head):
    B, C, H, W = x.shape
    p = patch_size
    hh, ww = H // p, W // p
    n = hh * ww
    dim = params["patch_w"].shape[1]
    seq = n + 1
    compute_dtype = params["patch_w"].dtype

    # patch embedding: 'b c (h p1) (w p2) -> b (h w) (p1 p2 c)'  (glue in plain JAX)
    patches = x.reshape(B, C, hh, p, ww, p).transpose(0, 2, 4, 3, 5, 1)
    patches = patches.reshape(B * n, p * p * C).astype(compute_dtype)

    # LN1 -> Linear(+bias) -> LN2, all fused into one matmul pass.
    t = fused_linear(patches, params["patch_w"], params["patch_b"],
                     ln=(params["patch_ln1_g"], params["patch_ln1_b"]),
                     out_ln=(params["patch_ln2_g"], params["patch_ln2_b"]))
    t = t.reshape(B, n, dim)

    cls = jnp.broadcast_to(params["cls_token"], (B, 1, dim))
    t = jnp.concatenate([cls, t], axis=1)                  # (B, n+1, dim)
    t = t + params["pos_embedding"][:, :seq]
    # TODO(synk): dropout(0.3) / emb_dropout(0.1) are eval-mode identities here.
    # TODO(synk): cls-concat / pos-emb add stay as small plain-JAX ops (not fused).
    t = t.reshape(B * seq, dim)

    scale = dim_head ** -0.5

    for lp in params["layers"]:
        # --- pre-norm multi-head attention + residual ---
        qkv = fused_linear(t, lp["w_qkv"],                       # LN -> to_qkv (no bias)
                           ln=(lp["attn_ln_g"], lp["attn_ln_b"]))
        o = attention(qkv, batch=B, seq=seq, heads=heads,
                      dim_head=dim_head, scale=scale)            # (B*seq, inner) lane-dense
        t = fused_linear(o, lp["w_out"], lp["b_out"], residual=t)  # proj + residual fused
        # --- pre-norm feed-forward + residual ---
        h = fused_linear(t, lp["w_ff1"], lp["b_ff1"],
                         ln=(lp["ff_ln_g"], lp["ff_ln_b"]), activation="gelu")
        t = fused_linear(h, lp["w_ff2"], lp["b_ff2"], residual=t)

    # pool = 'cls' (LN is row-wise, so pooling before the final LN is equivalent).
    cls_tok = t.reshape(B, seq, dim)[:, 0]
    return fused_linear(cls_tok, params["head_w"], params["head_b"],
                        ln=(params["final_ln_g"], params["final_ln_b"]),
                        out_dtype=jnp.float32)


# ----------------------------------- main ---------------------------------------

if __name__ == "__main__":
    # Structure-faithful small config (patch_size=32, pre-norm ViT blocks, cls pooling);
    # dims scaled down from (dim=1024, depth=6, heads=16, mlp_dim=2048) for a fast test.
    IMAGE_SIZE = 64
    PATCH_SIZE = 32
    CHANNELS = 3
    DIM = 128
    DEPTH = 2
    HEADS = 4
    DIM_HEAD = 32
    MLP_DIM = 256
    OUT_FEATURES = 64
    BATCH = 2

    key = jax.random.PRNGKey(0)
    k_params, k_x = jax.random.split(key)
    params = init_vit_params(
        k_params, image_size=IMAGE_SIZE, patch_size=PATCH_SIZE, channels=CHANNELS,
        dim=DIM, depth=DEPTH, heads=HEADS, dim_head=DIM_HEAD, mlp_dim=MLP_DIM,
        num_classes=OUT_FEATURES)
    x = jax.random.normal(k_x, (BATCH, CHANNELS, IMAGE_SIZE, IMAGE_SIZE), jnp.float32)

    fwd = jax.jit(functools.partial(
        vit_feature_extractor, patch_size=PATCH_SIZE, heads=HEADS, dim_head=DIM_HEAD))
    out = fwd(x, params)
    jax.block_until_ready(out)
    assert out.shape == (BATCH, OUT_FEATURES), out.shape
    print("KERNEL_OK")
</pallas_src>

<mosaic_0001>
module attributes {stable_mosaic.version = 11 : i64} {
  func.func @_fused_matmul_kernel(%arg0: i32, %arg1: i32, %arg2: i32, %arg3: memref<8x3072xbf16, #tpu.memory_space<vmem>>, %arg4: memref<3072x128xbf16, #tpu.memory_space<vmem>>, %arg5: memref<1x3072xbf16, #tpu.memory_space<vmem>>, %arg6: memref<1x3072xbf16, #tpu.memory_space<vmem>>, %arg7: memref<1x128xbf16, #tpu.memory_space<vmem>>, %arg8: memref<1x128xbf16, #tpu.memory_space<vmem>>, %arg9: memref<1x128xbf16, #tpu.memory_space<vmem>>, %arg10: memref<8x128xbf16, #tpu.memory_space<vmem>>, %arg11: memref<8x128xf32, #tpu.memory_space<vmem>>, %arg12: memref<8x3072xbf16, #tpu.memory_space<vmem>>) attributes {dimension_semantics = [#tpu.dimension_semantics<parallel>, #tpu.dimension_semantics<arbitrary>, #tpu.dimension_semantics<arbitrary>], iteration_bounds = array<i64: 1, 1, 1>, scalar_prefetch = 0 : i64, scratch_operands = 2 : i64, tpu.core_type = #tpu.core_type<tc>, window_params = [{transform_indices = @transform_0, window_bounds = array<i64: 8, 3072>}, {transform_indices = @transform_1, window_bounds = array<i64: 3072, 128>}, {transform_indices = @transform_2, window_bounds = array<i64: 1, 3072>}, {transform_indices = @transform_3, window_bounds = array<i64: 1, 3072>}, {transform_indices = @transform_4, window_bounds = array<i64: 1, 128>}, {transform_indices = @transform_5, window_bounds = array<i64: 1, 128>}, {transform_indices = @transform_6, window_bounds = array<i64: 1, 128>}, {transform_indices = @transform_7, window_bounds = array<i64: 8, 128>}]} {
    %c0_i32 = arith.constant 0 : i32
    %0 = arith.cmpi eq, %arg2, %c0_i32 : i32
    %1 = arith.extui %0 : i1 to i32
    %c0_i32_0 = arith.constant 0 : i32
    %2 = arith.cmpi ne, %1, %c0_i32_0 : i32
    scf.if %2 {
      %cst_12 = arith.constant 0.000000e+00 : f32
      %15 = vector.broadcast %cst_12 : f32 to vector<8x128xf32>
      %c0_13 = arith.constant 0 : index
      %c0_14 = arith.constant 0 : index
      %16 = vector.load %arg11[%c0_13, %c0_14] : memref<8x128xf32, #tpu.memory_space<vmem>>, vector<8x128xf32>
      tpu.vector_store %arg11[%c0_13, %c0_14], %15 {strides = array<i32>} : memref<8x128xf32, #tpu.memory_space<vmem>>, vector<8x128xf32>,
    } else {
    }
    %c0_i32_1 = arith.constant 0 : i32
    %3 = arith.cmpi eq, %arg1, %c0_i32_1 : i32
    %4 = arith.extui %3 : i1 to i32
    %c0_i32_2 = arith.constant 0 : i32
    %5 = arith.cmpi ne, %4, %c0_i32_2 : i32
    scf.if %5 {
      %c0_12 = arith.constant 0 : index
      %c0_13 = arith.constant 0 : index
      %15 = vector.load %arg3[%c0_12, %c0_13] : memref<8x3072xbf16, #tpu.memory_space<vmem>>, vector<8x3072xbf16>
      %16 = arith.extf %15 : vector<8x3072xbf16> to vector<8x3072xf32>
      %cst_14 = arith.constant dense<0.000000e+00> : vector<8xf32>
      %17 = vector.multi_reduction <add>, %16, %cst_14 [1] : vector<8x3072xf32> to vector<8xf32>
      %18 = vector.shape_cast %17 : vector<8xf32> to vector<8x1xf32>
      %cst_15 = arith.constant 3.072000e+03 : f32
      %19 = vector.broadcast %cst_15 : f32 to vector<8x1xf32>
      %20 = arith.divf %18, %19 : vector<8x1xf32>
      %21 = vector.broadcast %20 : vector<8x1xf32> to vector<8x3072xf32>
      %22 = arith.subf %16, %21 : vector<8x3072xf32>
      %23 = arith.mulf %22, %22 : vector<8x3072xf32>
      %cst_16 = arith.constant dense<0.000000e+00> : vector<8xf32>
      %24 = vector.multi_reduction <add>, %23, %cst_16 [1] : vector<8x3072xf32> to vector<8xf32>
      %25 = vector.shape_cast %24 : vector<8xf32> to vector<8x1xf32>
      %cst_17 = arith.constant 3.072000e+03 : f32
      %26 = vector.broadcast %cst_17 : f32 to vector<8x1xf32>
      %27 = arith.divf %25, %26 : vector<8x1xf32>
      %28 = vector.broadcast %20 : vector<8x1xf32> to vector<8x3072xf32>
      %29 = arith.subf %16, %28 : vector<8x3072xf32>
      %cst_18 = arith.constant 9.99999974E-6 : f32
      %30 = vector.broadcast %cst_18 : f32 to vector<8x1xf32>
      %31 = arith.addf %27, %30 : vector<8x1xf32>
      %32 = math.rsqrt %31 : vector<8x1xf32>
      %33 = vector.broadcast %32 : vector<8x1xf32> to vector<8x3072xf32>
      %34 = arith.mulf %29, %33 : vector<8x3072xf32>
      %c0_19 = arith.constant 0 : index
      %c0_20 = arith.constant 0 : index
      %35 = vector.load %arg5[%c0_19, %c0_20] : memref<1x3072xbf16, #tpu.memory_space<vmem>>, vector<1x3072xbf16>
      %36 = arith.extf %35 : vector<1x3072xbf16> to vector<1x3072xf32>
      %37 = vector.broadcast %36 : vector<1x3072xf32> to vector<8x3072xf32>
      %38 = arith.mulf %34, %37 : vector<8x3072xf32>
      %c0_21 = arith.constant 0 : index
      %c0_22 = arith.constant 0 : index
      %39 = vector.load %arg6[%c0_21, %c0_22] : memref<1x3072xbf16, #tpu.memory_space<vmem>>, vector<1x3072xbf16>
      %40 = arith.extf %39 : vector<1x3072xbf16> to vector<1x3072xf32>
      %41 = vector.broadcast %40 : vector<1x3072xf32> to vector<8x3072xf32>
      %42 = arith.addf %38, %41 : vector<8x3072xf32>
      %43 = arith.truncf %42 : vector<8x3072xf32> to vector<8x3072xbf16>
      %c0_23 = arith.constant 0 : index
      %c0_24 = arith.constant 0 : index
      %44 = vector.load %arg12[%c0_23, %c0_24] : memref<8x3072xbf16, #tpu.memory_space<vmem>>, vector<8x3072xbf16>
      tpu.vector_store %arg12[%c0_23, %c0_24], %43 {strides = array<i32>} : memref<8x3072xbf16, #tpu.memory_space<vmem>>, vector<8x3072xbf16>,
    } else {
    }
    %c0 = arith.constant 0 : index
    %c0_3 = arith.constant 0 : index
    %6 = vector.load %arg12[%c0, %c0_3] : memref<8x3072xbf16, #tpu.memory_space<vmem>>, vector<8x3072xbf16>
    %c0_4 = arith.constant 0 : index
    %c0_5 = arith.constant 0 : index
    %7 = vector.load %arg11[%c0_4, %c0_5] : memref<8x128xf32, #tpu.memory_space<vmem>>, vector<8x128xf32>
    %c0_6 = arith.constant 0 : index
    %c0_7 = arith.constant 0 : index
    %8 = vector.load %arg4[%c0_6, %c0_7] : memref<3072x128xbf16, #tpu.memory_space<vmem>>, vector<3072x128xbf16>
    %cst = arith.constant dense<0.000000e+00> : vector<8x128xf32>
    %9 = tpu.matmul %6, %8, %cst {dimension_numbers = #tpu.dot_dimension_numbers<[1], [0], [0], [1], [0, 0, 1, 1], [], []>} : vector<8x3072xbf16>, vector<3072x128xbf16>, vector<8x128xf32> -> vector<8x128xf32>
    %10 = arith.addf %7, %9 : vector<8x128xf32>
    %c0_8 = arith.constant 0 : index
    %c0_9 = arith.constant 0 : index
    %11 = vector.load %arg11[%c0_8, %c0_9] : memref<8x128xf32, #tpu.memory_space<vmem>>, vector<8x128xf32>
    tpu.vector_store %arg11[%c0_8, %c0_9], %10 {strides = array<i32>} : memref<8x128xf32, #tpu.memory_space<vmem>>, vector<8x128xf32>,
    %c0_i32_10 = arith.constant 0 : i32
    %12 = arith.cmpi eq, %arg2, %c0_i32_10 : i32
    %13 = arith.extui %12 : i1 to i32
    %c0_i32_11 = arith.constant 0 : i32
    %14 = arith.cmpi ne, %13, %c0_i32_11 : i32
    scf.if %14 {
      %c0_12 = arith.constant 0 : index
      %c0_13 = arith.constant 0 : index
      %15 = vector.load %arg11[%c0_12, %c0_13] : memref<8x128xf32, #tpu.memory_space<vmem>>, vector<8x128xf32>
      %c0_14 = arith.constant 0 : index
      %c0_15 = arith.constant 0 : index
      %16 = vector.load %arg7[%c0_14, %c0_15] : memref<1x128xbf16, #tpu.memory_space<vmem>>, vector<1x128xbf16>
      %17 = arith.extf %16 : vector<1x128xbf16> to vector<1x128xf32>
      %18 = vector.broadcast %17 : vector<1x128xf32> to vector<8x128xf32>
      %19 = arith.addf %15, %18 : vector<8x128xf32>
      %cst_16 = arith.constant dense<0.000000e+00> : vector<8xf32>
      %20 = vector.multi_reduction <add>, %19, %cst_16 [1] : vector<8x128xf32> to vector<8xf32>
      %21 = vector.shape_cast %20 : vector<8xf32> to vector<8x1xf32>
      %cst_17 = arith.constant 1.280000e+02 : f32
      %22 = vector.broadcast %cst_17 : f32 to vector<8x1xf32>
      %23 = arith.divf %21, %22 : vector<8x1xf32>
      %24 = vector.broadcast %23 : vector<8x1xf32> to vector<8x128xf32>
      %25 = arith.subf %19, %24 : vector<8x128xf32>
      %26 = arith.mulf %25, %25 : vector<8x128xf32>
      %cst_18 = arith.constant dense<0.000000e+00> : vector<8xf32>
      %27 = vector.multi_reduction <add>, %26, %cst_18 [1] : vector<8x128xf32> to vector<8xf32>
      %28 = vector.shape_cast %27 : vector<8xf32> to vector<8x1xf32>
      %cst_19 = arith.constant 1.280000e+02 : f32
      %29 = vector.broadcast %cst_19 : f32 to vector<8x1xf32>
      %30 = arith.divf %28, %29 : vector<8x1xf32>
      %31 = vector.broadcast %23 : vector<8x1xf32> to vector<8x128xf32>
      %32 = arith.subf %19, %31 : vector<8x128xf32>
      %cst_20 = arith.constant 9.99999974E-6 : f32
      %33 = vector.broadcast %cst_20 : f32 to vector<8x1xf32>
      %34 = arith.addf %30, %33 : vector<8x1xf32>
      %35 = math.rsqrt %34 : vector<8x1xf32>
      %36 = vector.broadcast %35 : vector<8x1xf32> to vector<8x128xf32>
      %37 = arith.mulf %32, %36 : vector<8x128xf32>
      %c0_21 = arith.constant 0 : index
      %c0_22 = arith.constant 0 : index
      %38 = vector.load %arg8[%c0_21, %c0_22] : memref<1x128xbf16, #tpu.memory_space<vmem>>, vector<1x128xbf16>
      %39 = arith.extf %38 : vector<1x128xbf16> to vector<1x128xf32>
      %40 = vector.broadcast %39 : vector<1x128xf32> to vector<8x128xf32>
      %41 = arith.mulf %37, %40 : vector<8x128xf32>
      %c0_23 = arith.constant 0 : index
      %c0_24 = arith.constant 0 : index
      %42 = vector.load %arg9[%c0_23, %c0_24] : memref<1x128xbf16, #tpu.memory_space<vmem>>, vector<1x128xbf16>
      %43 = arith.extf %42 : vector<1x128xbf16> to vector<1x128xf32>
      %44 = vector.broadcast %43 : vector<1x128xf32> to vector<8x128xf32>
      %45 = arith.addf %41, %44 : vector<8x128xf32>
      %46 = arith.truncf %45 : vector<8x128xf32> to vector<8x128xbf16>
      %c0_25 = arith.constant 0 : index
      %c0_26 = arith.constant 0 : index
      %47 = vector.load %arg10[%c0_25, %c0_26] : memref<8x128xbf16, #tpu.memory_space<vmem>>, vector<8x128xbf16>
      tpu.vector_store %arg10[%c0_25, %c0_26], %46 {strides = array<i32>} : memref<8x128xbf16, #tpu.memory_space<vmem>>, vector<8x128xbf16>,
    } else {
    }
    return
  }
  func.func @transform_0(%arg0: i32, %arg1: i32, %arg2: i32) -> (i32, i32) {
    %c0_i32 = arith.constant 0 : i32
    return %arg0, %arg2 : i32, i32
  }
  func.func @transform_1(%arg0: i32, %arg1: i32, %arg2: i32) -> (i32, i32) {
    %c0_i32 = arith.constant 0 : i32
    return %arg2, %arg1 : i32, i32
  }
  func.func @transform_2(%arg0: i32, %arg1: i32, %arg2: i32) -> (i32, i32) {
    %c0_i32 = arith.constant 0 : i32
    %c0_i32_0 = arith.constant 0 : i32
    return %c0_i32, %arg2 : i32, i32
  }
  func.func @transform_3(%arg0: i32, %arg1: i32, %arg2: i32) -> (i32, i32) {
    %c0_i32 = arith.constant 0 : i32
    %c0_i32_0 = arith.constant 0 : i32
    return %c0_i32, %arg2 : i32, i32
  }
  func.func @transform_4(%arg0: i32, %arg1: i32, %arg2: i32) -> (i32, i32) {
    %c0_i32 = arith.constant 0 : i32
    %c0_i32_0 = arith.constant 0 : i32
    return %c0_i32, %arg1 : i32, i32
  }
  func.func @transform_5(%arg0: i32, %arg1: i32, %arg2: i32) -> (i32, i32) {
    %c0_i32 = arith.constant 0 : i32
    %c0_i32_0 = arith.constant 0 : i32
    return %c0_i32, %arg1 : i32, i32
  }
  func.func @transform_6(%arg0: i32, %arg1: i32, %arg2: i32) -> (i32, i32) {
    %c0_i32 = arith.constant 0 : i32
    %c0_i32_0 = arith.constant 0 : i32
    return %c0_i32, %arg1 : i32, i32
  }
  func.func @transform_7(%arg0: i32, %arg1: i32, %arg2: i32) -> (i32, i32) {
    %c0_i32 = arith.constant 0 : i32
    return %arg0, %arg1 : i32, i32
  }
}

module attributes {stable_mosaic.version = 11 : i64} {
  func.func @_fused_matmul_kernel(%arg0: i32, %arg1: i32, %arg2: i32, %arg3: memref<16x128xbf16, #tpu.memory_space<vmem>>, %arg4: memref<128x128xbf16, #tpu.memory_space<vmem>>, %arg5: memref<1x128xbf16, #tpu.memory_space<vmem>>, %arg6: memref<1x128xbf16, #tpu.memory_space<vmem>>, %arg7: memref<16x128xbf16, #tpu.memory_space<vmem>>, %arg8: memref<16x128xf32, #tpu.memory_space<vmem>>, %arg9: memref<16x128xbf16, #tpu.memory_space<vmem>>) attributes {dimension_semantics = [#tpu.dimension_semantics<parallel>, #tpu.dimension_semantics<arbitrary>, #tpu.dimension_semantics<arbitrary>], iteration_bounds = array<i64: 1, 3, 1>, scalar_prefetch = 0 : i64, scratch_operands = 2 : i64, tpu.core_type = #tpu.core_type<tc>, window_params = [{transform_indices = @transform_0, window_bounds = array<i64: 16, 128>}, {transform_indices = @transform_1, window_bounds = array<i64: 128, 128>}, {transform_indices = @transform_2, window_bounds = array<i64: 1, 128>}, {transform_indices = @transform_3, window_bounds = array<i64: 1, 128>}, {transform_indices = @transform_4, window_bounds = array<i64: 16, 128>}]} {
    %c0_i32 = arith.constant 0 : i32
    %0 = arith.cmpi eq, %arg2, %c0_i32 : i32
    %1 = arith.extui %0 : i1 to i32
    %c0_i32_0 = arith.constant 0 : i32
    %2 = arith.cmpi ne, %1, %c0_i32_0 : i32
    scf.if %2 {
      %cst_12 = arith.constant 0.000000e+00 : f32
      %15 = vector.broadcast %cst_12 : f32 to vector<16x128xf32>
      %c0_13 = arith.constant 0 : index
      %c0_14 = arith.constant 0 : index
      %16 = vector.load %arg8[%c0_13, %c0_14] : memref<16x128xf32, #tpu.memory_space<vmem>>, vector<16x128xf32>
      tpu.vector_store %arg8[%c0_13, %c0_14], %15 {strides = array<i32>} : memref<16x128xf32, #tpu.memory_space<vmem>>, vector<16x128xf32>,
    } else {
    }
    %c0_i32_1 = arith.constant 0 : i32
    %3 = arith.cmpi eq, %arg1, %c0_i32_1 : i32
    %4 = arith.extui %3 : i1 to i32
    %c0_i32_2 = arith.constant 0 : i32
    %5 = arith.cmpi ne, %4, %c0_i32_2 : i32
    scf.if %5 {
      %c0_12 = arith.constant 0 : index
      %c0_13 = arith.constant 0 : index
      %15 = vector.load %arg3[%c0_12, %c0_13] : memref<16x128xbf16, #tpu.memory_space<vmem>>, vector<16x128xbf16>
      %16 = arith.extf %15 : vector<16x128xbf16> to vector<16x128xf32>
      %cst_14 = arith.constant dense<0.000000e+00> : vector<16xf32>
      %17 = vector.multi_reduction <add>, %16, %cst_14 [1] : vector<16x128xf32> to vector<16xf32>
      %18 = vector.shape_cast %17 : vector<16xf32> to vector<16x1xf32>
      %cst_15 = arith.constant 1.280000e+02 : f32
      %19 = vector.broadcast %cst_15 : f32 to vector<16x1xf32>
      %20 = arith.divf %18, %19 : vector<16x1xf32>
      %21 = vector.broadcast %20 : vector<16x1xf32> to vector<16x128xf32>
      %22 = arith.subf %16, %21 : vector<16x128xf32>
      %23 = arith.mulf %22, %22 : vector<16x128xf32>
      %cst_16 = arith.constant dense<0.000000e+00> : vector<16xf32>
      %24 = vector.multi_reduction <add>, %23, %cst_16 [1] : vector<16x128xf32> to vector<16xf32>
      %25 = vector.shape_cast %24 : vector<16xf32> to vector<16x1xf32>
      %cst_17 = arith.constant 1.280000e+02 : f32
      %26 = vector.broadcast %cst_17 : f32 to vector<16x1xf32>
      %27 = arith.divf %25, %26 : vector<16x1xf32>
      %28 = vector.broadcast %20 : vector<16x1xf32> to vector<16x128xf32>
      %29 = arith.subf %16, %28 : vector<16x128xf32>
      %cst_18 = arith.constant 9.99999974E-6 : f32
      %30 = vector.broadcast %cst_18 : f32 to vector<16x1xf32>
      %31 = arith.addf %27, %30 : vector<16x1xf32>
      %32 = math.rsqrt %31 : vector<16x1xf32>
      %33 = vector.broadcast %32 : vector<16x1xf32> to vector<16x128xf32>
      %34 = arith.mulf %29, %33 : vector<16x128xf32>
      %c0_19 = arith.constant 0 : index
      %c0_20 = arith.constant 0 : index
      %35 = vector.load %arg5[%c0_19, %c0_20] : memref<1x128xbf16, #tpu.memory_space<vmem>>, vector<1x128xbf16>
      %36 = arith.extf %35 : vector<1x128xbf16> to vector<1x128xf32>
      %37 = vector.broadcast %36 : vector<1x128xf32> to vector<16x128xf32>
      %38 = arith.mulf %34, %37 : vector<16x128xf32>
      %c0_21 = arith.constant 0 : index
      %c0_22 = arith.constant 0 : index
      %39 = vector.load %arg6[%c0_21, %c0_22] : memref<1x128xbf16, #tpu.memory_space<vmem>>, vector<1x128xbf16>
      %40 = arith.extf %39 : vector<1x128xbf16> to vector<1x128xf32>
      %41 = vector.broadcast %40 : vector<1x128xf32> to vector<16x128xf32>
      %42 = arith.addf %38, %41 : vector<16x128xf32>
      %43 = arith.truncf %42 : vector<16x128xf32> to vector<16x128xbf16>
      %c0_23 = arith.constant 0 : index
      %c0_24 = arith.constant 0 : index
      %44 = vector.load %arg9[%c0_23, %c0_24] : memref<16x128xbf16, #tpu.memory_space<vmem>>, vector<16x128xbf16>
      tpu.vector_store %arg9[%c0_23, %c0_24], %43 {strides = array<i32>} : memref<16x128xbf16, #tpu.memory_space<vmem>>, vector<16x128xbf16>,
    } else {
    }
    %c0 = arith.constant 0 : index
    %c0_3 = arith.constant 0 : index
    %6 = vector.load %arg9[%c0, %c0_3] : memref<16x128xbf16, #tpu.memory_space<vmem>>, vector<16x128xbf16>
    %c0_4 = arith.constant 0 : index
    %c0_5 = arith.constant 0 : index
    %7 = vector.load %arg8[%c0_4, %c0_5] : memref<16x128xf32, #tpu.memory_space<vmem>>, vector<16x128xf32>
    %c0_6 = arith.constant 0 : index
    %c0_7 = arith.constant 0 : index
    %8 = vector.load %arg4[%c0_6, %c0_7] : memref<128x128xbf16, #tpu.memory_space<vmem>>, vector<128x128xbf16>
    %cst = arith.constant dense<0.000000e+00> : vector<16x128xf32>
    %9 = tpu.matmul %6, %8, %cst {dimension_numbers = #tpu.dot_dimension_numbers<[1], [0], [0], [1], [0, 0, 1, 1], [], []>} : vector<16x128xbf16>, vector<128x128xbf16>, vector<16x128xf32> -> vector<16x128xf32>
    %10 = arith.addf %7, %9 : vector<16x128xf32>
    %c0_8 = arith.constant 0 : index
    %c0_9 = arith.constant 0 : index
    %11 = vector.load %arg8[%c0_8, %c0_9] : memref<16x128xf32, #tpu.memory_space<vmem>>, vector<16x128xf32>
    tpu.vector_store %arg8[%c0_8, %c0_9], %10 {strides = array<i32>} : memref<16x128xf32, #tpu.memory_space<vmem>>, vector<16x128xf32>,
    %c0_i32_10 = arith.constant 0 : i32
    %12 = arith.cmpi eq, %arg2, %c0_i32_10 : i32
    %13 = arith.extui %12 : i1 to i32
    %c0_i32_11 = arith.constant 0 : i32
    %14 = arith.cmpi ne, %13, %c0_i32_11 : i32
    scf.if %14 {
      %c0_12 = arith.constant 0 : index
      %c0_13 = arith.constant 0 : index
      %15 = vector.load %arg8[%c0_12, %c0_13] : memref<16x128xf32, #tpu.memory_space<vmem>>, vector<16x128xf32>
      %16 = arith.truncf %15 : vector<16x128xf32> to vector<16x128xbf16>
      %c0_14 = arith.constant 0 : index
      %c0_15 = arith.constant 0 : index
      %17 = vector.load %arg7[%c0_14, %c0_15] : memref<16x128xbf16, #tpu.memory_space<vmem>>, vector<16x128xbf16>
      tpu.vector_store %arg7[%c0_14, %c0_15], %16 {strides = array<i32>} : memref<16x128xbf16, #tpu.memory_space<vmem>>, vector<16x128xbf16>,
    } else {
    }
    return
  }
  func.func @transform_0(%arg0: i32, %arg1: i32, %arg2: i32) -> (i32, i32) {
    %c0_i32 = arith.constant 0 : i32
    return %arg0, %arg2 : i32, i32
  }
  func.func @transform_1(%arg0: i32, %arg1: i32, %arg2: i32) -> (i32, i32) {
    %c0_i32 = arith.constant 0 : i32
    return %arg2, %arg1 : i32, i32
  }
  func.func @transform_2(%arg0: i32, %arg1: i32, %arg2: i32) -> (i32, i32) {
    %c0_i32 = arith.constant 0 : i32
    %c0_i32_0 = arith.constant 0 : i32
    return %c0_i32, %arg2 : i32, i32
  }
  func.func @transform_3(%arg0: i32, %arg1: i32, %arg2: i32) -> (i32, i32) {
    %c0_i32 = arith.constant 0 : i32
    %c0_i32_0 = arith.constant 0 : i32
    return %c0_i32, %arg2 : i32, i32
  }
  func.func @transform_4(%arg0: i32, %arg1: i32, %arg2: i32) -> (i32, i32) {
    %c0_i32 = arith.constant 0 : i32
    return %arg0, %arg1 : i32, i32
  }
}

module attributes {stable_mosaic.version = 11 : i64} {
  func.func @_attention_kernel(%arg0: i32, %arg1: i32, %arg2: memref<1x5x128xbf16, #tpu.memory_space<vmem>>, %arg3: memref<1x5x128xbf16, #tpu.memory_space<vmem>>, %arg4: memref<1x5x128xbf16, #tpu.memory_space<vmem>>, %arg5: memref<1x5x128xbf16, #tpu.memory_space<vmem>>) attributes {dimension_semantics = [#tpu.dimension_semantics<parallel>, #tpu.dimension_semantics<parallel>], iteration_bounds = array<i64: 2, 1>, scalar_prefetch = 0 : i64, scratch_operands = 0 : i64, tpu.core_type = #tpu.core_type<tc>, window_params = [{transform_indices = @transform_0, window_bounds = array<i64: 1, 5, 128>}, {transform_indices = @transform_1, window_bounds = array<i64: 1, 5, 128>}, {transform_indices = @transform_2, window_bounds = array<i64: 1, 5, 128>}, {transform_indices = @transform_3, window_bounds = array<i64: 1, 5, 128>}]} {
    %c0 = arith.constant 0 : index
    %c0_0 = arith.constant 0 : index
    %c0_1 = arith.constant 0 : index
    %0 = vector.load %arg2[%c0, %c0_0, %c0_1] : memref<1x5x128xbf16, #tpu.memory_space<vmem>>, vector<1x5x128xbf16>
    %1 = vector.shape_cast %0 : vector<1x5x128xbf16> to vector<5x128xbf16>
    %cst = arith.constant 1.767580e-01 : bf16
    %2 = vector.broadcast %cst : bf16 to vector<5x128xbf16>
    %3 = arith.mulf %1, %2 : vector<5x128xbf16>
    %c0_2 = arith.constant 0 : index
    %c0_3 = arith.constant 0 : index
    %c0_4 = arith.constant 0 : index
    %4 = vector.load %arg3[%c0_2, %c0_3, %c0_4] : memref<1x5x128xbf16, #tpu.memory_space<vmem>>, vector<1x5x128xbf16>
    %5 = vector.shape_cast %4 : vector<1x5x128xbf16> to vector<5x128xbf16>
    %c0_5 = arith.constant 0 : index
    %c0_6 = arith.constant 0 : index
    %c0_7 = arith.constant 0 : index
    %6 = vector.load %arg4[%c0_5, %c0_6, %c0_7] : memref<1x5x128xbf16, #tpu.memory_space<vmem>>, vector<1x5x128xbf16>
    %7 = vector.shape_cast %6 : vector<1x5x128xbf16> to vector<5x128xbf16>
    %8 = vector.extract_strided_slice %3 {offsets = [0, 0], sizes = [5, 32], strides = [1, 1]} : vector<5x128xbf16> to vector<5x32xbf16>
    %9 = vector.extract_strided_slice %5 {offsets = [0, 0], sizes = [5, 32], strides = [1, 1]} : vector<5x128xbf16> to vector<5x32xbf16>
    %10 = vector.extract_strided_slice %7 {offsets = [0, 0], sizes = [5, 32], strides = [1, 1]} : vector<5x128xbf16> to vector<5x32xbf16>
    %cst_8 = arith.constant dense<0.000000e+00> : vector<5x5xf32>
    %11 = tpu.matmul %8, %9, %cst_8 {dimension_numbers = #tpu.dot_dimension_numbers<[1], [1], [0], [0], [0, 0, 1, 0], [], []>} : vector<5x32xbf16>, vector<5x32xbf16>, vector<5x5xf32> -> vector<5x5xf32>
    %cst_9 = arith.constant dense<0xFF800000> : vector<5xf32>
    %12 = vector.multi_reduction <maximumf>, %11, %cst_9 [1] : vector<5x5xf32> to vector<5xf32>
    %13 = vector.shape_cast %12 : vector<5xf32> to vector<5x1xf32>
    %14 = vector.broadcast %13 : vector<5x1xf32> to vector<5x5xf32>
    %15 = arith.subf %11, %14 : vector<5x5xf32>
    %16 = math.exp %15 : vector<5x5xf32>
    %cst_10 = arith.constant dense<0.000000e+00> : vector<5xf32>
    %17 = vector.multi_reduction <add>, %16, %cst_10 [1] : vector<5x5xf32> to vector<5xf32>
    %18 = vector.shape_cast %17 : vector<5xf32> to vector<5x1xf32>
    %19 = tpu.reciprocal %18 {approx = true} : vector<5x1xf32> -> vector<5x1xf32>
    %20 = vector.broadcast %19 : vector<5x1xf32> to vector<5x5xf32>
    %21 = arith.mulf %16, %20 : vector<5x5xf32>
    %22 = arith.truncf %21 : vector<5x5xf32> to vector<5x5xbf16>
    %cst_11 = arith.constant dense<0.000000e+00> : vector<5x32xf32>
    %23 = tpu.matmul %22, %10, %cst_11 {dimension_numbers = #tpu.dot_dimension_numbers<[1], [0], [0], [1], [0, 0, 1, 1], [], []>} : vector<5x5xbf16>, vector<5x32xbf16>, vector<5x32xf32> -> vector<5x32xf32>
    %24 = arith.truncf %23 : vector<5x32xf32> to vector<5x32xbf16>
    %25 = vector.extract_strided_slice %3 {offsets = [0, 32], sizes = [5, 32], strides = [1, 1]} : vector<5x128xbf16> to vector<5x32xbf16>
    %26 = vector.extract_strided_slice %5 {offsets = [0, 32], sizes = [5, 32], strides = [1, 1]} : vector<5x128xbf16> to vector<5x32xbf16>
    %27 = vector.extract_strided_slice %7 {offsets = [0, 32], sizes = [5, 32], strides = [1, 1]} : vector<5x128xbf16> to vector<5x32xbf16>
    %cst_12 = arith.constant dense<0.000000e+00> : vector<5x5xf32>
    %28 = tpu.matmul %25, %26, %cst_12 {dimension_numbers = #tpu.dot_dimension_numbers<[1], [1], [0], [0], [0, 0, 1, 0], [], []>} : vector<5x32xbf16>, vector<5x32xbf16>, vector<5x5xf32> -> vector<5x5xf32>
    %cst_13 = arith.constant dense<0xFF800000> : vector<5xf32>
    %29 = vector.multi_reduction <maximumf>, %28, %cst_13 [1] : vector<5x5xf32> to vector<5xf32>
    %30 = vector.shape_cast %29 : vector<5xf32> to vector<5x1xf32>
    %31 = vector.broadcast %30 : vector<5x1xf32> to vector<5x5xf32>
    %32 = arith.subf %28, %31 : vector<5x5xf32>
    %33 = math.exp %32 : vector<5x5xf32>
    %cst_14 = arith.constant dense<0.000000e+00> : vector<5xf32>
    %34 = vector.multi_reduction <add>, %33, %cst_14 [1] : vector<5x5xf32> to vector<5xf32>
    %35 = vector.shape_cast %34 : vector<5xf32> to vector<5x1xf32>
    %36 = tpu.reciprocal %35 {approx = true} : vector<5x1xf32> -> vector<5x1xf32>
    %37 = vector.broadcast %36 : vector<5x1xf32> to vector<5x5xf32>
    %38 = arith.mulf %33, %37 : vector<5x5xf32>
    %39 = arith.truncf %38 : vector<5x5xf32> to vector<5x5xbf16>
    %cst_15 = arith.constant dense<0.000000e+00> : vector<5x32xf32>
    %40 = tpu.matmul %39, %27, %cst_15 {dimension_numbers = #tpu.dot_dimension_numbers<[1], [0], [0], [1], [0, 0, 1, 1], [], []>} : vector<5x5xbf16>, vector<5x32xbf16>, vector<5x32xf32> -> vector<5x32xf32>
    %41 = arith.truncf %40 : vector<5x32xf32> to vector<5x32xbf16>
    %42 = vector.extract_strided_slice %3 {offsets = [0, 64], sizes = [5, 32], strides = [1, 1]} : vector<5x128xbf16> to vector<5x32xbf16>
    %43 = vector.extract_strided_slice %5 {offsets = [0, 64], sizes = [5, 32], strides = [1, 1]} : vector<5x128xbf16> to vector<5x32xbf16>
    %44 = vector.extract_strided_slice %7 {offsets = [0, 64], sizes = [5, 32], strides = [1, 1]} : vector<5x128xbf16> to vector<5x32xbf16>
    %cst_16 = arith.constant dense<0.000000e+00> : vector<5x5xf32>
    %45 = tpu.matmul %42, %43, %cst_16 {dimension_numbers = #tpu.dot_dimension_numbers<[1], [1], [0], [0], [0, 0, 1, 0], [], []>} : vector<5x32xbf16>, vector<5x32xbf16>, vector<5x5xf32> -> vector<5x5xf32>
    %cst_17 = arith.constant dense<0xFF800000> : vector<5xf32>
    %46 = vector.multi_reduction <maximumf>, %45, %cst_17 [1] : vector<5x5xf32> to vector<5xf32>
    %47 = vector.shape_cast %46 : vector<5xf32> to vector<5x1xf32>
    %48 = vector.broadcast %47 : vector<5x1xf32> to vector<5x5xf32>
    %49 = arith.subf %45, %48 : vector<5x5xf32>
    %50 = math.exp %49 : vector<5x5xf32>
    %cst_18 = arith.constant dense<0.000000e+00> : vector<5xf32>
    %51 = vector.multi_reduction <add>, %50, %cst_18 [1] : vector<5x5xf32> to vector<5xf32>
    %52 = vector.shape_cast %51 : vector<5xf32> to vector<5x1xf32>
    %53 = tpu.reciprocal %52 {approx = true} : vector<5x1xf32> -> vector<5x1xf32>
    %54 = vector.broadcast %53 : vector<5x1xf32> to vector<5x5xf32>
    %55 = arith.mulf %50, %54 : vector<5x5xf32>
    %56 = arith.truncf %55 : vector<5x5xf32> to vector<5x5xbf16>
    %cst_19 = arith.constant dense<0.000000e+00> : vector<5x32xf32>
    %57 = tpu.matmul %56, %44, %cst_19 {dimension_numbers = #tpu.dot_dimension_numbers<[1], [0], [0], [1], [0, 0, 1, 1], [], []>} : vector<5x5xbf16>, vector<5x32xbf16>, vector<5x32xf32> -> vector<5x32xf32>
    %58 = arith.truncf %57 : vector<5x32xf32> to vector<5x32xbf16>
    %59 = vector.extract_strided_slice %3 {offsets = [0, 96], sizes = [5, 32], strides = [1, 1]} : vector<5x128xbf16> to vector<5x32xbf16>
    %60 = vector.extract_strided_slice %5 {offsets = [0, 96], sizes = [5, 32], strides = [1, 1]} : vector<5x128xbf16> to vector<5x32xbf16>
    %61 = vector.extract_strided_slice %7 {offsets = [0, 96], sizes = [5, 32], strides = [1, 1]} : vector<5x128xbf16> to vector<5x32xbf16>
    %cst_20 = arith.constant dense<0.000000e+00> : vector<5x5xf32>
    %62 = tpu.matmul %59, %60, %cst_20 {dimension_numbers = #tpu.dot_dimension_numbers<[1], [1], [0], [0], [0, 0, 1, 0], [], []>} : vector<5x32xbf16>, vector<5x32xbf16>, vector<5x5xf32> -> vector<5x5xf32>
    %cst_21 = arith.constant dense<0xFF800000> : vector<5xf32>
    %63 = vector.multi_reduction <maximumf>, %62, %cst_21 [1] : vector<5x5xf32> to vector<5xf32>
    %64 = vector.shape_cast %63 : vector<5xf32> to vector<5x1xf32>
    %65 = vector.broadcast %64 : vector<5x1xf32> to vector<5x5xf32>
    %66 = arith.subf %62, %65 : vector<5x5xf32>
    %67 = math.exp %66 : vector<5x5xf32>
    %cst_22 = arith.constant dense<0.000000e+00> : vector<5xf32>
    %68 = vector.multi_reduction <add>, %67, %cst_22 [1] : vector<5x5xf32> to vector<5xf32>
    %69 = vector.shape_cast %68 : vector<5xf32> to vector<5x1xf32>
    %70 = tpu.reciprocal %69 {approx = true} : vector<5x1xf32> -> vector<5x1xf32>
    %71 = vector.broadcast %70 : vector<5x1xf32> to vector<5x5xf32>
    %72 = arith.mulf %67, %71 : vector<5x5xf32>
    %73 = arith.truncf %72 : vector<5x5xf32> to vector<5x5xbf16>
    %cst_23 = arith.constant dense<0.000000e+00> : vector<5x32xf32>
    %74 = tpu.matmul %73, %61, %cst_23 {dimension_numbers = #tpu.dot_dimension_numbers<[1], [0], [0], [1], [0, 0, 1, 1], [], []>} : vector<5x5xbf16>, vector<5x32xbf16>, vector<5x32xf32> -> vector<5x32xf32>
    %75 = arith.truncf %74 : vector<5x32xf32> to vector<5x32xbf16>
    %76 = tpu.concatenate %24, %41, %58, %75 in 1 : vector<5x32xbf16>, vector<5x32xbf16>, vector<5x32xbf16>, vector<5x32xbf16> -> vector<5x128xbf16>
    %c0_24 = arith.constant 0 : index
    %c0_25 = arith.constant 0 : index
    %c0_26 = arith.constant 0 : index
    %77 = vector.load %arg5[%c0_24, %c0_25, %c0_26] : memref<1x5x128xbf16, #tpu.memory_space<vmem>>, vector<1x5x128xbf16>
    %78 = vector.shape_cast %77 : vector<1x5x128xbf16> to vector<5x128xbf16>
    %79 = vector.shape_cast %76 : vector<5x128xbf16> to vector<1x5x128xbf16>
    tpu.vector_store %arg5[%c0_24, %c0_25, %c0_26], %79 {strides = array<i32>} : memref<1x5x128xbf16, #tpu.memory_space<vmem>>, vector<1x5x128xbf16>,
    return
  }
  func.func @transform_0(%arg0: i32, %arg1: i32) -> (i32, i32, i32) {
    %c0_i32 = arith.constant 0 : i32
    %c0_i32_0 = arith.constant 0 : i32
    return %arg0, %c0_i32, %arg1 : i32, i32, i32
  }
  func.func @transform_1(%arg0: i32, %arg1: i32) -> (i32, i32, i32) {
    %c1_i32 = arith.constant 1 : i32
    %0 = arith.addi %c1_i32, %arg1 : i32
    %c0_i32 = arith.constant 0 : i32
    %c0_i32_0 = arith.constant 0 : i32
    return %arg0, %c0_i32, %0 : i32, i32, i32
  }
  func.func @transform_2(%arg0: i32, %arg1: i32) -> (i32, i32, i32) {
    %c2_i32 = arith.constant 2 : i32
    %0 = arith.addi %c2_i32, %arg1 : i32
    %c0_i32 = arith.constant 0 : i32
    %c0_i32_0 = arith.constant 0 : i32
    return %arg0, %c0_i32, %0 : i32, i32, i32
  }
  func.func @transform_3(%arg0: i32, %arg1: i32) -> (i32, i32, i32) {
    %c0_i32 = arith.constant 0 : i32
    %c0_i32_0 = arith.constant 0 : i32
    return %arg0, %c0_i32, %arg1 : i32, i32, i32
  }
}

module attributes {stable_mosaic.version = 11 : i64} {
  func.func @_fused_matmul_kernel(%arg0: i32, %arg1: i32, %arg2: i32, %arg3: memref<16x128xbf16, #tpu.memory_space<vmem>>, %arg4: memref<128x128xbf16, #tpu.memory_space<vmem>>, %arg5: memref<1x128xbf16, #tpu.memory_space<vmem>>, %arg6: memref<16x128xbf16, #tpu.memory_space<vmem>>, %arg7: memref<16x128xbf16, #tpu.memory_space<vmem>>, %arg8: memref<16x128xf32, #tpu.memory_space<vmem>>) attributes {dimension_semantics = [#tpu.dimension_semantics<parallel>, #tpu.dimension_semantics<parallel>, #tpu.dimension_semantics<arbitrary>], iteration_bounds = array<i64: 1, 1, 1>, scalar_prefetch = 0 : i64, scratch_operands = 1 : i64, tpu.core_type = #tpu.core_type<tc>, window_params = [{transform_indices = @transform_0, window_bounds = array<i64: 16, 128>}, {transform_indices = @transform_1, window_bounds = array<i64: 128, 128>}, {transform_indices = @transform_2, window_bounds = array<i64: 1, 128>}, {transform_indices = @transform_3, window_bounds = array<i64: 16, 128>}, {transform_indices = @transform_4, window_bounds = array<i64: 16, 128>}]} {
    %c0_i32 = arith.constant 0 : i32
    %0 = arith.cmpi eq, %arg2, %c0_i32 : i32
    %1 = arith.extui %0 : i1 to i32
    %c0_i32_0 = arith.constant 0 : i32
    %2 = arith.cmpi ne, %1, %c0_i32_0 : i32
    scf.if %2 {
      %cst_10 = arith.constant 0.000000e+00 : f32
      %12 = vector.broadcast %cst_10 : f32 to vector<16x128xf32>
      %c0_11 = arith.constant 0 : index
      %c0_12 = arith.constant 0 : index
      %13 = vector.load %arg8[%c0_11, %c0_12] : memref<16x128xf32, #tpu.memory_space<vmem>>, vector<16x128xf32>
      tpu.vector_store %arg8[%c0_11, %c0_12], %12 {strides = array<i32>} : memref<16x128xf32, #tpu.memory_space<vmem>>, vector<16x128xf32>,
    } else {
    }
    %c0 = arith.constant 0 : index
    %c0_1 = arith.constant 0 : index
    %3 = vector.load %arg3[%c0, %c0_1] : memref<16x128xbf16, #tpu.memory_space<vmem>>, vector<16x128xbf16>
    %c0_2 = arith.constant 0 : index
    %c0_3 = arith.constant 0 : index
    %4 = vector.load %arg8[%c0_2, %c0_3] : memref<16x128xf32, #tpu.memory_space<vmem>>, vector<16x128xf32>
    %c0_4 = arith.constant 0 : index
    %c0_5 = arith.constant 0 : index
    %5 = vector.load %arg4[%c0_4, %c0_5] : memref<128x128xbf16, #tpu.memory_space<vmem>>, vector<128x128xbf16>
    %cst = arith.constant dense<0.000000e+00> : vector<16x128xf32>
    %6 = tpu.matmul %3, %5, %cst {dimension_numbers = #tpu.dot_dimension_numbers<[1], [0], [0], [1], [0, 0, 1, 1], [], []>} : vector<16x128xbf16>, vector<128x128xbf16>, vector<16x128xf32> -> vector<16x128xf32>
    %7 = arith.addf %4, %6 : vector<16x128xf32>
    %c0_6 = arith.constant 0 : index
    %c0_7 = arith.constant 0 : index
    %8 = vector.load %arg8[%c0_6, %c0_7] : memref<16x128xf32, #tpu.memory_space<vmem>>, vector<16x128xf32>
    tpu.vector_store %arg8[%c0_6, %c0_7], %7 {strides = array<i32>} : memref<16x128xf32, #tpu.memory_space<vmem>>, vector<16x128xf32>,
    %c0_i32_8 = arith.constant 0 : i32
    %9 = arith.cmpi eq, %arg2, %c0_i32_8 : i32
    %10 = arith.extui %9 : i1 to i32
    %c0_i32_9 = arith.constant 0 : i32
    %11 = arith.cmpi ne, %10, %c0_i32_9 : i32
    scf.if %11 {
      %c0_10 = arith.constant 0 : index
      %c0_11 = arith.constant 0 : index
      %12 = vector.load %arg8[%c0_10, %c0_11] : memref<16x128xf32, #tpu.memory_space<vmem>>, vector<16x128xf32>
      %c0_12 = arith.constant 0 : index
      %c0_13 = arith.constant 0 : index
      %13 = vector.load %arg5[%c0_12, %c0_13] : memref<1x128xbf16, #tpu.memory_space<vmem>>, vector<1x128xbf16>
      %14 = arith.extf %13 : vector<1x128xbf16> to vector<1x128xf32>
      %15 = vector.broadcast %14 : vector<1x128xf32> to vector<16x128xf32>
      %16 = arith.addf %12, %15 : vector<16x128xf32>
      %c0_14 = arith.constant 0 : index
      %c0_15 = arith.constant 0 : index
      %17 = vector.load %arg6[%c0_14, %c0_15] : memref<16x128xbf16, #tpu.memory_space<vmem>>, vector<16x128xbf16>
      %18 = arith.extf %17 : vector<16x128xbf16> to vector<16x128xf32>
      %19 = arith.addf %16, %18 : vector<16x128xf32>
      %20 = arith.truncf %19 : vector<16x128xf32> to vector<16x128xbf16>
      %c0_16 = arith.constant 0 : index
      %c0_17 = arith.constant 0 : index
      %21 = vector.load %arg7[%c0_16, %c0_17] : memref<16x128xbf16, #tpu.memory_space<vmem>>, vector<16x128xbf16>
      tpu.vector_store %arg7[%c0_16, %c0_17], %20 {strides = array<i32>} : memref<16x128xbf16, #tpu.memory_space<vmem>>, vector<16x128xbf16>,
    } else {
    }
    return
  }
  func.func @transform_0(%arg0: i32, %arg1: i32, %arg2: i32) -> (i32, i32) {
    %c0_i32 = arith.constant 0 : i32
    return %arg0, %arg2 : i32, i32
  }
  func.func @transform_1(%arg0: i32, %arg1: i32, %arg2: i32) -> (i32, i32) {
    %c0_i32 = arith.constant 0 : i32
    return %arg2, %arg1 : i32, i32
  }
  func.func @transform_2(%arg0: i32, %arg1: i32, %arg2: i32) -> (i32, i32) {
    %c0_i32 = arith.constant 0 : i32
    %c0_i32_0 = arith.constant 0 : i32
    return %c0_i32, %arg1 : i32, i32
  }
  func.func @transform_3(%arg0: i32, %arg1: i32, %arg2: i32) -> (i32, i32) {
    %c0_i32 = arith.constant 0 : i32
    return %arg0, %arg1 : i32, i32
  }
  func.func @transform_4(%arg0: i32, %arg1: i32, %arg2: i32) -> (i32, i32) {
    %c0_i32 = arith.constant 0 : i32
    return %arg0, %arg1 : i32, i32
  }
}

module attributes {stable_mosaic.version = 11 : i64} {
  func.func @_fused_matmul_kernel(%arg0: i32, %arg1: i32, %arg2: i32, %arg3: memref<16x256xbf16, #tpu.memory_space<vmem>>, %arg4: memref<256x128xbf16, #tpu.memory_space<vmem>>, %arg5: memref<1x128xbf16, #tpu.memory_space<vmem>>, %arg6: memref<16x128xbf16, #tpu.memory_space<vmem>>, %arg7: memref<16x128xbf16, #tpu.memory_space<vmem>>, %arg8: memref<16x128xf32, #tpu.memory_space<vmem>>) attributes {dimension_semantics = [#tpu.dimension_semantics<parallel>, #tpu.dimension_semantics<parallel>, #tpu.dimension_semantics<arbitrary>], iteration_bounds = array<i64: 1, 1, 1>, scalar_prefetch = 0 : i64, scratch_operands = 1 : i64, tpu.core_type = #tpu.core_type<tc>, window_params = [{transform_indices = @transform_0, window_bounds = array<i64: 16, 256>}, {transform_indices = @transform_1, window_bounds = array<i64: 256, 128>}, {transform_indices = @transform_2, window_bounds = array<i64: 1, 128>}, {transform_indices = @transform_3, window_bounds = array<i64: 16, 128>}, {transform_indices = @transform_4, window_bounds = array<i64: 16, 128>}]} {
    %c0_i32 = arith.constant 0 : i32
    %0 = arith.cmpi eq, %arg2, %c0_i32 : i32
    %1 = arith.extui %0 : i1 to i32
    %c0_i32_0 = arith.constant 0 : i32
    %2 = arith.cmpi ne, %1, %c0_i32_0 : i32
    scf.if %2 {
      %cst_10 = arith.constant 0.000000e+00 : f32
      %12 = vector.broadcast %cst_10 : f32 to vector<16x128xf32>
      %c0_11 = arith.constant 0 : index
      %c0_12 = arith.constant 0 : index
      %13 = vector.load %arg8[%c0_11, %c0_12] : memref<16x128xf32, #tpu.memory_space<vmem>>, vector<16x128xf32>
      tpu.vector_store %arg8[%c0_11, %c0_12], %12 {strides = array<i32>} : memref<16x128xf32, #tpu.memory_space<vmem>>, vector<16x128xf32>,
    } else {
    }
    %c0 = arith.constant 0 : index
    %c0_1 = arith.constant 0 : index
    %3 = vector.load %arg3[%c0, %c0_1] : memref<16x256xbf16, #tpu.memory_space<vmem>>, vector<16x256xbf16>
    %c0_2 = arith.constant 0 : index
    %c0_3 = arith.constant 0 : index
    %4 = vector.load %arg8[%c0_2, %c0_3] : memref<16x128xf32, #tpu.memory_space<vmem>>, vector<16x128xf32>
    %c0_4 = arith.constant 0 : index
    %c0_5 = arith.constant 0 : index
    %5 = vector.load %arg4[%c0_4, %c0_5] : memref<256x128xbf16, #tpu.memory_space<vmem>>, vector<256x128xbf16>
    %cst = arith.constant dense<0.000000e+00> : vector<16x128xf32>
    %6 = tpu.matmul %3, %5, %cst {dimension_numbers = #tpu.dot_dimension_numbers<[1], [0], [0], [1], [0, 0, 1, 1], [], []>} : vector<16x256xbf16>, vector<256x128xbf16>, vector<16x128xf32> -> vector<16x128xf32>
    %7 = arith.addf %4, %6 : vector<16x128xf32>
    %c0_6 = arith.constant 0 : index
    %c0_7 = arith.constant 0 : index
    %8 = vector.load %arg8[%c0_6, %c0_7] : memref<16x128xf32, #tpu.memory_space<vmem>>, vector<16x128xf32>
    tpu.vector_store %arg8[%c0_6, %c0_7], %7 {strides = array<i32>} : memref<16x128xf32, #tpu.memory_space<vmem>>, vector<16x128xf32>,
    %c0_i32_8 = arith.constant 0 : i32
    %9 = arith.cmpi eq, %arg2, %c0_i32_8 : i32
    %10 = arith.extui %9 : i1 to i32
    %c0_i32_9 = arith.constant 0 : i32
    %11 = arith.cmpi ne, %10, %c0_i32_9 : i32
    scf.if %11 {
      %c0_10 = arith.constant 0 : index
      %c0_11 = arith.constant 0 : index
      %12 = vector.load %arg8[%c0_10, %c0_11] : memref<16x128xf32, #tpu.memory_space<vmem>>, vector<16x128xf32>
      %c0_12 = arith.constant 0 : index
      %c0_13 = arith.constant 0 : index
      %13 = vector.load %arg5[%c0_12, %c0_13] : memref<1x128xbf16, #tpu.memory_space<vmem>>, vector<1x128xbf16>
      %14 = arith.extf %13 : vector<1x128xbf16> to vector<1x128xf32>
      %15 = vector.broadcast %14 : vector<1x128xf32> to vector<16x128xf32>
      %16 = arith.addf %12, %15 : vector<16x128xf32>
      %c0_14 = arith.constant 0 : index
      %c0_15 = arith.constant 0 : index
      %17 = vector.load %arg6[%c0_14, %c0_15] : memref<16x128xbf16, #tpu.memory_space<vmem>>, vector<16x128xbf16>
      %18 = arith.extf %17 : vector<16x128xbf16> to vector<16x128xf32>
      %19 = arith.addf %16, %18 : vector<16x128xf32>
      %20 = arith.truncf %19 : vector<16x128xf32> to vector<16x128xbf16>
      %c0_16 = arith.constant 0 : index
      %c0_17 = arith.constant 0 : index
      %21 = vector.load %arg7[%c0_16, %c0_17] : memref<16x128xbf16, #tpu.memory_space<vmem>>, vector<16x128xbf16>
      tpu.vector_store %arg7[%c0_16, %c0_17], %20 {strides = array<i32>} : memref<16x128xbf16, #tpu.memory_space<vmem>>, vector<16x128xbf16>,
    } else {
    }
    return
  }
  func.func @transform_0(%arg0: i32, %arg1: i32, %arg2: i32) -> (i32, i32) {
    %c0_i32 = arith.constant 0 : i32
    return %arg0, %arg2 : i32, i32
  }
  func.func @transform_1(%arg0: i32, %arg1: i32, %arg2: i32) -> (i32, i32) {
    %c0_i32 = arith.constant 0 : i32
    return %arg2, %arg1 : i32, i32
  }
  func.func @transform_2(%arg0: i32, %arg1: i32, %arg2: i32) -> (i32, i32) {
    %c0_i32 = arith.constant 0 : i32
    %c0_i32_0 = arith.constant 0 : i32
    return %c0_i32, %arg1 : i32, i32
  }
  func.func @transform_3(%arg0: i32, %arg1: i32, %arg2: i32) -> (i32, i32) {
    %c0_i32 = arith.constant 0 : i32
    return %arg0, %arg1 : i32, i32
  }
  func.func @transform_4(%arg0: i32, %arg1: i32, %arg2: i32) -> (i32, i32) {
    %c0_i32 = arith.constant 0 : i32
    return %arg0, %arg1 : i32, i32
  }
}

module attributes {stable_mosaic.version = 11 : i64} {
  func.func @_fused_matmul_kernel(%arg0: i32, %arg1: i32, %arg2: i32, %arg3: memref<16x128xbf16, #tpu.memory_space<vmem>>, %arg4: memref<128x256xbf16, #tpu.memory_space<vmem>>, %arg5: memref<1x128xbf16, #tpu.memory_space<vmem>>, %arg6: memref<1x128xbf16, #tpu.memory_space<vmem>>, %arg7: memref<1x256xbf16, #tpu.memory_space<vmem>>, %arg8: memref<16x256xbf16, #tpu.memory_space<vmem>>, %arg9: memref<16x256xf32, #tpu.memory_space<vmem>>, %arg10: memref<16x128xbf16, #tpu.memory_space<vmem>>) attributes {dimension_semantics = [#tpu.dimension_semantics<parallel>, #tpu.dimension_semantics<arbitrary>, #tpu.dimension_semantics<arbitrary>], iteration_bounds = array<i64: 1, 1, 1>, scalar_prefetch = 0 : i64, scratch_operands = 2 : i64, tpu.core_type = #tpu.core_type<tc>, window_params = [{transform_indices = @transform_0, window_bounds = array<i64: 16, 128>}, {transform_indices = @transform_1, window_bounds = array<i64: 128, 256>}, {transform_indices = @transform_2, window_bounds = array<i64: 1, 128>}, {transform_indices = @transform_3, window_bounds = array<i64: 1, 128>}, {transform_indices = @transform_4, window_bounds = array<i64: 1, 256>}, {transform_indices = @transform_5, window_bounds = array<i64: 16, 256>}]} {
    %c0_i32 = arith.constant 0 : i32
    %0 = arith.cmpi eq, %arg2, %c0_i32 : i32
    %1 = arith.extui %0 : i1 to i32
    %c0_i32_0 = arith.constant 0 : i32
    %2 = arith.cmpi ne, %1, %c0_i32_0 : i32
    scf.if %2 {
      %cst_12 = arith.constant 0.000000e+00 : f32
      %15 = vector.broadcast %cst_12 : f32 to vector<16x256xf32>
      %c0_13 = arith.constant 0 : index
      %c0_14 = arith.constant 0 : index
      %16 = vector.load %arg9[%c0_13, %c0_14] : memref<16x256xf32, #tpu.memory_space<vmem>>, vector<16x256xf32>
      tpu.vector_store %arg9[%c0_13, %c0_14], %15 {strides = array<i32>} : memref<16x256xf32, #tpu.memory_space<vmem>>, vector<16x256xf32>,
    } else {
    }
    %c0_i32_1 = arith.constant 0 : i32
    %3 = arith.cmpi eq, %arg1, %c0_i32_1 : i32
    %4 = arith.extui %3 : i1 to i32
    %c0_i32_2 = arith.constant 0 : i32
    %5 = arith.cmpi ne, %4, %c0_i32_2 : i32
    scf.if %5 {
      %c0_12 = arith.constant 0 : index
      %c0_13 = arith.constant 0 : index
      %15 = vector.load %arg3[%c0_12, %c0_13] : memref<16x128xbf16, #tpu.memory_space<vmem>>, vector<16x128xbf16>
      %16 = arith.extf %15 : vector<16x128xbf16> to vector<16x128xf32>
      %cst_14 = arith.constant dense<0.000000e+00> : vector<16xf32>
      %17 = vector.multi_reduction <add>, %16, %cst_14 [1] : vector<16x128xf32> to vector<16xf32>
      %18 = vector.shape_cast %17 : vector<16xf32> to vector<16x1xf32>
      %cst_15 = arith.constant 1.280000e+02 : f32
      %19 = vector.broadcast %cst_15 : f32 to vector<16x1xf32>
      %20 = arith.divf %18, %19 : vector<16x1xf32>
      %21 = vector.broadcast %20 : vector<16x1xf32> to vector<16x128xf32>
      %22 = arith.subf %16, %21 : vector<16x128xf32>
      %23 = arith.mulf %22, %22 : vector<16x128xf32>
      %cst_16 = arith.constant dense<0.000000e+00> : vector<16xf32>
      %24 = vector.multi_reduction <add>, %23, %cst_16 [1] : vector<16x128xf32> to vector<16xf32>
      %25 = vector.shape_cast %24 : vector<16xf32> to vector<16x1xf32>
      %cst_17 = arith.constant 1.280000e+02 : f32
      %26 = vector.broadcast %cst_17 : f32 to vector<16x1xf32>
      %27 = arith.divf %25, %26 : vector<16x1xf32>
      %28 = vector.broadcast %20 : vector<16x1xf32> to vector<16x128xf32>
      %29 = arith.subf %16, %28 : vector<16x128xf32>
      %cst_18 = arith.constant 9.99999974E-6 : f32
      %30 = vector.broadcast %cst_18 : f32 to vector<16x1xf32>
      %31 = arith.addf %27, %30 : vector<16x1xf32>
      %32 = math.rsqrt %31 : vector<16x1xf32>
      %33 = vector.broadcast %32 : vector<16x1xf32> to vector<16x128xf32>
      %34 = arith.mulf %29, %33 : vector<16x128xf32>
      %c0_19 = arith.constant 0 : index
      %c0_20 = arith.constant 0 : index
      %35 = vector.load %arg5[%c0_19, %c0_20] : memref<1x128xbf16, #tpu.memory_space<vmem>>, vector<1x128xbf16>
      %36 = arith.extf %35 : vector<1x128xbf16> to vector<1x128xf32>
      %37 = vector.broadcast %36 : vector<1x128xf32> to vector<16x128xf32>
      %38 = arith.mulf %34, %37 : vector<16x128xf32>
      %c0_21 = arith.constant 0 : index
      %c0_22 = arith.constant 0 : index
      %39 = vector.load %arg6[%c0_21, %c0_22] : memref<1x128xbf16, #tpu.memory_space<vmem>>, vector<1x128xbf16>
      %40 = arith.extf %39 : vector<1x128xbf16> to vector<1x128xf32>
      %41 = vector.broadcast %40 : vector<1x128xf32> to vector<16x128xf32>
      %42 = arith.addf %38, %41 : vector<16x128xf32>
      %43 = arith.truncf %42 : vector<16x128xf32> to vector<16x128xbf16>
      %c0_23 = arith.constant 0 : index
      %c0_24 = arith.constant 0 : index
      %44 = vector.load %arg10[%c0_23, %c0_24] : memref<16x128xbf16, #tpu.memory_space<vmem>>, vector<16x128xbf16>
      tpu.vector_store %arg10[%c0_23, %c0_24], %43 {strides = array<i32>} : memref<16x128xbf16, #tpu.memory_space<vmem>>, vector<16x128xbf16>,
    } else {
    }
    %c0 = arith.constant 0 : index
    %c0_3 = arith.constant 0 : index
    %6 = vector.load %arg10[%c0, %c0_3] : memref<16x128xbf16, #tpu.memory_space<vmem>>, vector<16x128xbf16>
    %c0_4 = arith.constant 0 : index
    %c0_5 = arith.constant 0 : index
    %7 = vector.load %arg9[%c0_4, %c0_5] : memref<16x256xf32, #tpu.memory_space<vmem>>, vector<16x256xf32>
    %c0_6 = arith.constant 0 : index
    %c0_7 = arith.constant 0 : index
    %8 = vector.load %arg4[%c0_6, %c0_7] : memref<128x256xbf16, #tpu.memory_space<vmem>>, vector<128x256xbf16>
    %cst = arith.constant dense<0.000000e+00> : vector<16x256xf32>
    %9 = tpu.matmul %6, %8, %cst {dimension_numbers = #tpu.dot_dimension_numbers<[1], [0], [0], [1], [0, 0, 1, 1], [], []>} : vector<16x128xbf16>, vector<128x256xbf16>, vector<16x256xf32> -> vector<16x256xf32>
    %10 = arith.addf %7, %9 : vector<16x256xf32>
    %c0_8 = arith.constant 0 : index
    %c0_9 = arith.constant 0 : index
    %11 = vector.load %arg9[%c0_8, %c0_9] : memref<16x256xf32, #tpu.memory_space<vmem>>, vector<16x256xf32>
    tpu.vector_store %arg9[%c0_8, %c0_9], %10 {strides = array<i32>} : memref<16x256xf32, #tpu.memory_space<vmem>>, vector<16x256xf32>,
    %c0_i32_10 = arith.constant 0 : i32
    %12 = arith.cmpi eq, %arg2, %c0_i32_10 : i32
    %13 = arith.extui %12 : i1 to i32
    %c0_i32_11 = arith.constant 0 : i32
    %14 = arith.cmpi ne, %13, %c0_i32_11 : i32
    scf.if %14 {
      %c0_12 = arith.constant 0 : index
      %c0_13 = arith.constant 0 : index
      %15 = vector.load %arg9[%c0_12, %c0_13] : memref<16x256xf32, #tpu.memory_space<vmem>>, vector<16x256xf32>
      %c0_14 = arith.constant 0 : index
      %c0_15 = arith.constant 0 : index
      %16 = vector.load %arg7[%c0_14, %c0_15] : memref<1x256xbf16, #tpu.memory_space<vmem>>, vector<1x256xbf16>
      %17 = arith.extf %16 : vector<1x256xbf16> to vector<1x256xf32>
      %18 = vector.broadcast %17 : vector<1x256xf32> to vector<16x256xf32>
      %19 = arith.addf %15, %18 : vector<16x256xf32>
      %cst_16 = arith.constant 5.000000e-01 : f32
      %20 = vector.broadcast %cst_16 : f32 to vector<16x256xf32>
      %21 = arith.mulf %20, %19 : vector<16x256xf32>
      %cst_17 = arith.constant 0.707106769 : f32
      %22 = vector.broadcast %cst_17 : f32 to vector<16x256xf32>
      %23 = arith.mulf %19, %22 : vector<16x256xf32>
      %24 = math.erf %23 : vector<16x256xf32>
      %cst_18 = arith.constant 1.000000e+00 : f32
      %25 = vector.broadcast %cst_18 : f32 to vector<16x256xf32>
      %26 = arith.addf %25, %24 : vector<16x256xf32>
      %27 = arith.mulf %21, %26 : vector<16x256xf32>
      %28 = arith.truncf %27 : vector<16x256xf32> to vector<16x256xbf16>
      %c0_19 = arith.constant 0 : index
      %c0_20 = arith.constant 0 : index
      %29 = vector.load %arg8[%c0_19, %c0_20] : memref<16x256xbf16, #tpu.memory_space<vmem>>, vector<16x256xbf16>
      tpu.vector_store %arg8[%c0_19, %c0_20], %28 {strides = array<i32>} : memref<16x256xbf16, #tpu.memory_space<vmem>>, vector<16x256xbf16>,
    } else {
    }
    return
  }
  func.func @transform_0(%arg0: i32, %arg1: i32, %arg2: i32) -> (i32, i32) {
    %c0_i32 = arith.constant 0 : i32
    return %arg0, %arg2 : i32, i32
  }
  func.func @transform_1(%arg0: i32, %arg1: i32, %arg2: i32) -> (i32, i32) {
    %c0_i32 = arith.constant 0 : i32
    return %arg2, %arg1 : i32, i32
  }
  func.func @transform_2(%arg0: i32, %arg1: i32, %arg2: i32) -> (i32, i32) {
    %c0_i32 = arith.constant 0 : i32
    %c0_i32_0 = arith.constant 0 : i32
    return %c0_i32, %arg2 : i32, i32
  }
  func.func @transform_3(%arg0: i32, %arg1: i32, %arg2: i32) -> (i32, i32) {
    %c0_i32 = arith.constant 0 : i32
    %c0_i32_0 = arith.constant 0 : i32
    return %c0_i32, %arg2 : i32, i32
  }
  func.func @transform_4(%arg0: i32, %arg1: i32, %arg2: i32) -> (i32, i32) {
    %c0_i32 = arith.constant 0 : i32
    %c0_i32_0 = arith.constant 0 : i32
    return %c0_i32, %arg1 : i32, i32
  }
  func.func @transform_5(%arg0: i32, %arg1: i32, %arg2: i32) -> (i32, i32) {
    %c0_i32 = arith.constant 0 : i32
    return %arg0, %arg1 : i32, i32
  }
}

module attributes {stable_mosaic.version = 11 : i64} {
  func.func @_fused_matmul_kernel(%arg0: i32, %arg1: i32, %arg2: i32, %arg3: memref<8x128xbf16, #tpu.memory_space<vmem>>, %arg4: memref<128x64xbf16, #tpu.memory_space<vmem>>, %arg5: memref<1x128xbf16, #tpu.memory_space<vmem>>, %arg6: memref<1x128xbf16, #tpu.memory_space<vmem>>, %arg7: memref<1x64xbf16, #tpu.memory_space<vmem>>, %arg8: memref<8x64xf32, #tpu.memory_space<vmem>>, %arg9: memref<8x64xf32, #tpu.memory_space<vmem>>, %arg10: memref<8x128xbf16, #tpu.memory_space<vmem>>) attributes {dimension_semantics = [#tpu.dimension_semantics<parallel>, #tpu.dimension_semantics<arbitrary>, #tpu.dimension_semantics<arbitrary>], iteration_bounds = array<i64: 1, 1, 1>, scalar_prefetch = 0 : i64, scratch_operands = 2 : i64, tpu.core_type = #tpu.core_type<tc>, window_params = [{transform_indices = @transform_0, window_bounds = array<i64: 8, 128>}, {transform_indices = @transform_1, window_bounds = array<i64: 128, 64>}, {transform_indices = @transform_2, window_bounds = array<i64: 1, 128>}, {transform_indices = @transform_3, window_bounds = array<i64: 1, 128>}, {transform_indices = @transform_4, window_bounds = array<i64: 1, 64>}, {transform_indices = @transform_5, window_bounds = array<i64: 8, 64>}]} {
    %c0_i32 = arith.constant 0 : i32
    %0 = arith.cmpi eq, %arg2, %c0_i32 : i32
    %1 = arith.extui %0 : i1 to i32
    %c0_i32_0 = arith.constant 0 : i32
    %2 = arith.cmpi ne, %1, %c0_i32_0 : i32
    scf.if %2 {
      %cst_12 = arith.constant 0.000000e+00 : f32
      %15 = vector.broadcast %cst_12 : f32 to vector<8x64xf32>
      %c0_13 = arith.constant 0 : index
      %c0_14 = arith.constant 0 : index
      %16 = vector.load %arg9[%c0_13, %c0_14] : memref<8x64xf32, #tpu.memory_space<vmem>>, vector<8x64xf32>
      tpu.vector_store %arg9[%c0_13, %c0_14], %15 {strides = array<i32>} : memref<8x64xf32, #tpu.memory_space<vmem>>, vector<8x64xf32>,
    } else {
    }
    %c0_i32_1 = arith.constant 0 : i32
    %3 = arith.cmpi eq, %arg1, %c0_i32_1 : i32
    %4 = arith.extui %3 : i1 to i32
    %c0_i32_2 = arith.constant 0 : i32
    %5 = arith.cmpi ne, %4, %c0_i32_2 : i32
    scf.if %5 {
      %c0_12 = arith.constant 0 : index
      %c0_13 = arith.constant 0 : index
      %15 = vector.load %arg3[%c0_12, %c0_13] : memref<8x128xbf16, #tpu.memory_space<vmem>>, vector<8x128xbf16>
      %16 = arith.extf %15 : vector<8x128xbf16> to vector<8x128xf32>
      %cst_14 = arith.constant dense<0.000000e+00> : vector<8xf32>
      %17 = vector.multi_reduction <add>, %16, %cst_14 [1] : vector<8x128xf32> to vector<8xf32>
      %18 = vector.shape_cast %17 : vector<8xf32> to vector<8x1xf32>
      %cst_15 = arith.constant 1.280000e+02 : f32
      %19 = vector.broadcast %cst_15 : f32 to vector<8x1xf32>
      %20 = arith.divf %18, %19 : vector<8x1xf32>
      %21 = vector.broadcast %20 : vector<8x1xf32> to vector<8x128xf32>
      %22 = arith.subf %16, %21 : vector<8x128xf32>
      %23 = arith.mulf %22, %22 : vector<8x128xf32>
      %cst_16 = arith.constant dense<0.000000e+00> : vector<8xf32>
      %24 = vector.multi_reduction <add>, %23, %cst_16 [1] : vector<8x128xf32> to vector<8xf32>
      %25 = vector.shape_cast %24 : vector<8xf32> to vector<8x1xf32>
      %cst_17 = arith.constant 1.280000e+02 : f32
      %26 = vector.broadcast %cst_17 : f32 to vector<8x1xf32>
      %27 = arith.divf %25, %26 : vector<8x1xf32>
      %28 = vector.broadcast %20 : vector<8x1xf32> to vector<8x128xf32>
      %29 = arith.subf %16, %28 : vector<8x128xf32>
      %cst_18 = arith.constant 9.99999974E-6 : f32
      %30 = vector.broadcast %cst_18 : f32 to vector<8x1xf32>
      %31 = arith.addf %27, %30 : vector<8x1xf32>
      %32 = math.rsqrt %31 : vector<8x1xf32>
      %33 = vector.broadcast %32 : vector<8x1xf32> to vector<8x128xf32>
      %34 = arith.mulf %29, %33 : vector<8x128xf32>
      %c0_19 = arith.constant 0 : index
      %c0_20 = arith.constant 0 : index
      %35 = vector.load %arg5[%c0_19, %c0_20] : memref<1x128xbf16, #tpu.memory_space<vmem>>, vector<1x128xbf16>
      %36 = arith.extf %35 : vector<1x128xbf16> to vector<1x128xf32>
      %37 = vector.broadcast %36 : vector<1x128xf32> to vector<8x128xf32>
      %38 = arith.mulf %34, %37 : vector<8x128xf32>
      %c0_21 = arith.constant 0 : index
      %c0_22 = arith.constant 0 : index
      %39 = vector.load %arg6[%c0_21, %c0_22] : memref<1x128xbf16, #tpu.memory_space<vmem>>, vector<1x128xbf16>
      %40 = arith.extf %39 : vector<1x128xbf16> to vector<1x128xf32>
      %41 = vector.broadcast %40 : vector<1x128xf32> to vector<8x128xf32>
      %42 = arith.addf %38, %41 : vector<8x128xf32>
      %43 = arith.truncf %42 : vector<8x128xf32> to vector<8x128xbf16>
      %c0_23 = arith.constant 0 : index
      %c0_24 = arith.constant 0 : index
      %44 = vector.load %arg10[%c0_23, %c0_24] : memref<8x128xbf16, #tpu.memory_space<vmem>>, vector<8x128xbf16>
      tpu.vector_store %arg10[%c0_23, %c0_24], %43 {strides = array<i32>} : memref<8x128xbf16, #tpu.memory_space<vmem>>, vector<8x128xbf16>,
    } else {
    }
    %c0 = arith.constant 0 : index
    %c0_3 = arith.constant 0 : index
    %6 = vector.load %arg10[%c0, %c0_3] : memref<8x128xbf16, #tpu.memory_space<vmem>>, vector<8x128xbf16>
    %c0_4 = arith.constant 0 : index
    %c0_5 = arith.constant 0 : index
    %7 = vector.load %arg9[%c0_4, %c0_5] : memref<8x64xf32, #tpu.memory_space<vmem>>, vector<8x64xf32>
    %c0_6 = arith.constant 0 : index
    %c0_7 = arith.constant 0 : index
    %8 = vector.load %arg4[%c0_6, %c0_7] : memref<128x64xbf16, #tpu.memory_space<vmem>>, vector<128x64xbf16>
    %cst = arith.constant dense<0.000000e+00> : vector<8x64xf32>
    %9 = tpu.matmul %6, %8, %cst {dimension_numbers = #tpu.dot_dimension_numbers<[1], [0], [0], [1], [0, 0, 1, 1], [], []>} : vector<8x128xbf16>, vector<128x64xbf16>, vector<8x64xf32> -> vector<8x64xf32>
    %10 = arith.addf %7, %9 : vector<8x64xf32>
    %c0_8 = arith.constant 0 : index
    %c0_9 = arith.constant 0 : index
    %11 = vector.load %arg9[%c0_8, %c0_9] : memref<8x64xf32, #tpu.memory_space<vmem>>, vector<8x64xf32>
    tpu.vector_store %arg9[%c0_8, %c0_9], %10 {strides = array<i32>} : memref<8x64xf32, #tpu.memory_space<vmem>>, vector<8x64xf32>,
    %c0_i32_10 = arith.constant 0 : i32
    %12 = arith.cmpi eq, %arg2, %c0_i32_10 : i32
    %13 = arith.extui %12 : i1 to i32
    %c0_i32_11 = arith.constant 0 : i32
    %14 = arith.cmpi ne, %13, %c0_i32_11 : i32
    scf.if %14 {
      %c0_12 = arith.constant 0 : index
      %c0_13 = arith.constant 0 : index
      %15 = vector.load %arg9[%c0_12, %c0_13] : memref<8x64xf32, #tpu.memory_space<vmem>>, vector<8x64xf32>
      %c0_14 = arith.constant 0 : index
      %c0_15 = arith.constant 0 : index
      %16 = vector.load %arg7[%c0_14, %c0_15] : memref<1x64xbf16, #tpu.memory_space<vmem>>, vector<1x64xbf16>
      %17 = arith.extf %16 : vector<1x64xbf16> to vector<1x64xf32>
      %18 = vector.broadcast %17 : vector<1x64xf32> to vector<8x64xf32>
      %19 = arith.addf %15, %18 : vector<8x64xf32>
      %c0_16 = arith.constant 0 : index
      %c0_17 = arith.constant 0 : index
      %20 = vector.load %arg8[%c0_16, %c0_17] : memref<8x64xf32, #tpu.memory_space<vmem>>, vector<8x64xf32>
      tpu.vector_store %arg8[%c0_16, %c0_17], %19 {strides = array<i32>} : memref<8x64xf32, #tpu.memory_space<vmem>>, vector<8x64xf32>,
    } else {
    }
    return
  }
  func.func @transform_0(%arg0: i32, %arg1: i32, %arg2: i32) -> (i32, i32) {
    %c0_i32 = arith.constant 0 : i32
    return %arg0, %arg2 : i32, i32
  }
  func.func @transform_1(%arg0: i32, %arg1: i32, %arg2: i32) -> (i32, i32) {
    %c0_i32 = arith.constant 0 : i32
    return %arg2, %arg1 : i32, i32
  }
  func.func @transform_2(%arg0: i32, %arg1: i32, %arg2: i32) -> (i32, i32) {
    %c0_i32 = arith.constant 0 : i32
    %c0_i32_0 = arith.constant 0 : i32
    return %c0_i32, %arg2 : i32, i32
  }
  func.func @transform_3(%arg0: i32, %arg1: i32, %arg2: i32) -> (i32, i32) {
    %c0_i32 = arith.constant 0 : i32
    %c0_i32_0 = arith.constant 0 : i32
    return %c0_i32, %arg2 : i32, i32
  }
  func.func @transform_4(%arg0: i32, %arg1: i32, %arg2: i32) -> (i32, i32) {
    %c0_i32 = arith.constant 0 : i32
    %c0_i32_0 = arith.constant 0 : i32
    return %c0_i32, %arg1 : i32, i32
  }
  func.func @transform_5(%arg0: i32, %arg1: i32, %arg2: i32) -> (i32, i32) {
    %c0_i32 = arith.constant 0 : i32
    return %arg0, %arg1 : i32, i32
  }
}

</mosaic_0001>

<llo_original>
// kernel: vit_feature_extractor.13
$region0: #{vit_feature_extractor.13}
  #allocation0 [shape = 'u32[]', space=smem, size = 0x4, offset = 0x4, fixed_abs, tag = 'smem constant byte address 0x4 - core index']
  #allocation1 [shape = 'u32[144,128]{1,0:T(1,128)}', space=vmem, size = 0x12000, scoped, tag = 'internal scratch']
  #allocation2 [shape = 'f32[16,128]{1,0:T(8,128)}', space=vmem, size = 0x2000, scoped, tag = 'scratch operand']
  #allocation3 [shape = 'bf16[16,128]{1,0:T(16,128)(2,1)}', space=vmem, size = 0x1000, scoped, tag = 'scratch operand']
  %s0 = inlined_call_operand.vmem [shape: bf16[16,128], index: 0, kind: input, shape index: {}]
  %s1 = inlined_call_operand.vmem [shape: bf16[128,384], index: 1, kind: input, shape index: {}]
  %s2 = inlined_call_operand.vmem [shape: bf16[1,128], index: 2, kind: input, shape index: {}]
  %s3 = inlined_call_operand.vmem [shape: bf16[1,128], index: 3, kind: input, shape index: {}]
  %s4 = inlined_call_operand.vmem [shape: bf16[16,384], index: 4, kind: output, shape index: {}]
  %s5 = sld [smem:[#allocation0]]
  $region139: #{vit_feature_extractor.13} parent=0
    _
  %s7 = ssub.s32 1, %s5
  %s8 = scalar_select 0, %s7, %s5
  $region1: #{vit_feature_extractor.13} parent=0
    #allocation4 [shape = 'u8[65536]{0}', space=vmem, size = 0x10000, scoped, tag = 'input window, operand 1']
    #allocation5 [shape = 'u8[8192]{0}', space=vmem, size = 0x2000, scoped, tag = 'output window, operand 0']
    loop: start=0, step=1, limit=5
    $region2: #{vit_feature_extractor.13} parent=1 // loop_pre_header
      _
    $region3: #{vit_feature_extractor.13} parent=1 // loop_header
      %s10 = sphi 0, %s14
      %p11 = scmp.ge.s32.totalorder %s10, 5
      %s17 = sphi 0, %s36
      %s18 = sphi 0, %s32
      %s19 = sphi 0, %s28
      %s20 = sphi 0, %s17
      %s21 = sphi 0, %s18
      %s22 = sphi 0, %s19
      %s23 = sphi 0, %s20
      %s24 = sphi 0, %s21
      %s25 = sphi 0, %s22
      %s41 = sphi 0, %s43
      %s44 = sphi 0, %s41
      %s45 = sphi 0, %s44
      %s61 = sphi 0, %s45
      %s69 = sphi 0, %s71
      %s72 = sphi 0, %s69
      %s73 = sphi 0, %s72
      %s89 = sphi 0, %s73
      %s95 = sphi 0, %s97
      %s98 = sphi 0, %s95
      %s99 = sphi 0, %s98
      %s115 = sphi 0, %s99
      %s121 = sphi 0, %s123
      %s124 = sphi 0, %s121
      %s125 = sphi 0, %s124
      %s141 = sphi 0, %s125
      %s149 = sphi 0, %s151
      %s152 = sphi 0, %s149
      %s153 = sphi 0, %s152
      %s169 = sphi 0, %s153
    $region4: #{vit_feature_extractor.13} parent=1 // loop_header_branch
      %13 = sbr.rel (%p11) target = $region8
    $region5: #{vit_feature_extractor.13} parent=1 // loop_body
      %s15 = ssub.s32 %s10, 1
      %s16 = ssub.s32 %s10, 2
      %s26 = sadd.s32 1, %s19
      %p27 = scmp.ge.s32.totalorder %s26, 1
      %s28 = scalar_select %p27, 0, %s26
      %s29 = sadd.s32 1, %s18
      %s30 = scalar_select %p27, %s29, %s18
      %p31 = scmp.ge.s32.totalorder %s30, 3
      %s32 = scalar_select %p31, 0, %s30
      %s33 = sadd.s32 1, %s17
      %s34 = scalar_select %p31, %s33, %s17
      %p35 = scmp.ge.s32.totalorder %s34, 1
      %s36 = scalar_select %p35, 0, %s34
      %s37 = ssub.s32 %s17, %s36
      %s38 = ssub.s32 %s19, %s28
      %s39 = sor.u32 %s37, %s38
      %p40 = scmp.eq.s32.totalorder %s39, 0
      %s42 = sadd.s32 %s41, 1
      %s43 = scalar_select %p40, %s41, %s42
      %p46 = pneg %p40
      %p47 = scmp.eq.s32.totalorder %s10, 2
      %p48 = por %p46, %p47
      %p49 = scmp.ne.s32.totalorder %s41, %s44
      %p50 = scmp.eq.s32.totalorder %s10, 0
      %p51 = por %p49, %p50
      %p52 = scmp.ne.s32.totalorder %s41, %s44
      %p53 = scmp.eq.s32.totalorder %s15, 2
      %p54 = por %p52, %p53
      %p55 = scmp.ne.s32.totalorder %s44, %s45
      %p56 = scmp.eq.s32.totalorder %s15, 0
      %p57 = por %p55, %p56
      %p58 = scmp.ne.s32.totalorder %s44, %s45
      %p59 = scmp.eq.s32.totalorder %s16, 2
      %p60 = por %p58, %p59
      %p62 = scmp.ne.s32.totalorder %s45, %s61
      %p63 = scmp.eq.s32.totalorder %s16, 0
      %p64 = por %p62, %p63
      %s65 = ssub.s32 %s19, %s28
      %s66 = ssub.s32 %s18, %s32
      %s67 = sor.u32 %s65, %s66
      %p68 = scmp.eq.s32.totalorder %s67, 0
      %s70 = sadd.s32 %s69, 1
      %s71 = scalar_select %p68, %s69, %s70
      %p74 = pneg %p68
      %p75 = scmp.eq.s32.totalorder %s10, 2
      %p76 = por %p74, %p75
      %p77 = scmp.ne.s32.totalorder %s69, %s72
      %p78 = scmp.eq.s32.totalorder %s10, 0
      %p79 = por %p77, %p78
      %p80 = scmp.ne.s32.totalorder %s69, %s72
      %p81 = scmp.eq.s32.totalorder %s15, 2
      %p82 = por %p80, %p81
      %p83 = scmp.ne.s32.totalorder %s72, %s73
      %p84 = scmp.eq.s32.totalorder %s15, 0
      %p85 = por %p83, %p84
      %p86 = scmp.ne.s32.totalorder %s72, %s73
      %p87 = scmp.eq.s32.totalorder %s16, 2
      %p88 = por %p86, %p87
      %p90 = scmp.ne.s32.totalorder %s73, %s89
      %p91 = scmp.eq.s32.totalorder %s16, 0
      %p92 = por %p90, %p91
      %s93 = ssub.s32 %s19, %s28
      %p94 = scmp.eq.s32.totalorder %s93, 0
      %s96 = sadd.s32 %s95, 1
      %s97 = scalar_select %p94, %s95, %s96
      %p100 = pneg %p94
      %p101 = scmp.eq.s32.totalorder %s10, 2
      %p102 = por %p100, %p101
      %p103 = scmp.ne.s32.totalorder %s95, %s98
      %p104 = scmp.eq.s32.totalorder %s10, 0
      %p105 = por %p103, %p104
      %p106 = scmp.ne.s32.totalorder %s95, %s98
      %p107 = scmp.eq.s32.totalorder %s15, 2
      %p108 = por %p106, %p107
      %p109 = scmp.ne.s32.totalorder %s98, %s99
      %p110 = scmp.eq.s32.totalorder %s15, 0
      %p111 = por %p109, %p110
      %p112 = scmp.ne.s32.totalorder %s98, %s99
      %p113 = scmp.eq.s32.totalorder %s16, 2
      %p114 = por %p112, %p113
      %p116 = scmp.ne.s32.totalorder %s99, %s115
      %p117 = scmp.eq.s32.totalorder %s16, 0
      %p118 = por %p116, %p117
      %s119 = ssub.s32 %s19, %s28
      %p120 = scmp.eq.s32.totalorder %s119, 0
      %s122 = sadd.s32 %s121, 1
      %s123 = scalar_select %p120, %s121, %s122
      %p126 = pneg %p120
      %p127 = scmp.eq.s32.totalorder %s10, 2
      %p128 = por %p126, %p127
      %p129 = scmp.ne.s32.totalorder %s121, %s124
      %p130 = scmp.eq.s32.totalorder %s10, 0
      %p131 = por %p129, %p130
      %p132 = scmp.ne.s32.totalorder %s121, %s124
      %p133 = scmp.eq.s32.totalorder %s15, 2
      %p134 = por %p132, %p133
      %p135 = scmp.ne.s32.totalorder %s124, %s125
      %p136 = scmp.eq.s32.totalorder %s15, 0
      %p137 = por %p135, %p136
      %p138 = scmp.ne.s32.totalorder %s124, %s125
      %p139 = scmp.eq.s32.totalorder %s16, 2
      %p140 = por %p138, %p139
      %p142 = scmp.ne.s32.totalorder %s125, %s141
      %p143 = scmp.eq.s32.totalorder %s16, 0
      %p144 = por %p142, %p143
      %s145 = ssub.s32 %s17, %s36
      %s146 = ssub.s32 %s18, %s32
      %s147 = sor.u32 %s145, %s146
      %p148 = scmp.eq.s32.totalorder %s147, 0
      %s150 = sadd.s32 %s149, 1
      %s151 = scalar_select %p148, %s149, %s150
      %p154 = pneg %p148
      %p155 = scmp.eq.s32.totalorder %s10, 2
      %p156 = por %p154, %p155
      %p157 = scmp.ne.s32.totalorder %s149, %s152
      %p158 = scmp.eq.s32.totalorder %s10, 0
      %p159 = por %p157, %p158
      %p160 = scmp.ne.s32.totalorder %s149, %s152
      %p161 = scmp.eq.s32.totalorder %s15, 2
      %p162 = por %p160, %p161
      %p163 = scmp.ne.s32.totalorder %s152, %s153
      %p164 = scmp.eq.s32.totalorder %s15, 0
      %p165 = por %p163, %p164
      %p166 = scmp.ne.s32.totalorder %s152, %s153
      %p167 = scmp.eq.s32.totalorder %s16, 2
      %p168 = por %p166, %p167
      %p170 = scmp.ne.s32.totalorder %s153, %s169
      %p171 = scmp.eq.s32.totalorder %s16, 0
      %p172 = por %p170, %p171
      %p173 = scmp.le.s32.totalorder 1, %s10
      %p174 = scmp.lt.s32.totalorder %s10, 4
      %p175 = pnand %p173, %p174
      %p176 = pneg %p175
      // Predicated region
      $region9: #{vit_feature_extractor.13} parent=5 // pred_check
        _
      $region10: #{vit_feature_extractor.13} parent=5 // pred_check_branch
        %178 = sbr.rel (%p175) target = $region12
      $region11: #{vit_feature_extractor.13} parent=5 // pred_region
        %s179 = ssub.s32 %s10, 1
        // Predicated region
        $region13: #{vit_feature_extractor.13} parent=11 // pred_check
          %p180 = pneg %p57
        $region14: #{vit_feature_extractor.13} parent=11 // pred_check_branch
          %182 = sbr.rel (%p180) target = $region16
        $region15: #{vit_feature_extractor.13} parent=11 // pred_region
          %s183 = smul.u32 2, %s20
          %p184 = scmp.lt.s32.totalorder %s183, 1
          %s185 = scalar_select %p184, %s183, 1
          %p186 = scmp.lt.s32.totalorder %s22, 0
          %s187 = scalar_select %p186, %s22, 0
          %s188 = sadd.s32 %s187, %s185
          %s189 = smul.addr %s188, 4
          %s190 = scalar_lea.vmem %s0, %s189
          %s191 = smul.u32 2, %s20
        $region16: #{vit_feature_extractor.13} parent=11 // pred_fallthru
          _
        // Predicated region
        $region17: #{vit_feature_extractor.13} parent=11 // pred_check
          %p192 = pneg %p111
        $region18: #{vit_feature_extractor.13} parent=11 // pred_check_branch
          %194 = sbr.rel (%p192) target = $region20
        $region19: #{vit_feature_extractor.13} parent=11 // pred_region
          %p195 = scmp.lt.s32.totalorder %s22, 0
          %s196 = scalar_select %p195, %s22, 0
          %s197 = scalar_lea.vmem %s2, %s196
        $region20: #{vit_feature_extractor.13} parent=11 // pred_fallthru
          _
        // Predicated region
        $region21: #{vit_feature_extractor.13} parent=11 // pred_check
          %p198 = pneg %p137
        $region22: #{vit_feature_extractor.13} parent=11 // pred_check_branch
          %200 = sbr.rel (%p198) target = $region24
        $region23: #{vit_feature_extractor.13} parent=11 // pred_region
          %p201 = scmp.lt.s32.totalorder %s22, 0
          %s202 = scalar_select %p201, %s22, 0
          %s203 = scalar_lea.vmem %s3, %s202
        $region24: #{vit_feature_extractor.13} parent=11 // pred_fallthru
          _
      $region12: #{vit_feature_extractor.13} parent=5 // pred_fallthru
        _
      %p204 = scmp.lt.s32.totalorder %s10, 3
      // Predicated region
      $region25: #{vit_feature_extractor.13} parent=5 // pred_check
        %p205 = pneg %p204
      $region26: #{vit_feature_extractor.13} parent=5 // pred_check_branch
        %207 = sbr.rel (%p205) target = $region28
      $region27: #{vit_feature_extractor.13} parent=5 // pred_region
        // Predicated region
        $region29: #{vit_feature_extractor.13} parent=27 // pred_check
          %p208 = pneg %p79
        $region30: #{vit_feature_extractor.13} parent=27 // pred_check_branch
          %210 = sbr.rel (%p208) target = $region32
        $region31: #{vit_feature_extractor.13} parent=27 // pred_region
          %s211 = sand.u32 %s69, 1
          %s212 = sand.u32 %s69, 1
          %s213 = smul.addr %s212, 64
          %s214 = scalar_lea.vmem [#allocation4], %s213
          %s215 = smul.u32 16, %s19
          %s216 = smul.addr %s215, 3
          %s217 = sadd.s32 %s18, %s216
          %s218 = smul.addr %s217, 4
          %s219 = scalar_lea.vmem %s1, %s218
          // Predicated region
          $region33: #{vit_feature_extractor.13} parent=31 // pred_check
            _
          $region34: #{vit_feature_extractor.13} parent=31 // pred_check_branch
            %221 = sbr.rel (0) target = $region36
          $region35: #{vit_feature_extractor.13} parent=31 // pred_region
            // Predicated region
            $region37: #{vit_feature_extractor.13} parent=35 // pred_check
              _
            $region38: #{vit_feature_extractor.13} parent=35 // pred_check_branch
              %223 = sbr.rel target = $region40
            $region39: #{vit_feature_extractor.13} parent=35 // pred_region
              // Predicated region
              $region52: #{vit_feature_extractor.13} parent=39 // pred_check
                _
              $region53: #{vit_feature_extractor.13} parent=39 // pred_check_branch
                %268 = sbr.rel (0) target = $region55
              $region54: #{vit_feature_extractor.13} parent=39 // pred_region
                loop: start=0, step=1, limit=1
                $region56: #{vit_feature_extractor.13} parent=54 // loop_pre_header
                  _
                $region57: #{vit_feature_extractor.13} parent=54 // loop_header
                  %s270 = sphi 0, %s274
                  %p271 = scmp.ge.s32.totalorder %s270, 1
                  %s275 = sphi %s219, %s219
                  %s276 = sphi %s214, %s214
                $region58: #{vit_feature_extractor.13} parent=54 // loop_header_branch
                  %273 = sbr.rel (%p271) target = $region62
                $region59: #{vit_feature_extractor.13} parent=54 // loop_body
                  _
                $region60: #{vit_feature_extractor.13} parent=54 // loop_footer
                  %s274 = sadd.s32 1, %s270
                $region61: #{vit_feature_extractor.13} parent=54 // loop_footer_branch
                  %269 = sbr.rel target = $region57
                $region62: #{vit_feature_extractor.13} parent=54 // loop_exit
                  _
                loop: start=0, step=1, limit=1
                $region63: #{vit_feature_extractor.13} parent=54 // loop_pre_header
                  _
                $region64: #{vit_feature_extractor.13} parent=54 // loop_header
                  %s279 = sphi 0, %s283
                  %p280 = scmp.ge.s32.totalorder %s279, 1
                  %s284 = sphi %s219, %s219
                  %s285 = sphi %s214, %s214
                $region65: #{vit_feature_extractor.13} parent=54 // loop_header_branch
                  %282 = sbr.rel (%p280) target = $region69
                $region66: #{vit_feature_extractor.13} parent=54 // loop_body
                  %v286 = vld [vmem:[%s284] sm:$0xf]
                  %287 = vst [vmem:[%s285] sm:$0xf] %v286
                  %v288 = vld [vmem:[%s284 + $0xc] sm:$0xf]
                  %289 = vst [vmem:[%s285 + $0x4] sm:$0xf] %v288
                  %v290 = vld [vmem:[%s284 + $0x18] sm:$0xf]
                  %291 = vst [vmem:[%s285 + $0x8] sm:$0xf] %v290
                  %v292 = vld [vmem:[%s284 + $0x24] sm:$0xf]
                  %293 = vst [vmem:[%s285 + $0xc] sm:$0xf] %v292
                  %v294 = vld [vmem:[%s284 + $0x30] sm:$0xf]
                  %295 = vst [vmem:[%s285 + $0x10] sm:$0xf] %v294
                  %v296 = vld [vmem:[%s284 + $0x3c] sm:$0xf]
                  %297 = vst [vmem:[%s285 + $0x14] sm:$0xf] %v296
                  %v298 = vld [vmem:[%s284 + $0x48] sm:$0xf]
                  %299 = vst [vmem:[%s285 + $0x18] sm:$0xf] %v298
                  %v300 = vld [vmem:[%s284 + $0x54] sm:$0xf]
                  %301 = vst [vmem:[%s285 + $0x1c] sm:$0xf] %v300
                  %v302 = vld [vmem:[%s284 + $0x60] sm:$0xf]
                  %303 = vst [vmem:[%s285 + $0x20] sm:$0xf] %v302
                  %v304 = vld [vmem:[%s284 + $0x6c] sm:$0xf]
                  %305 = vst [vmem:[%s285 + $0x24] sm:$0xf] %v304
                  %v306 = vld [vmem:[%s284 + $0x78] sm:$0xf]
                  %307 = vst [vmem:[%s285 + $0x28] sm:$0xf] %v306
                  %v308 = vld [vmem:[%s284 + $0x84] sm:$0xf]
                  %309 = vst [vmem:[%s285 + $0x2c] sm:$0xf] %v308
                  %v310 = vld [vmem:[%s284 + $0x90] sm:$0xf]
                  %311 = vst [vmem:[%s285 + $0x30] sm:$0xf] %v310
                  %v312 = vld [vmem:[%s284 + $0x9c] sm:$0xf]
                  %313 = vst [vmem:[%s285 + $0x34] sm:$0xf] %v312
                  %v314 = vld [vmem:[%s284 + $0xa8] sm:$0xf]
                  %315 = vst [vmem:[%s285 + $0x38] sm:$0xf] %v314
                  %v316 = vld [vmem:[%s284 + $0xb4] sm:$0xf]
                  %317 = vst [vmem:[%s285 + $0x3c] sm:$0xf] %v316
                $region67: #{vit_feature_extractor.13} parent=54 // loop_footer
                  %s283 = sadd.s32 1, %s279
                $region68: #{vit_feature_extractor.13} parent=54 // loop_footer_branch
                  %278 = sbr.rel target = $region64
                $region69: #{vit_feature_extractor.13} parent=54 // loop_exit
                  _
              $region55: #{vit_feature_extractor.13} parent=39 // pred_fallthru
                _
            $region40: #{vit_feature_extractor.13} parent=35 // pred_fallthru
              _
            // Predicated region
            $region41: #{vit_feature_extractor.13} parent=35 // pred_check
              _
            $region42: #{vit_feature_extractor.13} parent=35 // pred_check_branch
              %225 = sbr.rel (0) target = $region44
            $region43: #{vit_feature_extractor.13} parent=35 // pred_region
              loop: start=0, step=1, limit=1
              $region45: #{vit_feature_extractor.13} parent=43 // loop_pre_header
                _
              $region46: #{vit_feature_extractor.13} parent=43 // loop_header
                %s228 = sphi 0, %s232
                %p229 = scmp.ge.s32.totalorder %s228, 1
                %s233 = sphi %s219, %s219
                %s234 = sphi %s214, %s214
              $region47: #{vit_feature_extractor.13} parent=43 // loop_header_branch
                %231 = sbr.rel (%p229) target = $region51
              $region48: #{vit_feature_extractor.13} parent=43 // loop_body
                %v235 = vld [vmem:[%s233] sm:$0xf]
                %236 = vst [vmem:[%s234] sm:$0xf] %v235
                %v237 = vld [vmem:[%s233 + $0xc] sm:$0xf]
                %238 = vst [vmem:[%s234 + $0x4] sm:$0xf] %v237
                %v239 = vld [vmem:[%s233 + $0x18] sm:$0xf]
                %240 = vst [vmem:[%s234 + $0x8] sm:$0xf] %v239
                %v241 = vld [vmem:[%s233 + $0x24] sm:$0xf]
                %242 = vst [vmem:[%s234 + $0xc] sm:$0xf] %v241
                %v243 = vld [vmem:[%s233 + $0x30] sm:$0xf]
                %244 = vst [vmem:[%s234 + $0x10] sm:$0xf] %v243
                %v245 = vld [vmem:[%s233 + $0x3c] sm:$0xf]
                %246 = vst [vmem:[%s234 + $0x14] sm:$0xf] %v245
                %v247 = vld [vmem:[%s233 + $0x48] sm:$0xf]
                %248 = vst [vmem:[%s234 + $0x18] sm:$0xf] %v247
                %v249 = vld [vmem:[%s233 + $0x54] sm:$0xf]
                %250 = vst [vmem:[%s234 + $0x1c] sm:$0xf] %v249
                %v251 = vld [vmem:[%s233 + $0x60] sm:$0xf]
                %252 = vst [vmem:[%s234 + $0x20] sm:$0xf] %v251
                %v253 = vld [vmem:[%s233 + $0x6c] sm:$0xf]
                %254 = vst [vmem:[%s234 + $0x24] sm:$0xf] %v253
                %v255 = vld [vmem:[%s233 + $0x78] sm:$0xf]
                %256 = vst [vmem:[%s234 + $0x28] sm:$0xf] %v255
                %v257 = vld [vmem:[%s233 + $0x84] sm:$0xf]
                %258 = vst [vmem:[%s234 + $0x2c] sm:$0xf] %v257
                %v259 = vld [vmem:[%s233 + $0x90] sm:$0xf]
                %260 = vst [vmem:[%s234 + $0x30] sm:$0xf] %v259
                %v261 = vld [vmem:[%s233 + $0x9c] sm:$0xf]
                %262 = vst [vmem:[%s234 + $0x34] sm:$0xf] %v261
                %v263 = vld [vmem:[%s233 + $0xa8] sm:$0xf]
                %264 = vst [vmem:[%s234 + $0x38] sm:$0xf] %v263
                %v265 = vld [vmem:[%s233 + $0xb4] sm:$0xf]
                %266 = vst [vmem:[%s234 + $0x3c] sm:$0xf] %v265
              $region49: #{vit_feature_extractor.13} parent=43 // loop_footer
                %s232 = sadd.s32 1, %s228
              $region50: #{vit_feature_extractor.13} parent=43 // loop_footer_branch
                %227 = sbr.rel target = $region46
              $region51: #{vit_feature_extractor.13} parent=43 // loop_exit
                _
            $region44: #{vit_feature_extractor.13} parent=35 // pred_fallthru
              _
          $region36: #{vit_feature_extractor.13} parent=31 // pred_fallthru
            _
          %318 = vnop
        $region32: #{vit_feature_extractor.13} parent=27 // pred_fallthru
          _
      $region28: #{vit_feature_extractor.13} parent=5 // pred_fallthru
        _
      %p319 = scmp.le.s32.totalorder 1, %s10
      %p320 = scmp.lt.s32.totalorder %s10, 4
      %p321 = pnand %p319, %p320
      %p322 = pneg %p321
      // Predicated region
      $region70: #{vit_feature_extractor.13} parent=5 // pred_check
        _
      $region71: #{vit_feature_extractor.13} parent=5 // pred_check_branch
        %324 = sbr.rel (%p321) target = $region73
      $region72: #{vit_feature_extractor.13} parent=5 // pred_region
        %s325 = ssub.s32 %s10, 1
        %s326 = sand.u32 %s72, 1
        %s327 = sand.u32 %s72, 1
        %s328 = smul.addr %s327, 64
        %s329 = scalar_lea.vmem [#allocation4], %s328
        // Predicated region
        $region74: #{vit_feature_extractor.13} parent=72 // pred_check
          %p330 = pneg %p85
        $region75: #{vit_feature_extractor.13} parent=72 // pred_check_branch
          %332 = sbr.rel (%p330) target = $region77
        $region76: #{vit_feature_extractor.13} parent=72 // pred_region
          _
        $region77: #{vit_feature_extractor.13} parent=72 // pred_fallthru
          _
        %s333 = smul.u32 2, %s20
        %p334 = scmp.lt.s32.totalorder %s333, 1
        %s335 = scalar_select %p334, %s333, 1
        %p336 = scmp.lt.s32.totalorder %s22, 0
        %s337 = scalar_select %p336, %s22, 0
        %s338 = sadd.s32 %s337, %s335
        %s339 = smul.addr %s338, 4
        %s340 = scalar_lea.vmem %s0, %s339
        %p341 = pneg %p57
        %p342 = pneg %p54
        %s343 = sand.u32 %s72, 1
        %s344 = sand.u32 %s72, 1
        %s345 = smul.addr %s344, 64
        %s346 = scalar_lea.vmem [#allocation4], %s345
        %p347 = pneg %p85
        %p348 = pneg %p82
        %p349 = scmp.lt.s32.totalorder %s22, 0
        %s350 = scalar_select %p349, %s22, 0
        %s351 = scalar_lea.vmem %s2, %s350
        %p352 = pneg %p111
        %p353 = pneg %p108
        %p354 = scmp.lt.s32.totalorder %s22, 0
        %s355 = scalar_select %p354, %s22, 0
        %s356 = scalar_lea.vmem %s3, %s355
        %p357 = pneg %p137
        %p358 = pneg %p134
        %p359 = pneg %p165
        %p360 = pneg %p162
        %s361 = sand.u32 %s152, 1
        %s362 = sand.u32 %s152, 1
        %s363 = smul.addr %s362, 8
        %s364 = scalar_lea.vmem [#allocation5], %s363
        %s365 = smul.u32 2, %s20
        %p366 = scmp.lt.s32.totalorder %s365, 1
        %s367 = scalar_select %p366, %s365, 1
        %p368 = scmp.lt.s32.totalorder %s22, 0
        %s369 = scalar_select %p368, %s22, 0
        %s370 = sadd.s32 %s369, %s367
        %s371 = smul.addr %s370, 4
        %s372 = scalar_lea.vmem %s0, %s371
        %s373 = smul.u32 2, %s20
        %s374 = smul.u32 16, %s22
        %p375 = scmp.lt.s32.totalorder %s22, 0
        %s376 = scalar_select %p375, %s22, 0
        %s377 = scalar_lea.vmem %s2, %s376
        %p378 = scmp.lt.s32.totalorder %s22, 0
        %s379 = scalar_select %p378, %s22, 0
        %s380 = scalar_lea.vmem %s3, %s379
        %s381 = smul.u32 2, %s20
        %p383 = scmp.eq.s32.totalorder %s22, 0
        // Predicated region
        $region78: #{vit_feature_extractor.13} parent=72 // pred_check
          %p384 = pneg %p383
        $region79: #{vit_feature_extractor.13} parent=72 // pred_check_branch
          %386 = sbr.rel (%p384) target = $region81
        $region80: #{vit_feature_extractor.13} parent=72 // pred_region
          %387 = vst [vmem:[#allocation2] sm:$0xff] 0.0
          %388 = vst [vmem:[#allocation2 + $0x8] sm:$0xff] 0.0
        $region81: #{vit_feature_extractor.13} parent=72 // pred_fallthru
          _
        %p389 = scmp.eq.s32.totalorder %s21, 0
        // Predicated region
        $region82: #{vit_feature_extractor.13} parent=72 // pred_check
          %p390 = pneg %p389
        $region83: #{vit_feature_extractor.13} parent=72 // pred_check_branch
          %392 = sbr.rel (%p390) target = $region85
        $region84: #{vit_feature_extractor.13} parent=72 // pred_region
          %v393 = vld [vmem:[%s372] sm:$0xf]
          %v394 = vld [vmem:[%s372 + $0x4] sm:$0xf]
          %v395 = vunpack.c.l.bf16 %v393
          %v396 = vunpack.c.l.bf16 %v394
          %397 = vadd.xlane.f32.xlu0 %v395
          %v398 = vpop.xlane.xlu0 %397
          %399 = vadd.xlane.f32.xlu0 %v396
          %v400 = vpop.xlane.xlu0 %399
          %v401 = vrcp.pop 128.0
          %v402 = vmul.f32 %v398, %v401
          %v403 = vmul.f32 %v400, %v401
          %v404 = vsub.f32 %v395, %v402
          %v405 = vsub.f32 %v396, %v403
          %v406 = vmul.f32 %v404, %v404
          %v407 = vmul.f32 %v405, %v405
          %408 = vadd.xlane.f32.xlu0 %v406
          %v409 = vpop.xlane.xlu0 %408
          %410 = vadd.xlane.f32.xlu0 %v407
          %v411 = vpop.xlane.xlu0 %410
          %v412 = vmul.f32 %v409, %v401
          %v413 = vmul.f32 %v411, %v401
          %v414 = vadd.f32 %v412, 1e-05
          %v415 = vadd.f32 %v413, 1e-05
          %v416 = vrsqrt.pop %v414
          %v417 = vrsqrt.pop %v415
          %v418 = vmul.f32 %v404, %v416
          %v419 = vmul.f32 %v405, %v417
          %v420 = vld [vmem:[%s377] sm:$0x1]
          %v421 = vunpack.c.l.bf16 %v420
          %v422 = vlaneseq
          %v423 = vshrl.u32 %v422, 7
          %v424 = vsub.s32 0, %v423
          %v425 = vrot.slane %v421, %v424
          %v426 = vmul.f32 %v418, %v425
          %v427 = vmul.f32 %v419, %v425
          %v428 = vld [vmem:[%s380] sm:$0x1]
          %v429 = vunpack.c.l.bf16 %v428
          %v430 = vlaneseq
          %v431 = vshrl.u32 %v430, 7
          %v432 = vsub.s32 0, %v431
          %v433 = vrot.slane %v429, %v432
          %v434 = vadd.f32 %v426, %v433
          %v435 = vadd.f32 %v427, %v433
          %v436 = vpack.c.bf16 %v435, %v434
          %437 = vst [vmem:[#allocation3] sm:$0xff] %v436
        $region85: #{vit_feature_extractor.13} parent=72 // pred_fallthru
          _
        %v438 = vld [vmem:[#allocation3] sm:$0xff]
        %v439 = vld [vmem:[#allocation2] sm:$0xff]
        %v440 = vld [vmem:[#allocation2 + $0x8] sm:$0xff]
        %v441 = vld [vmem:[%s329] sm:$0xf]
        %v442 = vld [vmem:[%s329 + $0x4] sm:$0xf]
        %v443 = vld [vmem:[%s329 + $0x8] sm:$0xf]
        %v444 = vld [vmem:[%s329 + $0xc] sm:$0xf]
        %v445 = vld [vmem:[%s329 + $0x10] sm:$0xf]
        %v446 = vld [vmem:[%s329 + $0x14] sm:$0xf]
        %v447 = vld [vmem:[%s329 + $0x18] sm:$0xf]
        %v448 = vld [vmem:[%s329 + $0x1c] sm:$0xf]
        %v449 = vld [vmem:[%s329 + $0x20] sm:$0xf]
        %v450 = vld [vmem:[%s329 + $0x24] sm:$0xf]
        %v451 = vld [vmem:[%s329 + $0x28] sm:$0xf]
        %v452 = vld [vmem:[%s329 + $0x2c] sm:$0xf]
        %v453 = vld [vmem:[%s329 + $0x30] sm:$0xf]
        %v454 = vld [vmem:[%s329 + $0x34] sm:$0xf]
        %v455 = vld [vmem:[%s329 + $0x38] sm:$0xf]
        %v456 = vld [vmem:[%s329 + $0x3c] sm:$0xf]
        %v473 = vunpack.c.l.b16 %v441
        %v474 = vunpack.c.l.b16 %v442
        %v475 = vunpack.c.l.b16 %v443
        %v476 = vunpack.c.l.b16 %v444
        %v477 = vunpack.c.l.b16 %v445
        %v478 = vunpack.c.l.b16 %v446
        %v479 = vunpack.c.l.b16 %v447
        %v480 = vunpack.c.l.b16 %v448
        %v481 = vunpack.c.l.b16 %v449
        %v482 = vunpack.c.l.b16 %v450
        %v483 = vunpack.c.l.b16 %v451
        %v484 = vunpack.c.l.b16 %v452
        %v485 = vunpack.c.l.b16 %v453
        %v486 = vunpack.c.l.b16 %v454
        %v487 = vunpack.c.l.b16 %v455
        %v488 = vunpack.c.l.b16 %v456
        %v489 = vpack.c.b16 %v474, %v473
        %v490 = vpack.c.b16 %v476, %v475
        %v491 = vpack.c.b16 %v478, %v477
        %v492 = vpack.c.b16 %v480, %v479
        %v493 = vpack.c.b16 %v482, %v481
        %v494 = vpack.c.b16 %v484, %v483
        %v495 = vpack.c.b16 %v486, %v485
        %v496 = vpack.c.b16 %v488, %v487
        %505 = vmatprep.subr.bf16.mxu0 0
        %506 = vmatpush1.bf16.msra.mxu0 %v489
        %507 = vmatprep.subr.bf16.mxu0 0
        %508 = vmatpush1.bf16.msra.mxu0 %v490
        %509 = vmatprep.subr.bf16.mxu0 0
        %510 = vmatpush1.bf16.msra.mxu0 %v491
        %511 = vmatprep.subr.bf16.mxu0 0
        %512 = vmatpush1.bf16.msra.mxu0 %v492
        %513 = vmatprep.subr.bf16.mxu0 0
        %514 = vmatpush1.bf16.msra.mxu0 %v493
        %515 = vmatprep.subr.bf16.mxu0 0
        %516 = vmatpush1.bf16.msra.mxu0 %v494
        %517 = vmatprep.subr.bf16.mxu0 0
        %518 = vmatpush1.bf16.msra.mxu0 %v495
        %519 = vmatprep.subr.bf16.mxu0 0
        %520 = vmatpush1.bf16.msra.mxu0 %v496
        %521 = vmatprep.subr.bf16.mxu0 0
        %522 = vmatpush1.bf16.msra.mxu0 0
        %523 = vmatprep.subr.bf16.mxu0 0
        %524 = vmatpush1.bf16.msra.mxu0 0
        %525 = vmatprep.subr.bf16.mxu0 0
        %526 = vmatpush1.bf16.msra.mxu0 0
        %527 = vmatprep.subr.bf16.mxu0 0
        %528 = vmatpush1.bf16.msra.mxu0 0
        %529 = vmatprep.subr.bf16.mxu0 0
        %530 = vmatpush1.bf16.msra.mxu0 0
        %531 = vmatprep.subr.bf16.mxu0 0
        %532 = vmatpush1.bf16.msra.mxu0 0
        %533 = vmatprep.subr.bf16.mxu0 0
        %534 = vmatpush1.bf16.msra.mxu0 0
        %535 = vmatprep.subr.bf16.mxu0 0
        %536 = vmatpush1.bf16.msra.mxu0 0
        %537 = vmatprep.mubr.bf16.mxu0 0
        %538 = vmatmul.mubr.bf16.gmra.mrb[0].mxu0 %v438
        %v539 = vpop.f32.mrb[0].mxu0
        %v540 = vadd.f32 0.0, %v539
        %v541 = vpop.f32.mrb[0].mxu0
        %v542 = vpop.f32.mrb[0].mxu0
        %v543 = vadd.f32 0.0, %v542
        %v544 = vpop.f32.mrb[0].mxu0
        %545 = vdwg.mxu0
        %v546 = vadd.f32 %v439, %v540
        %v547 = vadd.f32 %v440, %v543
        %548 = vst [vmem:[#allocation2] sm:$0xff] %v546
        %549 = vst [vmem:[#allocation2 + $0x8] sm:$0xff] %v547
        // Predicated region
        $region86: #{vit_feature_extractor.13} parent=72 // pred_check
          %p550 = pneg %p383
        $region87: #{vit_feature_extractor.13} parent=72 // pred_check_branch
          %552 = sbr.rel (%p550) target = $region89
        $region88: #{vit_feature_extractor.13} parent=72 // pred_region
          %v553 = vld [vmem:[#allocation2] sm:$0xff]
          %v554 = vld [vmem:[#allocation2 + $0x8] sm:$0xff]
          %v555 = vpack.c.bf16 %v554, %v553
          %v557 = vunpack.c.l.b16 %v555
          %v558 = vunpack.c.h.b16 %v555
          %v559 = vpack.c.b16 %v557, %v557
          %v560 = vpack.c.b16 %v558, %v558
          %563 = vst [vmem:[%s364] sm:$0xf] %v559
          %564 = vst [vmem:[%s364 + $0x4] sm:$0xf] %v560
        $region89: #{vit_feature_extractor.13} parent=72 // pred_fallthru
          _
        %s565 = sand.u32 %s152, 1
        %s566 = sand.u32 %s152, 1
        %s567 = smul.addr %s566, 8
        %s568 = scalar_lea.vmem [#allocation5], %s567
        // Predicated region
        $region90: #{vit_feature_extractor.13} parent=72 // pred_check
          %p569 = pneg %p162
        $region91: #{vit_feature_extractor.13} parent=72 // pred_check_branch
          %571 = sbr.rel (%p569) target = $region93
        $region92: #{vit_feature_extractor.13} parent=72 // pred_region
          %s572 = smul.u32 2, %s20
          %s573 = smul.addr %s572, 3
          %s574 = sadd.s32 %s21, %s573
          %s575 = smul.addr %s574, 4
          %s576 = scalar_lea.vmem %s4, %s575
          // Predicated region
          $region94: #{vit_feature_extractor.13} parent=92 // pred_check
            _
          $region95: #{vit_feature_extractor.13} parent=92 // pred_check_branch
            %578 = sbr.rel (0) target = $region97
          $region96: #{vit_feature_extractor.13} parent=92 // pred_region
            // Predicated region
            $region98: #{vit_feature_extractor.13} parent=96 // pred_check
              _
            $region99: #{vit_feature_extractor.13} parent=96 // pred_check_branch
              %580 = sbr.rel target = $region101
            $region100: #{vit_feature_extractor.13} parent=96 // pred_region
              // Predicated region
              $region113: #{vit_feature_extractor.13} parent=100 // pred_check
                _
              $region114: #{vit_feature_extractor.13} parent=100 // pred_check_branch
                %597 = sbr.rel (0) target = $region116
              $region115: #{vit_feature_extractor.13} parent=100 // pred_region
                loop: start=0, step=1, limit=1
                $region117: #{vit_feature_extractor.13} parent=115 // loop_pre_header
                  _
                $region118: #{vit_feature_extractor.13} parent=115 // loop_header
                  %s599 = sphi 0, %s603
                  %p600 = scmp.ge.s32.totalorder %s599, 1
                  %s604 = sphi %s568, %s568
                  %s605 = sphi %s576, %s576
                $region119: #{vit_feature_extractor.13} parent=115 // loop_header_branch
                  %602 = sbr.rel (%p600) target = $region123
                $region120: #{vit_feature_extractor.13} parent=115 // loop_body
                  _
                $region121: #{vit_feature_extractor.13} parent=115 // loop_footer
                  %s603 = sadd.s32 1, %s599
                $region122: #{vit_feature_extractor.13} parent=115 // loop_footer_branch
                  %598 = sbr.rel target = $region118
                $region123: #{vit_feature_extractor.13} parent=115 // loop_exit
                  _
                loop: start=0, step=1, limit=1
                $region124: #{vit_feature_extractor.13} parent=115 // loop_pre_header
                  _
                $region125: #{vit_feature_extractor.13} parent=115 // loop_header
                  %s608 = sphi 0, %s612
                  %p609 = scmp.ge.s32.totalorder %s608, 1
                  %s613 = sphi %s568, %s568
                  %s614 = sphi %s576, %s576
                $region126: #{vit_feature_extractor.13} parent=115 // loop_header_branch
                  %611 = sbr.rel (%p609) target = $region130
                $region127: #{vit_feature_extractor.13} parent=115 // loop_body
                  %v615 = vld [vmem:[%s613] sm:$0xf]
                  %616 = vst [vmem:[%s614] sm:$0xf] %v615
                  %v617 = vld [vmem:[%s613 + $0x4] sm:$0xf]
                  %618 = vst [vmem:[%s614 + $0xc] sm:$0xf] %v617
                $region128: #{vit_feature_extractor.13} parent=115 // loop_footer
                  %s612 = sadd.s32 1, %s608
                $region129: #{vit_feature_extractor.13} parent=115 // loop_footer_branch
                  %607 = sbr.rel target = $region125
                $region130: #{vit_feature_extractor.13} parent=115 // loop_exit
                  _
              $region116: #{vit_feature_extractor.13} parent=100 // pred_fallthru
                _
            $region101: #{vit_feature_extractor.13} parent=96 // pred_fallthru
              _
            // Predicated region
            $region102: #{vit_feature_extractor.13} parent=96 // pred_check
              _
            $region103: #{vit_feature_extractor.13} parent=96 // pred_check_branch
              %582 = sbr.rel (0) target = $region105
            $region104: #{vit_feature_extractor.13} parent=96 // pred_region
              loop: start=0, step=1, limit=1
              $region106: #{vit_feature_extractor.13} parent=104 // loop_pre_header
                _
              $region107: #{vit_feature_extractor.13} parent=104 // loop_header
                %s585 = sphi 0, %s589
                %p586 = scmp.ge.s32.totalorder %s585, 1
                %s590 = sphi %s568, %s568
                %s591 = sphi %s576, %s576
              $region108: #{vit_feature_extractor.13} parent=104 // loop_header_branch
                %588 = sbr.rel (%p586) target = $region112
              $region109: #{vit_feature_extractor.13} parent=104 // loop_body
                %v592 = vld [vmem:[%s590] sm:$0xf]
                %593 = vst [vmem:[%s591] sm:$0xf] %v592
                %v594 = vld [vmem:[%s590 + $0x4] sm:$0xf]
                %595 = vst [vmem:[%s591 + $0xc] sm:$0xf] %v594
              $region110: #{vit_feature_extractor.13} parent=104 // loop_footer
                %s589 = sadd.s32 1, %s585
              $region111: #{vit_feature_extractor.13} parent=104 // loop_footer_branch
                %584 = sbr.rel target = $region107
              $region112: #{vit_feature_extractor.13} parent=104 // loop_exit
                _
            $region105: #{vit_feature_extractor.13} parent=96 // pred_fallthru
              _
          $region97: #{vit_feature_extractor.13} parent=92 // pred_fallthru
            _
          %619 = vnop
        $region93: #{vit_feature_extractor.13} parent=72 // pred_fallthru
          _
      $region73: #{vit_feature_extractor.13} parent=5 // pred_fallthru
        _
      %p620 = scmp.le.s32.totalorder 2, %s10
      // Predicated region
      $region131: #{vit_feature_extractor.13} parent=5 // pred_check
        %p621 = pneg %p620
      $region132: #{vit_feature_extractor.13} parent=5 // pred_check_branch
        %623 = sbr.rel (%p621) target = $region134
      $region133: #{vit_feature_extractor.13} parent=5 // pred_region
        %s624 = ssub.s32 %s10, 2
        // Predicated region
        $region135: #{vit_feature_extractor.13} parent=133 // pred_check
          %p625 = pneg %p168
        $region136: #{vit_feature_extractor.13} parent=133 // pred_check_branch
          %627 = sbr.rel (%p625) target = $region138
        $region137: #{vit_feature_extractor.13} parent=133 // pred_region
          %s628 = sand.u32 %s153, 1
          %s629 = sand.u32 %s153, 1
          %s630 = smul.addr %s629, 8
          %s631 = scalar_lea.vmem [#allocation5], %s630
        $region138: #{vit_feature_extractor.13} parent=133 // pred_fallthru
          _
      $region134: #{vit_feature_extractor.13} parent=5 // pred_fallthru
        _
    $region6: #{vit_feature_extractor.13} parent=1 // loop_footer
      %s14 = sadd.s32 1, %s10
    $region7: #{vit_feature_extractor.13} parent=1 // loop_footer_branch
      %9 = sbr.rel target = $region3
    $region8: #{vit_feature_extractor.13} parent=1 // loop_exit
      _

// kernel: vit_feature_extractor.12
$region0: #{vit_feature_extractor.12}
  #allocation0 [shape = 'u32[]', space=smem, size = 0x4, offset = 0x4, fixed_abs, tag = 'smem constant byte address 0x4 - core index']
  #allocation1 [shape = 'u32[144,128]{1,0:T(1,128)}', space=vmem, size = 0x12000, scoped, tag = 'internal scratch']
  #allocation2 [shape = 'f32[8,128]{1,0:T(8,128)}', space=vmem, size = 0x1000, scoped, tag = 'scratch operand']
  #allocation3 [shape = 'bf16[8,3072]{1,0:T(8,128)(2,1)}', space=vmem, size = 0xc000, scoped, tag = 'scratch operand']
  %s0 = inlined_call_operand.vmem [shape: bf16[8,3072], index: 0, kind: input, shape index: {}]
  %s1 = inlined_call_operand.vmem [shape: bf16[3072,128], index: 1, kind: input, shape index: {}]
  %s2 = inlined_call_operand.vmem [shape: bf16[1,3072], index: 2, kind: input, shape index: {}]
  %s3 = inlined_call_operand.vmem [shape: bf16[1,3072], index: 3, kind: input, shape index: {}]
  %s4 = inlined_call_operand.vmem [shape: bf16[1,128], index: 4, kind: input, shape index: {}]
  %s5 = inlined_call_operand.vmem [shape: bf16[1,128], index: 5, kind: input, shape index: {}]
  %s6 = inlined_call_operand.vmem [shape: bf16[1,128], index: 6, kind: input, shape index: {}]
  %s7 = inlined_call_operand.vmem [shape: bf16[8,128], index: 7, kind: output, shape index: {}]
  %s8 = sld [smem:[#allocation0]]
  $region50: #{vit_feature_extractor.12} parent=0
    _
  %s10 = ssub.s32 1, %s8
  %s11 = scalar_select 0, %s10, %s8
  // Predicated region
  $region2: #{vit_feature_extractor.12} parent=0 // pred_check
    _
  $region3: #{vit_feature_extractor.12} parent=0 // pred_check_branch
    %13 = sbr.rel (0) target = $region5
  $region4: #{vit_feature_extractor.12} parent=0 // pred_region
    _
  $region5: #{vit_feature_extractor.12} parent=0 // pred_fallthru
    _
  // Predicated region
  $region6: #{vit_feature_extractor.12} parent=0 // pred_check
    _
  $region7: #{vit_feature_extractor.12} parent=0 // pred_check_branch
    %15 = sbr.rel (0) target = $region9
  $region8: #{vit_feature_extractor.12} parent=0 // pred_region
    _
  $region9: #{vit_feature_extractor.12} parent=0 // pred_fallthru
    _
  // Predicated region
  $region10: #{vit_feature_extractor.12} parent=0 // pred_check
    _
  $region11: #{vit_feature_extractor.12} parent=0 // pred_check_branch
    %17 = sbr.rel (0) target = $region13
  $region12: #{vit_feature_extractor.12} parent=0 // pred_region
    _
  $region13: #{vit_feature_extractor.12} parent=0 // pred_fallthru
    _
  // Predicated region
  $region14: #{vit_feature_extractor.12} parent=0 // pred_check
    _
  $region15: #{vit_feature_extractor.12} parent=0 // pred_check_branch
    %19 = sbr.rel (0) target = $region17
  $region16: #{vit_feature_extractor.12} parent=0 // pred_region
    _
  $region17: #{vit_feature_extractor.12} parent=0 // pred_fallthru
    _
  // Predicated region
  $region18: #{vit_feature_extractor.12} parent=0 // pred_check
    _
  $region19: #{vit_feature_extractor.12} parent=0 // pred_check_branch
    %21 = sbr.rel (0) target = $region21
  $region20: #{vit_feature_extractor.12} parent=0 // pred_region
    _
  $region21: #{vit_feature_extractor.12} parent=0 // pred_fallthru
    _
  // Predicated region
  $region22: #{vit_feature_extractor.12} parent=0 // pred_check
    _
  $region23: #{vit_feature_extractor.12} parent=0 // pred_check_branch
    %23 = sbr.rel (0) target = $region25
  $region24: #{vit_feature_extractor.12} parent=0 // pred_region
    _
  $region25: #{vit_feature_extractor.12} parent=0 // pred_fallthru
    _
  // Predicated region
  $region26: #{vit_feature_extractor.12} parent=0 // pred_check
    _
  $region27: #{vit_feature_extractor.12} parent=0 // pred_check_branch
    %25 = sbr.rel (0) target = $region29
  $region28: #{vit_feature_extractor.12} parent=0 // pred_region
    _
  $region29: #{vit_feature_extractor.12} parent=0 // pred_fallthru
    _
  %p27 = scmp.eq.s32.totalorder 0, 0
  // Predicated region
  $region30: #{vit_feature_extractor.12} parent=0 // pred_check
    %p28 = pneg %p27
  $region31: #{vit_feature_extractor.12} parent=0 // pred_check_branch
    %30 = sbr.rel (%p28) target = $region33
  $region32: #{vit_feature_extractor.12} parent=0 // pred_region
    %31 = vst [vmem:[#allocation2] sm:$0xff] 0.0
  $region33: #{vit_feature_extractor.12} parent=0 // pred_fallthru
    _
  %p32 = scmp.eq.s32.totalorder 0, 0
  // Predicated region
  $region34: #{vit_feature_extractor.12} parent=0 // pred_check
    %p33 = pneg %p32
  $region35: #{vit_feature_extractor.12} parent=0 // pred_check_branch
    %35 = sbr.rel (%p33) target = $region37
  $region36: #{vit_feature_extractor.12} parent=0 // pred_region
    %v36 = vld [vmem:[%s0] sm:$0xff]
    %v37 = vld [vmem:[%s0 + $0x8] sm:$0xff]
    %v38 = vld [vmem:[%s0 + $0x10] sm:$0xff]
    %v39 = vld [vmem:[%s0 + $0x18] sm:$0xff]
    %v40 = vld [vmem:[%s0 + $0x20] sm:$0xff]
    %v41 = vld [vmem:[%s0 + $0x28] sm:$0xff]
    %v42 = vld [vmem:[%s0 + $0x30] sm:$0xff]
    %v43 = vld [vmem:[%s0 + $0x38] sm:$0xff]
    %v44 = vld [vmem:[%s0 + $0x40] sm:$0xff]
    %v45 = vld [vmem:[%s0 + $0x48] sm:$0xff]
    %v46 = vld [vmem:[%s0 + $0x50] sm:$0xff]
    %v47 = vld [vmem:[%s0 + $0x58] sm:$0xff]
    %v48 = vunpack.c.l.bf16 %v36
    %v49 = vunpack.c.h.bf16 %v36
    %v50 = vunpack.c.l.bf16 %v37
    %v51 = vunpack.c.h.bf16 %v37
    %v52 = vunpack.c.l.bf16 %v38
    %v53 = vunpack.c.h.bf16 %v38
    %v54 = vunpack.c.l.bf16 %v39
    %v55 = vunpack.c.h.bf16 %v39
    %v56 = vunpack.c.l.bf16 %v40
    %v57 = vunpack.c.h.bf16 %v40
    %v58 = vunpack.c.l.bf16 %v41
    %v59 = vunpack.c.h.bf16 %v41
    %v60 = vunpack.c.l.bf16 %v42
    %v61 = vunpack.c.h.bf16 %v42
    %v62 = vunpack.c.l.bf16 %v43
    %v63 = vunpack.c.h.bf16 %v43
    %v64 = vunpack.c.l.bf16 %v44
    %v65 = vunpack.c.h.bf16 %v44
    %v66 = vunpack.c.l.bf16 %v45
    %v67 = vunpack.c.h.bf16 %v45
    %v68 = vunpack.c.l.bf16 %v46
    %v69 = vunpack.c.h.bf16 %v46
    %v70 = vunpack.c.l.bf16 %v47
    %v71 = vunpack.c.h.bf16 %v47
    %v72 = vadd.f32 %v48, %v49
    %v73 = vadd.f32 %v72, %v50
    %v74 = vadd.f32 %v73, %v51
    %v75 = vadd.f32 %v74, %v52
    %v76 = vadd.f32 %v75, %v53
    %v77 = vadd.f32 %v76, %v54
    %v78 = vadd.f32 %v77, %v55
    %v79 = vadd.f32 %v78, %v56
    %v80 = vadd.f32 %v79, %v57
    %v81 = vadd.f32 %v80, %v58
    %v82 = vadd.f32 %v81, %v59
    %v83 = vadd.f32 %v82, %v60
    %v84 = vadd.f32 %v83, %v61
    %v85 = vadd.f32 %v84, %v62
    %v86 = vadd.f32 %v85, %v63
    %v87 = vadd.f32 %v86, %v64
    %v88 = vadd.f32 %v87, %v65
    %v89 = vadd.f32 %v88, %v66
    %v90 = vadd.f32 %v89, %v67
    %v91 = vadd.f32 %v90, %v68
    %v92 = vadd.f32 %v91, %v69
    %v93 = vadd.f32 %v92, %v70
    %v94 = vadd.f32 %v93, %v71
    %95 = vadd.xlane.f32.xlu0 %v94
    %v96 = vpop.xlane.xlu0 %95
    %v97 = vrcp.pop 3072.0
    %v98 = vmul.f32 %v96, %v97
    %v99 = vsub.f32 %v48, %v98
    %v100 = vsub.f32 %v49, %v98
    %v101 = vsub.f32 %v50, %v98
    %v102 = vsub.f32 %v51, %v98
    %v103 = vsub.f32 %v52, %v98
    %v104 = vsub.f32 %v53, %v98
    %v105 = vsub.f32 %v54, %v98
    %v106 = vsub.f32 %v55, %v98
    %v107 = vsub.f32 %v56, %v98
    %v108 = vsub.f32 %v57, %v98
    %v109 = vsub.f32 %v58, %v98
    %v110 = vsub.f32 %v59, %v98
    %v111 = vsub.f32 %v60, %v98
    %v112 = vsub.f32 %v61, %v98
    %v113 = vsub.f32 %v62, %v98
    %v114 = vsub.f32 %v63, %v98
    %v115 = vsub.f32 %v64, %v98
    %v116 = vsub.f32 %v65, %v98
    %v117 = vsub.f32 %v66, %v98
    %v118 = vsub.f32 %v67, %v98
    %v119 = vsub.f32 %v68, %v98
    %v120 = vsub.f32 %v69, %v98
    %v121 = vsub.f32 %v70, %v98
    %v122 = vsub.f32 %v71, %v98
    %v123 = vmul.f32 %v99, %v99
    %v124 = vmul.f32 %v100, %v100
    %v125 = vmul.f32 %v101, %v101
    %v126 = vmul.f32 %v102, %v102
    %v127 = vmul.f32 %v103, %v103
    %v128 = vmul.f32 %v104, %v104
    %v129 = vmul.f32 %v105, %v105
    %v130 = vmul.f32 %v106, %v106
    %v131 = vmul.f32 %v107, %v107
    %v132 = vmul.f32 %v108, %v108
    %v133 = vmul.f32 %v109, %v109
    %v134 = vmul.f32 %v110, %v110
    %v135 = vmul.f32 %v111, %v111
    %v136 = vmul.f32 %v112, %v112
    %v137 = vmul.f32 %v113, %v113
    %v138 = vmul.f32 %v114, %v114
    %v139 = vmul.f32 %v115, %v115
    %v140 = vmul.f32 %v116, %v116
    %v141 = vmul.f32 %v117, %v117
    %v142 = vmul.f32 %v118, %v118
    %v143 = vmul.f32 %v119, %v119
    %v144 = vmul.f32 %v120, %v120
    %v145 = vmul.f32 %v121, %v121
    %v146 = vmul.f32 %v122, %v122
    %v147 = vadd.f32 %v123, %v124
    %v148 = vadd.f32 %v147, %v125
    %v149 = vadd.f32 %v148, %v126
    %v150 = vadd.f32 %v149, %v127
    %v151 = vadd.f32 %v150, %v128
    %v152 = vadd.f32 %v151, %v129
    %v153 = vadd.f32 %v152, %v130
    %v154 = vadd.f32 %v153, %v131
    %v155 = vadd.f32 %v154, %v132
    %v156 = vadd.f32 %v155, %v133
    %v157 = vadd.f32 %v156, %v134
    %v158 = vadd.f32 %v157, %v135
    %v159 = vadd.f32 %v158, %v136
    %v160 = vadd.f32 %v159, %v137
    %v161 = vadd.f32 %v160, %v138
    %v162 = vadd.f32 %v161, %v139
    %v163 = vadd.f32 %v162, %v140
    %v164 = vadd.f32 %v163, %v141
    %v165 = vadd.f32 %v164, %v142
    %v166 = vadd.f32 %v165, %v143
    %v167 = vadd.f32 %v166, %v144
    %v168 = vadd.f32 %v167, %v145
    %v169 = vadd.f32 %v168, %v146
    %170 = vadd.xlane.f32.xlu0 %v169
    %v171 = vpop.xlane.xlu0 %170
    %v172 = vmul.f32 %v171, %v97
    %v173 = vadd.f32 %v172, 1e-05
    %v174 = vrsqrt.pop %v173
    %v175 = vmul.f32 %v99, %v174
    %v176 = vmul.f32 %v100, %v174
    %v177 = vmul.f32 %v101, %v174
    %v178 = vmul.f32 %v102, %v174
    %v179 = vmul.f32 %v103, %v174
    %v180 = vmul.f32 %v104, %v174
    %v181 = vmul.f32 %v105, %v174
    %v182 = vmul.f32 %v106, %v174
    %v183 = vmul.f32 %v107, %v174
    %v184 = vmul.f32 %v108, %v174
    %v185 = vmul.f32 %v109, %v174
    %v186 = vmul.f32 %v110, %v174
    %v187 = vmul.f32 %v111, %v174
    %v188 = vmul.f32 %v112, %v174
    %v189 = vmul.f32 %v113, %v174
    %v190 = vmul.f32 %v114, %v174
    %v191 = vmul.f32 %v115, %v174
    %v192 = vmul.f32 %v116, %v174
    %v193 = vmul.f32 %v117, %v174
    %v194 = vmul.f32 %v118, %v174
    %v195 = vmul.f32 %v119, %v174
    %v196 = vmul.f32 %v120, %v174
    %v197 = vmul.f32 %v121, %v174
    %v198 = vmul.f32 %v122, %v174
    %v199 = vld [vmem:[%s2] sm:$0xff]
    %v200 = vld [vmem:[%s2 + $0x8] sm:$0xff]
    %v201 = vld [vmem:[%s2 + $0x10] sm:$0xff]
    %v202 = vunpack.c.l.bf16 %v199
    %v203 = vunpack.c.h.bf16 %v199
    %v204 = vunpack.c.l.bf16 %v200
    %v205 = vunpack.c.h.bf16 %v200
    %v206 = vunpack.c.l.bf16 %v201
    %v207 = vunpack.c.h.bf16 %v201
    %v214 = vlaneseq
    %v215 = vshrl.u32 %v214, 7
    %v216 = vsub.s32 0, %v215
    %v217 = vrot.slane %v202, %v216
    %v218 = vlaneseq
    %v219 = vshrl.u32 %v218, 7
    %v220 = vsub.s32 2, %v219
    %v221 = vrot.slane %v202, %v220
    %v222 = vlaneseq
    %v223 = vshrl.u32 %v222, 7
    %v224 = vsub.s32 4, %v223
    %v225 = vrot.slane %v202, %v224
    %v226 = vlaneseq
    %v227 = vshrl.u32 %v226, 7
    %v228 = vsub.s32 6, %v227
    %v229 = vrot.slane %v202, %v228
    %v230 = vlaneseq
    %v231 = vshrl.u32 %v230, 7
    %v232 = vsub.s32 0, %v231
    %v233 = vrot.slane %v203, %v232
    %v234 = vlaneseq
    %v235 = vshrl.u32 %v234, 7
    %v236 = vsub.s32 2, %v235
    %v237 = vrot.slane %v203, %v236
    %v238 = vlaneseq
    %v239 = vshrl.u32 %v238, 7
    %v240 = vsub.s32 4, %v239
    %v241 = vrot.slane %v203, %v240
    %v242 = vlaneseq
    %v243 = vshrl.u32 %v242, 7
    %v244 = vsub.s32 6, %v243
    %v245 = vrot.slane %v203, %v244
    %v246 = vlaneseq
    %v247 = vshrl.u32 %v246, 7
    %v248 = vsub.s32 0, %v247
    %v249 = vrot.slane %v204, %v248
    %v250 = vlaneseq
    %v251 = vshrl.u32 %v250, 7
    %v252 = vsub.s32 2, %v251
    %v253 = vrot.slane %v204, %v252
    %v254 = vlaneseq
    %v255 = vshrl.u32 %v254, 7
    %v256 = vsub.s32 4, %v255
    %v257 = vrot.slane %v204, %v256
    %v258 = vlaneseq
    %v259 = vshrl.u32 %v258, 7
    %v260 = vsub.s32 6, %v259
    %v261 = vrot.slane %v204, %v260
    %v262 = vlaneseq
    %v263 = vshrl.u32 %v262, 7
    %v264 = vsub.s32 0, %v263
    %v265 = vrot.slane %v205, %v264
    %v266 = vlaneseq
    %v267 = vshrl.u32 %v266, 7
    %v268 = vsub.s32 2, %v267
    %v269 = vrot.slane %v205, %v268
    %v270 = vlaneseq
    %v271 = vshrl.u32 %v270, 7
    %v272 = vsub.s32 4, %v271
    %v273 = vrot.slane %v205, %v272
    %v274 = vlaneseq
    %v275 = vshrl.u32 %v274, 7
    %v276 = vsub.s32 6, %v275
    %v277 = vrot.slane %v205, %v276
    %v278 = vlaneseq
    %v279 = vshrl.u32 %v278, 7
    %v280 = vsub.s32 0, %v279
    %v281 = vrot.slane %v206, %v280
    %v282 = vlaneseq
    %v283 = vshrl.u32 %v282, 7
    %v284 = vsub.s32 2, %v283
    %v285 = vrot.slane %v206, %v284
    %v286 = vlaneseq
    %v287 = vshrl.u32 %v286, 7
    %v288 = vsub.s32 4, %v287
    %v289 = vrot.slane %v206, %v288
    %v290 = vlaneseq
    %v291 = vshrl.u32 %v290, 7
    %v292 = vsub.s32 6, %v291
    %v293 = vrot.slane %v206, %v292
    %v294 = vlaneseq
    %v295 = vshrl.u32 %v294, 7
    %v296 = vsub.s32 0, %v295
    %v297 = vrot.slane %v207, %v296
    %v298 = vlaneseq
    %v299 = vshrl.u32 %v298, 7
    %v300 = vsub.s32 2, %v299
    %v301 = vrot.slane %v207, %v300
    %v302 = vlaneseq
    %v303 = vshrl.u32 %v302, 7
    %v304 = vsub.s32 4, %v303
    %v305 = vrot.slane %v207, %v304
    %v306 = vlaneseq
    %v307 = vshrl.u32 %v306, 7
    %v308 = vsub.s32 6, %v307
    %v309 = vrot.slane %v207, %v308
    %v334 = vlaneseq
    %v335 = vshrl.u32 %v334, 7
    %v336 = vsub.s32 0, %v335
    %v337 = vrot.slane %v217, %v336
    %v338 = vlaneseq
    %v339 = vshrl.u32 %v338, 7
    %v340 = vsub.s32 0, %v339
    %v341 = vrot.slane %v221, %v340
    %v342 = vlaneseq
    %v343 = vshrl.u32 %v342, 7
    %v344 = vsub.s32 0, %v343
    %v345 = vrot.slane %v225, %v344
    %v346 = vlaneseq
    %v347 = vshrl.u32 %v346, 7
    %v348 = vsub.s32 0, %v347
    %v349 = vrot.slane %v229, %v348
    %v350 = vlaneseq
    %v351 = vshrl.u32 %v350, 7
    %v352 = vsub.s32 0, %v351
    %v353 = vrot.slane %v233, %v352
    %v354 = vlaneseq
    %v355 = vshrl.u32 %v354, 7
    %v356 = vsub.s32 0, %v355
    %v357 = vrot.slane %v237, %v356
    %v358 = vlaneseq
    %v359 = vshrl.u32 %v358, 7
    %v360 = vsub.s32 0, %v359
    %v361 = vrot.slane %v241, %v360
    %v362 = vlaneseq
    %v363 = vshrl.u32 %v362, 7
    %v364 = vsub.s32 0, %v363
    %v365 = vrot.slane %v245, %v364
    %v366 = vlaneseq
    %v367 = vshrl.u32 %v366, 7
    %v368 = vsub.s32 0, %v367
    %v369 = vrot.slane %v249, %v368
    %v370 = vlaneseq
    %v371 = vshrl.u32 %v370, 7
    %v372 = vsub.s32 0, %v371
    %v373 = vrot.slane %v253, %v372
    %v374 = vlaneseq
    %v375 = vshrl.u32 %v374, 7
    %v376 = vsub.s32 0, %v375
    %v377 = vrot.slane %v257, %v376
    %v378 = vlaneseq
    %v379 = vshrl.u32 %v378, 7
    %v380 = vsub.s32 0, %v379
    %v381 = vrot.slane %v261, %v380
    %v382 = vlaneseq
    %v383 = vshrl.u32 %v382, 7
    %v384 = vsub.s32 0, %v383
    %v385 = vrot.slane %v265, %v384
    %v386 = vlaneseq
    %v387 = vshrl.u32 %v386, 7
    %v388 = vsub.s32 0, %v387
    %v389 = vrot.slane %v269, %v388
    %v390 = vlaneseq
    %v391 = vshrl.u32 %v390, 7
    %v392 = vsub.s32 0, %v391
    %v393 = vrot.slane %v273, %v392
    %v394 = vlaneseq
    %v395 = vshrl.u32 %v394, 7
    %v396 = vsub.s32 0, %v395
    %v397 = vrot.slane %v277, %v396
    %v398 = vlaneseq
    %v399 = vshrl.u32 %v398, 7
    %v400 = vsub.s32 0, %v399
    %v401 = vrot.slane %v281, %v400
    %v402 = vlaneseq
    %v403 = vshrl.u32 %v402, 7
    %v404 = vsub.s32 0, %v403
    %v405 = vrot.slane %v285, %v404
    %v406 = vlaneseq
    %v407 = vshrl.u32 %v406, 7
    %v408 = vsub.s32 0, %v407
    %v409 = vrot.slane %v289, %v408
    %v410 = vlaneseq
    %v411 = vshrl.u32 %v410, 7
    %v412 = vsub.s32 0, %v411
    %v413 = vrot.slane %v293, %v412
    %v414 = vlaneseq
    %v415 = vshrl.u32 %v414, 7
    %v416 = vsub.s32 0, %v415
    %v417 = vrot.slane %v297, %v416
    %v418 = vlaneseq
    %v419 = vshrl.u32 %v418, 7
    %v420 = vsub.s32 0, %v419
    %v421 = vrot.slane %v301, %v420
    %v422 = vlaneseq
    %v423 = vshrl.u32 %v422, 7
    %v424 = vsub.s32 0, %v423
    %v425 = vrot.slane %v305, %v424
    %v426 = vlaneseq
    %v427 = vshrl.u32 %v426, 7
    %v428 = vsub.s32 0, %v427
    %v429 = vrot.slane %v309, %v428
    %v430 = vmul.f32 %v175, %v337
    %v431 = vmul.f32 %v176, %v341
    %v432 = vmul.f32 %v177, %v345
    %v433 = vmul.f32 %v178, %v349
    %v434 = vmul.f32 %v179, %v353
    %v435 = vmul.f32 %v180, %v357
    %v436 = vmul.f32 %v181, %v361
    %v437 = vmul.f32 %v182, %v365
    %v438 = vmul.f32 %v183, %v369
    %v439 = vmul.f32 %v184, %v373
    %v440 = vmul.f32 %v185, %v377
    %v441 = vmul.f32 %v186, %v381
    %v442 = vmul.f32 %v187, %v385
    %v443 = vmul.f32 %v188, %v389
    %v444 = vmul.f32 %v189, %v393
    %v445 = vmul.f32 %v190, %v397
    %v446 = vmul.f32 %v191, %v401
    %v447 = vmul.f32 %v192, %v405
    %v448 = vmul.f32 %v193, %v409
    %v449 = vmul.f32 %v194, %v413
    %v450 = vmul.f32 %v195, %v417
    %v451 = vmul.f32 %v196, %v421
    %v452 = vmul.f32 %v197, %v425
    %v453 = vmul.f32 %v198, %v429
    %v454 = vld [vmem:[%s3] sm:$0xff]
    %v455 = vld [vmem:[%s3 + $0x8] sm:$0xff]
    %v456 = vld [vmem:[%s3 + $0x10] sm:$0xff]
    %v457 = vunpack.c.l.bf16 %v454
    %v458 = vunpack.c.h.bf16 %v454
    %v459 = vunpack.c.l.bf16 %v455
    %v460 = vunpack.c.h.bf16 %v455
    %v461 = vunpack.c.l.bf16 %v456
    %v462 = vunpack.c.h.bf16 %v456
    %v469 = vlaneseq
    %v470 = vshrl.u32 %v469, 7
    %v471 = vsub.s32 0, %v470
    %v472 = vrot.slane %v457, %v471
    %v473 = vlaneseq
    %v474 = vshrl.u32 %v473, 7
    %v475 = vsub.s32 2, %v474
    %v476 = vrot.slane %v457, %v475
    %v477 = vlaneseq
    %v478 = vshrl.u32 %v477, 7
    %v479 = vsub.s32 4, %v478
    %v480 = vrot.slane %v457, %v479
    %v481 = vlaneseq
    %v482 = vshrl.u32 %v481, 7
    %v483 = vsub.s32 6, %v482
    %v484 = vrot.slane %v457, %v483
    %v485 = vlaneseq
    %v486 = vshrl.u32 %v485, 7
    %v487 = vsub.s32 0, %v486
    %v488 = vrot.slane %v458, %v487
    %v489 = vlaneseq
    %v490 = vshrl.u32 %v489, 7
    %v491 = vsub.s32 2, %v490
    %v492 = vrot.slane %v458, %v491
    %v493 = vlaneseq
    %v494 = vshrl.u32 %v493, 7
    %v495 = vsub.s32 4, %v494
    %v496 = vrot.slane %v458, %v495
    %v497 = vlaneseq
    %v498 = vshrl.u32 %v497, 7
    %v499 = vsub.s32 6, %v498
    %v500 = vrot.slane %v458, %v499
    %v501 = vlaneseq
    %v502 = vshrl.u32 %v501, 7
    %v503 = vsub.s32 0, %v502
    %v504 = vrot.slane %v459, %v503
    %v505 = vlaneseq
    %v506 = vshrl.u32 %v505, 7
    %v507 = vsub.s32 2, %v506
    %v508 = vrot.slane %v459, %v507
    %v509 = vlaneseq
    %v510 = vshrl.u32 %v509, 7
    %v511 = vsub.s32 4, %v510
    %v512 = vrot.slane %v459, %v511
    %v513 = vlaneseq
    %v514 = vshrl.u32 %v513, 7
    %v515 = vsub.s32 6, %v514
    %v516 = vrot.slane %v459, %v515
    %v517 = vlaneseq
    %v518 = vshrl.u32 %v517, 7
    %v519 = vsub.s32 0, %v518
    %v520 = vrot.slane %v460, %v519
    %v521 = vlaneseq
    %v522 = vshrl.u32 %v521, 7
    %v523 = vsub.s32 2, %v522
    %v524 = vrot.slane %v460, %v523
    %v525 = vlaneseq
    %v526 = vshrl.u32 %v525, 7
    %v527 = vsub.s32 4, %v526
    %v528 = vrot.slane %v460, %v527
    %v529 = vlaneseq
    %v530 = vshrl.u32 %v529, 7
    %v531 = vsub.s32 6, %v530
    %v532 = vrot.slane %v460, %v531
    %v533 = vlaneseq
    %v534 = vshrl.u32 %v533, 7
    %v535 = vsub.s32 0, %v534
    %v536 = vrot.slane %v461, %v535
    %v537 = vlaneseq
    %v538 = vshrl.u32 %v537, 7
    %v539 = vsub.s32 2, %v538
    %v540 = vrot.slane %v461, %v539
    %v541 = vlaneseq
    %v542 = vshrl.u32 %v541, 7
    %v543 = vsub.s32 4, %v542
    %v544 = vrot.slane %v461, %v543
    %v545 = vlaneseq
    %v546 = vshrl.u32 %v545, 7
    %v547 = vsub.s32 6, %v546
    %v548 = vrot.slane %v461, %v547
    %v549 = vlaneseq
    %v550 = vshrl.u32 %v549, 7
    %v551 = vsub.s32 0, %v550
    %v552 = vrot.slane %v462, %v551
    %v553 = vlaneseq
    %v554 = vshrl.u32 %v553, 7
    %v555 = vsub.s32 2, %v554
    %v556 = vrot.slane %v462, %v555
    %v557 = vlaneseq
    %v558 = vshrl.u32 %v557, 7
    %v559 = vsub.s32 4, %v558
    %v560 = vrot.slane %v462, %v559
    %v561 = vlaneseq
    %v562 = vshrl.u32 %v561, 7
    %v563 = vsub.s32 6, %v562
    %v564 = vrot.slane %v462, %v563
    %v589 = vlaneseq
    %v590 = vshrl.u32 %v589, 7
    %v591 = vsub.s32 0, %v590
    %v592 = vrot.slane %v472, %v591
    %v593 = vlaneseq
    %v594 = vshrl.u32 %v593, 7
    %v595 = vsub.s32 0, %v594
    %v596 = vrot.slane %v476, %v595
    %v597 = vlaneseq
    %v598 = vshrl.u32 %v597, 7
    %v599 = vsub.s32 0, %v598
    %v600 = vrot.slane %v480, %v599
    %v601 = vlaneseq
    %v602 = vshrl.u32 %v601, 7
    %v603 = vsub.s32 0, %v602
    %v604 = vrot.slane %v484, %v603
    %v605 = vlaneseq
    %v606 = vshrl.u32 %v605, 7
    %v607 = vsub.s32 0, %v606
    %v608 = vrot.slane %v488, %v607
    %v609 = vlaneseq
    %v610 = vshrl.u32 %v609, 7
    %v611 = vsub.s32 0, %v610
    %v612 = vrot.slane %v492, %v611
    %v613 = vlaneseq
    %v614 = vshrl.u32 %v613, 7
    %v615 = vsub.s32 0, %v614
    %v616 = vrot.slane %v496, %v615
    %v617 = vlaneseq
    %v618 = vshrl.u32 %v617, 7
    %v619 = vsub.s32 0, %v618
    %v620 = vrot.slane %v500, %v619
    %v621 = vlaneseq
    %v622 = vshrl.u32 %v621, 7
    %v623 = vsub.s32 0, %v622
    %v624 = vrot.slane %v504, %v623
    %v625 = vlaneseq
    %v626 = vshrl.u32 %v625, 7
    %v627 = vsub.s32 0, %v626
    %v628 = vrot.slane %v508, %v627
    %v629 = vlaneseq
    %v630 = vshrl.u32 %v629, 7
    %v631 = vsub.s32 0, %v630
    %v632 = vrot.slane %v512, %v631
    %v633 = vlaneseq
    %v634 = vshrl.u32 %v633, 7
    %v635 = vsub.s32 0, %v634
    %v636 = vrot.slane %v516, %v635
    %v637 = vlaneseq
    %v638 = vshrl.u32 %v637, 7
    %v639 = vsub.s32 0, %v638
    %v640 = vrot.slane %v520, %v639
    %v641 = vlaneseq
    %v642 = vshrl.u32 %v641, 7
    %v643 = vsub.s32 0, %v642
    %v644 = vrot.slane %v524, %v643
    %v645 = vlaneseq
    %v646 = vshrl.u32 %v645, 7
    %v647 = vsub.s32 0, %v646
    %v648 = vrot.slane %v528, %v647
    %v649 = vlaneseq
    %v650 = vshrl.u32 %v649, 7
    %v651 = vsub.s32 0, %v650
    %v652 = vrot.slane %v532, %v651
    %v653 = vlaneseq
    %v654 = vshrl.u32 %v653, 7
    %v655 = vsub.s32 0, %v654
    %v656 = vrot.slane %v536, %v655
    %v657 = vlaneseq
    %v658 = vshrl.u32 %v657, 7
    %v659 = vsub.s32 0, %v658
    %v660 = vrot.slane %v540, %v659
    %v661 = vlaneseq
    %v662 = vshrl.u32 %v661, 7
    %v663 = vsub.s32 0, %v662
    %v664 = vrot.slane %v544, %v663
    %v665 = vlaneseq
    %v666 = vshrl.u32 %v665, 7
    %v667 = vsub.s32 0, %v666
    %v668 = vrot.slane %v548, %v667
    %v669 = vlaneseq
    %v670 = vshrl.u32 %v669, 7
    %v671 = vsub.s32 0, %v670
    %v672 = vrot.slane %v552, %v671
    %v673 = vlaneseq
    %v674 = vshrl.u32 %v673, 7
    %v675 = vsub.s32 0, %v674
    %v676 = vrot.slane %v556, %v675
    %v677 = vlaneseq
    %v678 = vshrl.u32 %v677, 7
    %v679 = vsub.s32 0, %v678
    %v680 = vrot.slane %v560, %v679
    %v681 = vlaneseq
    %v682 = vshrl.u32 %v681, 7
    %v683 = vsub.s32 0, %v682
    %v684 = vrot.slane %v564, %v683
    %v685 = vadd.f32 %v430, %v592
    %v686 = vadd.f32 %v431, %v596
    %v687 = vadd.f32 %v432, %v600
    %v688 = vadd.f32 %v433, %v604
    %v689 = vadd.f32 %v434, %v608
    %v690 = vadd.f32 %v435, %v612
    %v691 = vadd.f32 %v436, %v616
    %v692 = vadd.f32 %v437, %v620
    %v693 = vadd.f32 %v438, %v624
    %v694 = vadd.f32 %v439, %v628
    %v695 = vadd.f32 %v440, %v632
    %v696 = vadd.f32 %v441, %v636
    %v697 = vadd.f32 %v442, %v640
    %v698 = vadd.f32 %v443, %v644
    %v699 = vadd.f32 %v444, %v648
    %v700 = vadd.f32 %v445, %v652
    %v701 = vadd.f32 %v446, %v656
    %v702 = vadd.f32 %v447, %v660
    %v703 = vadd.f32 %v448, %v664
    %v704 = vadd.f32 %v449, %v668
    %v705 = vadd.f32 %v450, %v672
    %v706 = vadd.f32 %v451, %v676
    %v707 = vadd.f32 %v452, %v680
    %v708 = vadd.f32 %v453, %v684
    %v709 = vpack.c.bf16 %v685, %v685
    %v710 = vpack.c.bf16 %v686, %v686
    %v711 = vpack.c.bf16 %v687, %v687
    %v712 = vpack.c.bf16 %v688, %v688
    %v713 = vpack.c.bf16 %v689, %v689
    %v714 = vpack.c.bf16 %v690, %v690
    %v715 = vpack.c.bf16 %v691, %v691
    %v716 = vpack.c.bf16 %v692, %v692
    %v717 = vpack.c.bf16 %v693, %v693
    %v718 = vpack.c.bf16 %v694, %v694
    %v719 = vpack.c.bf16 %v695, %v695
    %v720 = vpack.c.bf16 %v696, %v696
    %v721 = vpack.c.bf16 %v697, %v697
    %v722 = vpack.c.bf16 %v698, %v698
    %v723 = vpack.c.bf16 %v699, %v699
    %v724 = vpack.c.bf16 %v700, %v700
    %v725 = vpack.c.bf16 %v701, %v701
    %v726 = vpack.c.bf16 %v702, %v702
    %v727 = vpack.c.bf16 %v703, %v703
    %v728 = vpack.c.bf16 %v704, %v704
    %v729 = vpack.c.bf16 %v705, %v705
    %v730 = vpack.c.bf16 %v706, %v706
    %v731 = vpack.c.bf16 %v707, %v707
    %v732 = vpack.c.bf16 %v708, %v708
    %v757 = vunpack.c.l.b16 %v709
    %v758 = vunpack.c.l.b16 %v710
    %v759 = vunpack.c.l.b16 %v711
    %v760 = vunpack.c.l.b16 %v712
    %v761 = vunpack.c.l.b16 %v713
    %v762 = vunpack.c.l.b16 %v714
    %v763 = vunpack.c.l.b16 %v715
    %v764 = vunpack.c.l.b16 %v716
    %v765 = vunpack.c.l.b16 %v717
    %v766 = vunpack.c.l.b16 %v718
    %v767 = vunpack.c.l.b16 %v719
    %v768 = vunpack.c.l.b16 %v720
    %v769 = vunpack.c.l.b16 %v721
    %v770 = vunpack.c.l.b16 %v722
    %v771 = vunpack.c.l.b16 %v723
    %v772 = vunpack.c.l.b16 %v724
    %v773 = vunpack.c.l.b16 %v725
    %v774 = vunpack.c.l.b16 %v726
    %v775 = vunpack.c.l.b16 %v727
    %v776 = vunpack.c.l.b16 %v728
    %v777 = vunpack.c.l.b16 %v729
    %v778 = vunpack.c.l.b16 %v730
    %v779 = vunpack.c.l.b16 %v731
    %v780 = vunpack.c.l.b16 %v732
    %v781 = vpack.c.b16 %v758, %v757
    %v782 = vpack.c.b16 %v760, %v759
    %v783 = vpack.c.b16 %v762, %v761
    %v784 = vpack.c.b16 %v764, %v763
    %v785 = vpack.c.b16 %v766, %v765
    %v786 = vpack.c.b16 %v768, %v767
    %v787 = vpack.c.b16 %v770, %v769
    %v788 = vpack.c.b16 %v772, %v771
    %v789 = vpack.c.b16 %v774, %v773
    %v790 = vpack.c.b16 %v776, %v775
    %v791 = vpack.c.b16 %v778, %v777
    %v792 = vpack.c.b16 %v780, %v779
    %805 = vst [vmem:[#allocation3] sm:$0xff] %v781
    %806 = vst [vmem:[#allocation3 + $0x8] sm:$0xff] %v782
    %807 = vst [vmem:[#allocation3 + $0x10] sm:$0xff] %v783
    %808 = vst [vmem:[#allocation3 + $0x18] sm:$0xff] %v784
    %809 = vst [vmem:[#allocation3 + $0x20] sm:$0xff] %v785
    %810 = vst [vmem:[#allocation3 + $0x28] sm:$0xff] %v786
    %811 = vst [vmem:[#allocation3 + $0x30] sm:$0xff] %v787
    %812 = vst [vmem:[#allocation3 + $0x38] sm:$0xff] %v788
    %813 = vst [vmem:[#allocation3 + $0x40] sm:$0xff] %v789
    %814 = vst [vmem:[#allocation3 + $0x48] sm:$0xff] %v790
    %815 = vst [vmem:[#allocation3 + $0x50] sm:$0xff] %v791
    %816 = vst [vmem:[#allocation3 + $0x58] sm:$0xff] %v792
  $region37: #{vit_feature_extractor.12} parent=0 // pred_fallthru
    _
  %v817 = vld [vmem:[#allocation3] sm:$0xff]
  %v818 = vld [vmem:[#allocation3 + $0x8] sm:$0xff]
  %v819 = vld [vmem:[#allocation3 + $0x10] sm:$0xff]
  %v820 = vld [vmem:[#allocation3 + $0x18] sm:$0xff]
  %v821 = vld [vmem:[#allocation3 + $0x20] sm:$0xff]
  %v822 = vld [vmem:[#allocation3 + $0x28] sm:$0xff]
  %v823 = vld [vmem:[#allocation3 + $0x30] sm:$0xff]
  %v824 = vld [vmem:[#allocation3 + $0x38] sm:$0xff]
  %v825 = vld [vmem:[#allocation3 + $0x40] sm:$0xff]
  %v826 = vld [vmem:[#allocation3 + $0x48] sm:$0xff]
  %v827 = vld [vmem:[#allocation3 + $0x50] sm:$0xff]
  %v828 = vld [vmem:[#allocation3 + $0x58] sm:$0xff]
  %v829 = vld [vmem:[#allocation2] sm:$0xff]
  %v830 = vld [vmem:[%s1] sm:$0xf]
  %v831 = vld [vmem:[%s1 + $0x4] sm:$0xf]
  %v832 = vld [vmem:[%s1 + $0x8] sm:$0xf]
  %v833 = vld [vmem:[%s1 + $0xc] sm:$0xf]
  %v834 = vld [vmem:[%s1 + $0x10] sm:$0xf]
  %v835 = vld [vmem:[%s1 + $0x14] sm:$0xf]
  %v836 = vld [vmem:[%s1 + $0x18] sm:$0xf]
  %v837 = vld [vmem:[%s1 + $0x1c] sm:$0xf]
  %v838 = vld [vmem:[%s1 + $0x20] sm:$0xf]
  %v839 = vld [vmem:[%s1 + $0x24] sm:$0xf]
  %v840 = vld [vmem:[%s1 + $0x28] sm:$0xf]
  %v841 = vld [vmem:[%s1 + $0x2c] sm:$0xf]
  %v842 = vld [vmem:[%s1 + $0x30] sm:$0xf]
  %v843 = vld [vmem:[%s1 + $0x34] sm:$0xf]
  %v844 = vld [vmem:[%s1 + $0x38] sm:$0xf]
  %v845 = vld [vmem:[%s1 + $0x3c] sm:$0xf]
  %v846 = vld [vmem:[%s1 + $0x40] sm:$0xf]
  %v847 = vld [vmem:[%s1 + $0x44] sm:$0xf]
  %v848 = vld [vmem:[%s1 + $0x48] sm:$0xf]
  %v849 = vld [vmem:[%s1 + $0x4c] sm:$0xf]
  %v850 = vld [vmem:[%s1 + $0x50] sm:$0xf]
  %v851 = vld [vmem:[%s1 + $0x54] sm:$0xf]
  %v852 = vld [vmem:[%s1 + $0x58] sm:$0xf]
  %v853 = vld [vmem:[%s1 + $0x5c] sm:$0xf]
  %v854 = vld [vmem:[%s1 + $0x60] sm:$0xf]
  %v855 = vld [vmem:[%s1 + $0x64] sm:$0xf]
  %v856 = vld [vmem:[%s1 + $0x68] sm:$0xf]
  %v857 = vld [vmem:[%s1 + $0x6c] sm:$0xf]
  %v858 = vld [vmem:[%s1 + $0x70] sm:$0xf]
  %v859 = vld [vmem:[%s1 + $0x74] sm:$0xf]
  %v860 = vld [vmem:[%s1 + $0x78] sm:$0xf]
  %v861 = vld [vmem:[%s1 + $0x7c] sm:$0xf]
  %v862 = vld [vmem:[%s1 + $0x80] sm:$0xf]
  %v863 = vld [vmem:[%s1 + $0x84] sm:$0xf]
  %v864 = vld [vmem:[%s1 + $0x88] sm:$0xf]
  %v865 = vld [vmem:[%s1 + $0x8c] sm:$0xf]
  %v866 = vld [vmem:[%s1 + $0x90] sm:$0xf]
  %v867 = vld [vmem:[%s1 + $0x94] sm:$0xf]
  %v868 = vld [vmem:[%s1 + $0x98] sm:$0xf]
  %v869 = vld [vmem:[%s1 + $0x9c] sm:$0xf]
  %v870 = vld [vmem:[%s1 + $0xa0] sm:$0xf]
  %v871 = vld [vmem:[%s1 + $0xa4] sm:$0xf]
  %v872 = vld [vmem:[%s1 + $0xa8] sm:$0xf]
  %v873 = vld [vmem:[%s1 + $0xac] sm:$0xf]
  %v874 = vld [vmem:[%s1 + $0xb0] sm:$0xf]
  %v875 = vld [vmem:[%s1 + $0xb4] sm:$0xf]
  %v876 = vld [vmem:[%s1 + $0xb8] sm:$0xf]
  %v877 = vld [vmem:[%s1 + $0xbc] sm:$0xf]
  %v878 = vld [vmem:[%s1 + $0xc0] sm:$0xf]
  %v879 = vld [vmem:[%s1 + $0xc4] sm:$0xf]
  %v880 = vld [vmem:[%s1 + $0xc8] sm:$0xf]
  %v881 = vld [vmem:[%s1 + $0xcc] sm:$0xf]
  %v882 = vld [vmem:[%s1 + $0xd0] sm:$0xf]
  %v883 = vld [vmem:[%s1 + $0xd4] sm:$0xf]
  %v884 = vld [vmem:[%s1 + $0xd8] sm:$0xf]
  %v885 = vld [vmem:[%s1 + $0xdc] sm:$0xf]
  %v886 = vld [vmem:[%s1 + $0xe0] sm:$0xf]
  %v887 = vld [vmem:[%s1 + $0xe4] sm:$0xf]
  %v888 = vld [vmem:[%s1 + $0xe8] sm:$0xf]
  %v889 = vld [vmem:[%s1 + $0xec] sm:$0xf]
  %v890 = vld [vmem:[%s1 + $0xf0] sm:$0xf]
  %v891 = vld [vmem:[%s1 + $0xf4] sm:$0xf]
  %v892 = vld [vmem:[%s1 + $0xf8] sm:$0xf]
  %v893 = vld [vmem:[%s1 + $0xfc] sm:$0xf]
  %v894 = vld [vmem:[%s1 + $0x100] sm:$0xf]
  %v895 = vld [vmem:[%s1 + $0x104] sm:$0xf]
  %v896 = vld [vmem:[%s1 + $0x108] sm:$0xf]
  %v897 = vld [vmem:[%s1 + $0x10c] sm:$0xf]
  %v898 = vld [vmem:[%s1 + $0x110] sm:$0xf]
  %v899 = vld [vmem:[%s1 + $0x114] sm:$0xf]
  %v900 = vld [vmem:[%s1 + $0x118] sm:$0xf]
  %v901 = vld [vmem:[%s1 + $0x11c] sm:$0xf]
  %v902 = vld [vmem:[%s1 + $0x120] sm:$0xf]
  %v903 = vld [vmem:[%s1 + $0x124] sm:$0xf]
  %v904 = vld [vmem:[%s1 + $0x128] sm:$0xf]
  %v905 = vld [vmem:[%s1 + $0x12c] sm:$0xf]
  %v906 = vld [vmem:[%s1 + $0x130] sm:$0xf]
  %v907 = vld [vmem:[%s1 + $0x134] sm:$0xf]
  %v908 = vld [vmem:[%s1 + $0x138] sm:$0xf]
  %v909 = vld [vmem:[%s1 + $0x13c] sm:$0xf]
  %v910 = vld [vmem:[%s1 + $0x140] sm:$0xf]
  %v911 = vld [vmem:[%s1 + $0x144] sm:$0xf]
  %v912 = vld [vmem:[%s1 + $0x148] sm:$0xf]
  %v913 = vld [vmem:[%s1 + $0x14c] sm:$0xf]
  %v914 = vld [vmem:[%s1 + $0x150] sm:$0xf]
  %v915 = vld [vmem:[%s1 + $0x154] sm:$0xf]
  %v916 = vld [vmem:[%s1 + $0x158] sm:$0xf]
  %v917 = vld [vmem:[%s1 + $0x15c] sm:$0xf]
  %v918 = vld [vmem:[%s1 + $0x160] sm:$0xf]
  %v919 = vld [vmem:[%s1 + $0x164] sm:$0xf]
  %v920 = vld [vmem:[%s1 + $0x168] sm:$0xf]
  %v921 = vld [vmem:[%s1 + $0x16c] sm:$0xf]
  %v922 = vld [vmem:[%s1 + $0x170] sm:$0xf]
  %v923 = vld [vmem:[%s1 + $0x174] sm:$0xf]
  %v924 = vld [vmem:[%s1 + $0x178] sm:$0xf]
  %v925 = vld [vmem:[%s1 + $0x17c] sm:$0xf]
  %v926 = vld [vmem:[%s1 + $0x180] sm:$0xf]
  %v927 = vld [vmem:[%s1 + $0x184] sm:$0xf]
  %v928 = vld [vmem:[%s1 + $0x188] sm:$0xf]
  %v929 = vld [vmem:[%s1 + $0x18c] sm:$0xf]
  %v930 = vld [vmem:[%s1 + $0x190] sm:$0xf]
  %v931 = vld [vmem:[%s1 + $0x194] sm:$0xf]
  %v932 = vld [vmem:[%s1 + $0x198] sm:$0xf]
  %v933 = vld [vmem:[%s1 + $0x19c] sm:$0xf]
  %v934 = vld [vmem:[%s1 + $0x1a0] sm:$0xf]
  %v935 = vld [vmem:[%s1 + $0x1a4] sm:$0xf]
  %v936 = vld [vmem:[%s1 + $0x1a8] sm:$0xf]
  %v937 = vld [vmem:[%s1 + $0x1ac] sm:$0xf]
  %v938 = vld [vmem:[%s1 + $0x1b0] sm:$0xf]
  %v939 = vld [vmem:[%s1 + $0x1b4] sm:$0xf]
  %v940 = vld [vmem:[%s1 + $0x1b8] sm:$0xf]
  %v941 = vld [vmem:[%s1 + $0x1bc] sm:$0xf]
  %v942 = vld [vmem:[%s1 + $0x1c0] sm:$0xf]
  %v943 = vld [vmem:[%s1 + $0x1c4] sm:$0xf]
  %v944 = vld [vmem:[%s1 + $0x1c8] sm:$0xf]
  %v945 = vld [vmem:[%s1 + $0x1cc] sm:$0xf]
  %v946 = vld [vmem:[%s1 + $0x1d0] sm:$0xf]
  %v947 = vld [vmem:[%s1 + $0x1d4] sm:$0xf]
  %v948 = vld [vmem:[%s1 + $0x1d8] sm:$0xf]
  %v949 = vld [vmem:[%s1 + $0x1dc] sm:$0xf]
  %v950 = vld [vmem:[%s1 + $0x1e0] sm:$0xf]
  %v951 = vld [vmem:[%s1 + $0x1e4] sm:$0xf]
  %v952 = vld [vmem:[%s1 + $0x1e8] sm:$0xf]
  %v953 = vld [vmem:[%s1 + $0x1ec] sm:$0xf]
  %v954 = vld [vmem:[%s1 + $0x1f0] sm:$0xf]
  %v955 = vld [vmem:[%s1 + $0x1f4] sm:$0xf]
  %v956 = vld [vmem:[%s1 + $0x1f8] sm:$0xf]
  %v957 = vld [vmem:[%s1 + $0x1fc] sm:$0xf]
  %v958 = vld [vmem:[%s1 + $0x200] sm:$0xf]
  %v959 = vld [vmem:[%s1 + $0x204] sm:$0xf]
  %v960 = vld [vmem:[%s1 + $0x208] sm:$0xf]
  %v961 = vld [vmem:[%s1 + $0x20c] sm:$0xf]
  %v962 = vld [vmem:[%s1 + $0x210] sm:$0xf]
  %v963 = vld [vmem:[%s1 + $0x214] sm:$0xf]
  %v964 = vld [vmem:[%s1 + $0x218] sm:$0xf]
  %v965 = vld [vmem:[%s1 + $0x21c] sm:$0xf]
  %v966 = vld [vmem:[%s1 + $0x220] sm:$0xf]
  %v967 = vld [vmem:[%s1 + $0x224] sm:$0xf]
  %v968 = vld [vmem:[%s1 + $0x228] sm:$0xf]
  %v969 = vld [vmem:[%s1 + $0x22c] sm:$0xf]
  %v970 = vld [vmem:[%s1 + $0x230] sm:$0xf]
  %v971 = vld [vmem:[%s1 + $0x234] sm:$0xf]
  %v972 = vld [vmem:[%s1 + $0x238] sm:$0xf]
  %v973 = vld [vmem:[%s1 + $0x23c] sm:$0xf]
  %v974 = vld [vmem:[%s1 + $0x240] sm:$0xf]
  %v975 = vld [vmem:[%s1 + $0x244] sm:$0xf]
  %v976 = vld [vmem:[%s1 + $0x248] sm:$0xf]
  %v977 = vld [vmem:[%s1 + $0x24c] sm:$0xf]
  %v978 = vld [vmem:[%s1 + $0x250] sm:$0xf]
  %v979 = vld [vmem:[%s1 + $0x254] sm:$0xf]
  %v980 = vld [vmem:[%s1 + $0x258] sm:$0xf]
  %v981 = vld [vmem:[%s1 + $0x25c] sm:$0xf]
  %v982 = vld [vmem:[%s1 + $0x260] sm:$0xf]
  %v983 = vld [vmem:[%s1 + $0x264] sm:$0xf]
  %v984 = vld [vmem:[%s1 + $0x268] sm:$0xf]
  %v985 = vld [vmem:[%s1 + $0x26c] sm:$0xf]
  %v986 = vld [vmem:[%s1 + $0x270] sm:$0xf]
  %v987 = vld [vmem:[%s1 + $0x274] sm:$0xf]
  %v988 = vld [vmem:[%s1 + $0x278] sm:$0xf]
  %v989 = vld [vmem:[%s1 + $0x27c] sm:$0xf]
  %v990 = vld [vmem:[%s1 + $0x280] sm:$0xf]
  %v991 = vld [vmem:[%s1 + $0x284] sm:$0xf]
  %v992 = vld [vmem:[%s1 + $0x288] sm:$0xf]
  %v993 = vld [vmem:[%s1 + $0x28c] sm:$0xf]
  %v994 = vld [vmem:[%s1 + $0x290] sm:$0xf]
  %v995 = vld [vmem:[%s1 + $0x294] sm:$0xf]
  %v996 = vld [vmem:[%s1 + $0x298] sm:$0xf]
  %v997 = vld [vmem:[%s1 + $0x29c] sm:$0xf]
  %v998 = vld [vmem:[%s1 + $0x2a0] sm:$0xf]
  %v999 = vld [vmem:[%s1 + $0x2a4] sm:$0xf]
  %v1000 = vld [vmem:[%s1 + $0x2a8] sm:$0xf]
  %v1001 = vld [vmem:[%s1 + $0x2ac] sm:$0xf]
  %v1002 = vld [vmem:[%s1 + $0x2b0] sm:$0xf]
  %v1003 = vld [vmem:[%s1 + $0x2b4] sm:$0xf]
  %v1004 = vld [vmem:[%s1 + $0x2b8] sm:$0xf]
  %v1005 = vld [vmem:[%s1 + $0x2bc] sm:$0xf]
  %v1006 = vld [vmem:[%s1 + $0x2c0] sm:$0xf]
  %v1007 = vld [vmem:[%s1 + $0x2c4] sm:$0xf]
  %v1008 = vld [vmem:[%s1 + $0x2c8] sm:$0xf]
  %v1009 = vld [vmem:[%s1 + $0x2cc] sm:$0xf]
  %v1010 = vld [vmem:[%s1 + $0x2d0] sm:$0xf]
  %v1011 = vld [vmem:[%s1 + $0x2d4] sm:$0xf]
  %v1012 = vld [vmem:[%s1 + $0x2d8] sm:$0xf]
  %v1013 = vld [vmem:[%s1 + $0x2dc] sm:$0xf]
  %v1014 = vld [vmem:[%s1 + $0x2e0] sm:$0xf]
  %v1015 = vld [vmem:[%s1 + $0x2e4] sm:$0xf]
  %v1016 = vld [vmem:[%s1 + $0x2e8] sm:$0xf]
  %v1017 = vld [vmem:[%s1 + $0x2ec] sm:$0xf]
  %v1018 = vld [vmem:[%s1 + $0x2f0] sm:$0xf]
  %v1019 = vld [vmem:[%s1 + $0x2f4] sm:$0xf]
  %v1020 = vld [vmem:[%s1 + $0x2f8] sm:$0xf]
  %v1021 = vld [vmem:[%s1 + $0x2fc] sm:$0xf]
  %v1022 = vld [vmem:[%s1 + $0x300] sm:$0xf]
  %v1023 = vld [vmem:[%s1 + $0x304] sm:$0xf]
  %v1024 = vld [vmem:[%s1 + $0x308] sm:$0xf]
  %v1025 = vld [vmem:[%s1 + $0x30c] sm:$0xf]
  %v1026 = vld [vmem:[%s1 + $0x310] sm:$0xf]
  %v1027 = vld [vmem:[%s1 + $0x314] sm:$0xf]
  %v1028 = vld [vmem:[%s1 + $0x318] sm:$0xf]
  %v1029 = vld [vmem:[%s1 + $0x31c] sm:$0xf]
  %v1030 = vld [vmem:[%s1 + $0x320] sm:$0xf]
  %v1031 = vld [vmem:[%s1 + $0x324] sm:$0xf]
  %v1032 = vld [vmem:[%s1 + $0x328] sm:$0xf]
  %v1033 = vld [vmem:[%s1 + $0x32c] sm:$0xf]
  %v1034 = vld [vmem:[%s1 + $0x330] sm:$0xf]
  %v1035 = vld [vmem:[%s1 + $0x334] sm:$0xf]
  %v1036 = vld [vmem:[%s1 + $0x338] sm:$0xf]
  %v1037 = vld [vmem:[%s1 + $0x33c] sm:$0xf]
  %v1038 = vld [vmem:[%s1 + $0x340] sm:$0xf]
  %v1039 = vld [vmem:[%s1 + $0x344] sm:$0xf]
  %v1040 = vld [vmem:[%s1 + $0x348] sm:$0xf]
  %v1041 = vld [vmem:[%s1 + $0x34c] sm:$0xf]
  %v1042 = vld [vmem:[%s1 + $0x350] sm:$0xf]
  %v1043 = vld [vmem:[%s1 + $0x354] sm:$0xf]
  %v1044 = vld [vmem:[%s1 + $0x358] sm:$0xf]
  %v1045 = vld [vmem:[%s1 + $0x35c] sm:$0xf]
  %v1046 = vld [vmem:[%s1 + $0x360] sm:$0xf]
  %v1047 = vld [vmem:[%s1 + $0x364] sm:$0xf]
  %v1048 = vld [vmem:[%s1 + $0x368] sm:$0xf]
  %v1049 = vld [vmem:[%s1 + $0x36c] sm:$0xf]
  %v1050 = vld [vmem:[%s1 + $0x370] sm:$0xf]
  %v1051 = vld [vmem:[%s1 + $0x374] sm:$0xf]
  %v1052 = vld [vmem:[%s1 + $0x378] sm:$0xf]
  %v1053 = vld [vmem:[%s1 + $0x37c] sm:$0xf]
  %v1054 = vld [vmem:[%s1 + $0x380] sm:$0xf]
  %v1055 = vld [vmem:[%s1 + $0x384] sm:$0xf]
  %v1056 = vld [vmem:[%s1 + $0x388] sm:$0xf]
  %v1057 = vld [vmem:[%s1 + $0x38c] sm:$0xf]
  %v1058 = vld [vmem:[%s1 + $0x390] sm:$0xf]
  %v1059 = vld [vmem:[%s1 + $0x394] sm:$0xf]
  %v1060 = vld [vmem:[%s1 + $0x398] sm:$0xf]
  %v1061 = vld [vmem:[%s1 + $0x39c] sm:$0xf]
  %v1062 = vld [vmem:[%s1 + $0x3a0] sm:$0xf]
  %v1063 = vld [vmem:[%s1 + $0x3a4] sm:$0xf]
  %v1064 = vld [vmem:[%s1 + $0x3a8] sm:$0xf]
  %v1065 = vld [vmem:[%s1 + $0x3ac] sm:$0xf]
  %v1066 = vld [vmem:[%s1 + $0x3b0] sm:$0xf]
  %v1067 = vld [vmem:[%s1 + $0x3b4] sm:$0xf]
  %v1068 = vld [vmem:[%s1 + $0x3b8] sm:$0xf]
  %v1069 = vld [vmem:[%s1 + $0x3bc] sm:$0xf]
  %v1070 = vld [vmem:[%s1 + $0x3c0] sm:$0xf]
  %v1071 = vld [vmem:[%s1 + $0x3c4] sm:$0xf]
  %v1072 = vld [vmem:[%s1 + $0x3c8] sm:$0xf]
  %v1073 = vld [vmem:[%s1 + $0x3cc] sm:$0xf]
  %v1074 = vld [vmem:[%s1 + $0x3d0] sm:$0xf]
  %v1075 = vld [vmem:[%s1 + $0x3d4] sm:$0xf]
  %v1076 = vld [vmem:[%s1 + $0x3d8] sm:$0xf]
  %v1077 = vld [vmem:[%s1 + $0x3dc] sm:$0xf]
  %v1078 = vld [vmem:[%s1 + $0x3e0] sm:$0xf]
  %v1079 = vld [vmem:[%s1 + $0x3e4] sm:$0xf]
  %v1080 = vld [vmem:[%s1 + $0x3e8] sm:$0xf]
  %v1081 = vld [vmem:[%s1 + $0x3ec] sm:$0xf]
  %v1082 = vld [vmem:[%s1 + $0x3f0] sm:$0xf]
  %v1083 = vld [vmem:[%s1 + $0x3f4] sm:$0xf]
  %v1084 = vld [vmem:[%s1 + $0x3f8] sm:$0xf]
  %v1085 = vld [vmem:[%s1 + $0x3fc] sm:$0xf]
  %v1086 = vld [vmem:[%s1 + $0x400] sm:$0xf]
  %v1087 = vld [vmem:[%s1 + $0x404] sm:$0xf]
  %v1088 = vld [vmem:[%s1 + $0x408] sm:$0xf]
  %v1089 = vld [vmem:[%s1 + $0x40c] sm:$0xf]
  %v1090 = vld [vmem:[%s1 + $0x410] sm:$0xf]
  %v1091 = vld [vmem:[%s1 + $0x414] sm:$0xf]
  %v1092 = vld [vmem:[%s1 + $0x418] sm:$0xf]
  %v1093 = vld [vmem:[%s1 + $0x41c] sm:$0xf]
  %v1094 = vld [vmem:[%s1 + $0x420] sm:$0xf]
  %v1095 = vld [vmem:[%s1 + $0x424] sm:$0xf]
  %v1096 = vld [vmem:[%s1 + $0x428] sm:$0xf]
  %v1097 = vld [vmem:[%s1 + $0x42c] sm:$0xf]
  %v1098 = vld [vmem:[%s1 + $0x430] sm:$0xf]
  %v1099 = vld [vmem:[%s1 + $0x434] sm:$0xf]
  %v1100 = vld [vmem:[%s1 + $0x438] sm:$0xf]
  %v1101 = vld [vmem:[%s1 + $0x43c] sm:$0xf]
  %v1102 = vld [vmem:[%s1 + $0x440] sm:$0xf]
  %v1103 = vld [vmem:[%s1 + $0x444] sm:$0xf]
  %v1104 = vld [vmem:[%s1 + $0x448] sm:$0xf]
  %v1105 = vld [vmem:[%s1 + $0x44c] sm:$0xf]
  %v1106 = vld [vmem:[%s1 + $0x450] sm:$0xf]
  %v1107 = vld [vmem:[%s1 + $0x454] sm:$0xf]
  %v1108 = vld [vmem:[%s1 + $0x458] sm:$0xf]
  %v1109 = vld [vmem:[%s1 + $0x45c] sm:$0xf]
  %v1110 = vld [vmem:[%s1 + $0x460] sm:$0xf]
  %v1111 = vld [vmem:[%s1 + $0x464] sm:$0xf]
  %v1112 = vld [vmem:[%s1 + $0x468] sm:$0xf]
  %v1113 = vld [vmem:[%s1 + $0x46c] sm:$0xf]
  %v1114 = vld [vmem:[%s1 + $0x470] sm:$0xf]
  %v1115 = vld [vmem:[%s1 + $0x474] sm:$0xf]
  %v1116 = vld [vmem:[%s1 + $0x478] sm:$0xf]
  %v1117 = vld [vmem:[%s1 + $0x47c] sm:$0xf]
  %v1118 = vld [vmem:[%s1 + $0x480] sm:$0xf]
  %v1119 = vld [vmem:[%s1 + $0x484] sm:$0xf]
  %v1120 = vld [vmem:[%s1 + $0x488] sm:$0xf]
  %v1121 = vld [vmem:[%s1 + $0x48c] sm:$0xf]
  %v1122 = vld [vmem:[%s1 + $0x490] sm:$0xf]
  %v1123 = vld [vmem:[%s1 + $0x494] sm:$0xf]
  %v1124 = vld [vmem:[%s1 + $0x498] sm:$0xf]
  %v1125 = vld [vmem:[%s1 + $0x49c] sm:$0xf]
  %v1126 = vld [vmem:[%s1 + $0x4a0] sm:$0xf]
  %v1127 = vld [vmem:[%s1 + $0x4a4] sm:$0xf]
  %v1128 = vld [vmem:[%s1 + $0x4a8] sm:$0xf]
  %v1129 = vld [vmem:[%s1 + $0x4ac] sm:$0xf]
  %v1130 = vld [vmem:[%s1 + $0x4b0] sm:$0xf]
  %v1131 = vld [vmem:[%s1 + $0x4b4] sm:$0xf]
  %v1132 = vld [vmem:[%s1 + $0x4b8] sm:$0xf]
  %v1133 = vld [vmem:[%s1 + $0x4bc] sm:$0xf]
  %v1134 = vld [vmem:[%s1 + $0x4c0] sm:$0xf]
  %v1135 = vld [vmem:[%s1 + $0x4c4] sm:$0xf]
  %v1136 = vld [vmem:[%s1 + $0x4c8] sm:$0xf]
  %v1137 = vld [vmem:[%s1 + $0x4cc] sm:$0xf]
  %v1138 = vld [vmem:[%s1 + $0x4d0] sm:$0xf]
  %v1139 = vld [vmem:[%s1 + $0x4d4] sm:$0xf]
  %v1140 = vld [vmem:[%s1 + $0x4d8] sm:$0xf]
  %v1141 = vld [vmem:[%s1 + $0x4dc] sm:$0xf]
  %v1142 = vld [vmem:[%s1 + $0x4e0] sm:$0xf]
  %v1143 = vld [vmem:[%s1 + $0x4e4] sm:$0xf]
  %v1144 = vld [vmem:[%s1 + $0x4e8] sm:$0xf]
  %v1145 = vld [vmem:[%s1 + $0x4ec] sm:$0xf]
  %v1146 = vld [vmem:[%s1 + $0x4f0] sm:$0xf]
  %v1147 = vld [vmem:[%s1 + $0x4f4] sm:$0xf]
  %v1148 = vld [vmem:[%s1 + $0x4f8] sm:$0xf]
  %v1149 = vld [vmem:[%s1 + $0x4fc] sm:$0xf]
  %v1150 = vld [vmem:[%s1 + $0x500] sm:$0xf]
  %v1151 = vld [vmem:[%s1 + $0x504] sm:$0xf]
  %v1152 = vld [vmem:[%s1 + $0x508] sm:$0xf]
  %v1153 = vld [vmem:[%s1 + $0x50c] sm:$0xf]
  %v1154 = vld [vmem:[%s1 + $0x510] sm:$0xf]
  %v1155 = vld [vmem:[%s1 + $0x514] sm:$0xf]
  %v1156 = vld [vmem:[%s1 + $0x518] sm:$0xf]
  %v1157 = vld [vmem:[%s1 + $0x51c] sm:$0xf]
  %v1158 = vld [vmem:[%s1 + $0x520] sm:$0xf]
  %v1159 = vld [vmem:[%s1 + $0x524] sm:$0xf]
  %v1160 = vld [vmem:[%s1 + $0x528] sm:$0xf]
  %v1161 = vld [vmem:[%s1 + $0x52c] sm:$0xf]
  %v1162 = vld [vmem:[%s1 + $0x530] sm:$0xf]
  %v1163 = vld [vmem:[%s1 + $0x534] sm:$0xf]
  %v1164 = vld [vmem:[%s1 + $0x538] sm:$0xf]
  %v1165 = vld [vmem:[%s1 + $0x53c] sm:$0xf]
  %v1166 = vld [vmem:[%s1 + $0x540] sm:$0xf]
  %v1167 = vld [vmem:[%s1 + $0x544] sm:$0xf]
  %v1168 = vld [vmem:[%s1 + $0x548] sm:$0xf]
  %v1169 = vld [vmem:[%s1 + $0x54c] sm:$0xf]
  %v1170 = vld [vmem:[%s1 + $0x550] sm:$0xf]
  %v1171 = vld [vmem:[%s1 + $0x554] sm:$0xf]
  %v1172 = vld [vmem:[%s1 + $0x558] sm:$0xf]
  %v1173 = vld [vmem:[%s1 + $0x55c] sm:$0xf]
  %v1174 = vld [vmem:[%s1 + $0x560] sm:$0xf]
  %v1175 = vld [vmem:[%s1 + $0x564] sm:$0xf]
  %v1176 = vld [vmem:[%s1 + $0x568] sm:$0xf]
  %v1177 = vld [vmem:[%s1 + $0x56c] sm:$0xf]
  %v1178 = vld [vmem:[%s1 + $0x570] sm:$0xf]
  %v1179 = vld [vmem:[%s1 + $0x574] sm:$0xf]
  %v1180 = vld [vmem:[%s1 + $0x578] sm:$0xf]
  %v1181 = vld [vmem:[%s1 + $0x57c] sm:$0xf]
  %v1182 = vld [vmem:[%s1 + $0x580] sm:$0xf]
  %v1183 = vld [vmem:[%s1 + $0x584] sm:$0xf]
  %v1184 = vld [vmem:[%s1 + $0x588] sm:$0xf]
  %v1185 = vld [vmem:[%s1 + $0x58c] sm:$0xf]
  %v1186 = vld [vmem:[%s1 + $0x590] sm:$0xf]
  %v1187 = vld [vmem:[%s1 + $0x594] sm:$0xf]
  %v1188 = vld [vmem:[%s1 + $0x598] sm:$0xf]
  %v1189 = vld [vmem:[%s1 + $0x59c] sm:$0xf]
  %v1190 = vld [vmem:[%s1 + $0x5a0] sm:$0xf]
  %v1191 = vld [vmem:[%s1 + $0x5a4] sm:$0xf]
  %v1192 = vld [vmem:[%s1 + $0x5a8] sm:$0xf]
  %v1193 = vld [vmem:[%s1 + $0x5ac] sm:$0xf]
  %v1194 = vld [vmem:[%s1 + $0x5b0] sm:$0xf]
  %v1195 = vld [vmem:[%s1 + $0x5b4] sm:$0xf]
  %v1196 = vld [vmem:[%s1 + $0x5b8] sm:$0xf]
  %v1197 = vld [vmem:[%s1 + $0x5bc] sm:$0xf]
  %v1198 = vld [vmem:[%s1 + $0x5c0] sm:$0xf]
  %v1199 = vld [vmem:[%s1 + $0x5c4] sm:$0xf]
  %v1200 = vld [vmem:[%s1 + $0x5c8] sm:$0xf]
  %v1201 = vld [vmem:[%s1 + $0x5cc] sm:$0xf]
  %v1202 = vld [vmem:[%s1 + $0x5d0] sm:$0xf]
  %v1203 = vld [vmem:[%s1 + $0x5d4] sm:$0xf]
  %v1204 = vld [vmem:[%s1 + $0x5d8] sm:$0xf]
  %v1205 = vld [vmem:[%s1 + $0x5dc] sm:$0xf]
  %v1206 = vld [vmem:[%s1 + $0x5e0] sm:$0xf]
  %v1207 = vld [vmem:[%s1 + $0x5e4] sm:$0xf]
  %v1208 = vld [vmem:[%s1 + $0x5e8] sm:$0xf]
  %v1209 = vld [vmem:[%s1 + $0x5ec] sm:$0xf]
  %v1210 = vld [vmem:[%s1 + $0x5f0] sm:$0xf]
  %v1211 = vld [vmem:[%s1 + $0x5f4] sm:$0xf]
  %v1212 = vld [vmem:[%s1 + $0x5f8] sm:$0xf]
  %v1213 = vld [vmem:[%s1 + $0x5fc] sm:$0xf]
  %v1226 = vunpack.c.l.b16 %v817
  %v1227 = vunpack.c.h.b16 %v817
  %v1228 = vunpack.c.l.b16 %v818
  %v1229 = vunpack.c.h.b16 %v818
  %v1230 = vunpack.c.l.b16 %v819
  %v1231 = vunpack.c.h.b16 %v819
  %v1232 = vunpack.c.l.b16 %v820
  %v1233 = vunpack.c.h.b16 %v820
  %v1234 = vunpack.c.l.b16 %v821
  %v1235 = vunpack.c.h.b16 %v821
  %v1236 = vunpack.c.l.b16 %v822
  %v1237 = vunpack.c.h.b16 %v822
  %v1238 = vunpack.c.l.b16 %v823
  %v1239 = vunpack.c.h.b16 %v823
  %v1240 = vunpack.c.l.b16 %v824
  %v1241 = vunpack.c.h.b16 %v824
  %v1242 = vunpack.c.l.b16 %v825
  %v1243 = vunpack.c.h.b16 %v825
  %v1244 = vunpack.c.l.b16 %v826
  %v1245 = vunpack.c.h.b16 %v826
  %v1246 = vunpack.c.l.b16 %v827
  %v1247 = vunpack.c.h.b16 %v827
  %v1248 = vunpack.c.l.b16 %v828
  %v1249 = vunpack.c.h.b16 %v828
  %v1250 = vpack.c.b16 %v1226, %v1226
  %v1251 = vpack.c.b16 %v1227, %v1227
  %v1252 = vpack.c.b16 %v1228, %v1228
  %v1253 = vpack.c.b16 %v1229, %v1229
  %v1254 = vpack.c.b16 %v1230, %v1230
  %v1255 = vpack.c.b16 %v1231, %v1231
  %v1256 = vpack.c.b16 %v1232, %v1232
  %v1257 = vpack.c.b16 %v1233, %v1233
  %v1258 = vpack.c.b16 %v1234, %v1234
  %v1259 = vpack.c.b16 %v1235, %v1235
  %v1260 = vpack.c.b16 %v1236, %v1236
  %v1261 = vpack.c.b16 %v1237, %v1237
  %v1262 = vpack.c.b16 %v1238, %v1238
  %v1263 = vpack.c.b16 %v1239, %v1239
  %v1264 = vpack.c.b16 %v1240, %v1240
  %v1265 = vpack.c.b16 %v1241, %v1241
  %v1266 = vpack.c.b16 %v1242, %v1242
  %v1267 = vpack.c.b16 %v1243, %v1243
  %v1268 = vpack.c.b16 %v1244, %v1244
  %v1269 = vpack.c.b16 %v1245, %v1245
  %v1270 = vpack.c.b16 %v1246, %v1246
  %v1271 = vpack.c.b16 %v1247, %v1247
  %v1272 = vpack.c.b16 %v1248, %v1248
  %v1273 = vpack.c.b16 %v1249, %v1249
  %v1682 = vunpack.c.l.b16 %v830
  %v1683 = vunpack.c.l.b16 %v831
  %v1684 = vunpack.c.l.b16 %v832
  %v1685 = vunpack.c.l.b16 %v833
  %v1686 = vunpack.c.l.b16 %v834
  %v1687 = vunpack.c.l.b16 %v835
  %v1688 = vunpack.c.l.b16 %v836
  %v1689 = vunpack.c.l.b16 %v837
  %v1690 = vunpack.c.l.b16 %v838
  %v1691 = vunpack.c.l.b16 %v839
  %v1692 = vunpack.c.l.b16 %v840
  %v1693 = vunpack.c.l.b16 %v841
  %v1694 = vunpack.c.l.b16 %v842
  %v1695 = vunpack.c.l.b16 %v843
  %v1696 = vunpack.c.l.b16 %v844
  %v1697 = vunpack.c.l.b16 %v845
  %v1698 = vunpack.c.l.b16 %v846
  %v1699 = vunpack.c.l.b16 %v847
  %v1700 = vunpack.c.l.b16 %v848
  %v1701 = vunpack.c.l.b16 %v849
  %v1702 = vunpack.c.l.b16 %v850
  %v1703 = vunpack.c.l.b16 %v851
  %v1704 = vunpack.c.l.b16 %v852
  %v1705 = vunpack.c.l.b16 %v853
  %v1706 = vunpack.c.l.b16 %v854
  %v1707 = vunpack.c.l.b16 %v855
  %v1708 = vunpack.c.l.b16 %v856
  %v1709 = vunpack.c.l.b16 %v857
  %v1710 = vunpack.c.l.b16 %v858
  %v1711 = vunpack.c.l.b16 %v859
  %v1712 = vunpack.c.l.b16 %v860
  %v1713 = vunpack.c.l.b16 %v861
  %v1714 = vunpack.c.l.b16 %v862
  %v1715 = vunpack.c.l.b16 %v863
  %v1716 = vunpack.c.l.b16 %v864
  %v1717 = vunpack.c.l.b16 %v865
  %v1718 = vunpack.c.l.b16 %v866
  %v1719 = vunpack.c.l.b16 %v867
  %v1720 = vunpack.c.l.b16 %v868
  %v1721 = vunpack.c.l.b16 %v869
  %v1722 = vunpack.c.l.b16 %v870
  %v1723 = vunpack.c.l.b16 %v871
  %v1724 = vunpack.c.l.b16 %v872
  %v1725 = vunpack.c.l.b16 %v873
  %v1726 = vunpack.c.l.b16 %v874
  %v1727 = vunpack.c.l.b16 %v875
  %v1728 = vunpack.c.l.b16 %v876
  %v1729 = vunpack.c.l.b16 %v877
  %v1730 = vunpack.c.l.b16 %v878
  %v1731 = vunpack.c.l.b16 %v879
  %v1732 = vunpack.c.l.b16 %v880
  %v1733 = vunpack.c.l.b16 %v881
  %v1734 = vunpack.c.l.b16 %v882
  %v1735 = vunpack.c.l.b16 %v883
  %v1736 = vunpack.c.l.b16 %v884
  %v1737 = vunpack.c.l.b16 %v885
  %v1738 = vunpack.c.l.b16 %v886
  %v1739 = vunpack.c.l.b16 %v887
  %v1740 = vunpack.c.l.b16 %v888
  %v1741 = vunpack.c.l.b16 %v889
  %v1742 = vunpack.c.l.b16 %v890
  %v1743 = vunpack.c.l.b16 %v891
  %v1744 = vunpack.c.l.b16 %v892
  %v1745 = vunpack.c.l.b16 %v893
  %v1746 = vunpack.c.l.b16 %v894
  %v1747 = vunpack.c.l.b16 %v895
  %v1748 = vunpack.c.l.b16 %v896
  %v1749 = vunpack.c.l.b16 %v897
  %v1750 = vunpack.c.l.b16 %v898
  %v1751 = vunpack.c.l.b16 %v899
  %v1752 = vunpack.c.l.b16 %v900
  %v1753 = vunpack.c.l.b16 %v901
  %v1754 = vunpack.c.l.b16 %v902
  %v1755 = vunpack.c.l.b16 %v903
  %v1756 = vunpack.c.l.b16 %v904
  %v1757 = vunpack.c.l.b16 %v905
  %v1758 = vunpack.c.l.b16 %v906
  %v1759 = vunpack.c.l.b16 %v907
  %v1760 = vunpack.c.l.b16 %v908
  %v1761 = vunpack.c.l.b16 %v909
  %v1762 = vunpack.c.l.b16 %v910
  %v1763 = vunpack.c.l.b16 %v911
  %v1764 = vunpack.c.l.b16 %v912
  %v1765 = vunpack.c.l.b16 %v913
  %v1766 = vunpack.c.l.b16 %v914
  %v1767 = vunpack.c.l.b16 %v915
  %v1768 = vunpack.c.l.b16 %v916
  %v1769 = vunpack.c.l.b16 %v917
  %v1770 = vunpack.c.l.b16 %v918
  %v1771 = vunpack.c.l.b16 %v919
  %v1772 = vunpack.c.l.b16 %v920
  %v1773 = vunpack.c.l.b16 %v921
  %v1774 = vunpack.c.l.b16 %v922
  %v1775 = vunpack.c.l.b16 %v923
  %v1776 = vunpack.c.l.b16 %v924
  %v1777 = vunpack.c.l.b16 %v925
  %v1778 = vunpack.c.l.b16 %v926
  %v1779 = vunpack.c.l.b16 %v927
  %v1780 = vunpack.c.l.b16 %v928
  %v1781 = vunpack.c.l.b16 %v929
  %v1782 = vunpack.c.l.b16 %v930
  %v1783 = vunpack.c.l.b16 %v931
  %v1784 = vunpack.c.l.b16 %v932
  %v1785 = vunpack.c.l.b16 %v933
  %v1786 = vunpack.c.l.b16 %v934
  %v1787 = vunpack.c.l.b16 %v935
  %v1788 = vunpack.c.l.b16 %v936
  %v1789 = vunpack.c.l.b16 %v937
  %v1790 = vunpack.c.l.b16 %v938
  %v1791 = vunpack.c.l.b16 %v939
  %v1792 = vunpack.c.l.b16 %v940
  %v1793 = vunpack.c.l.b16 %v941
  %v1794 = vunpack.c.l.b16 %v942
  %v1795 = vunpack.c.l.b16 %v943
  %v1796 = vunpack.c.l.b16 %v944
  %v1797 = vunpack.c.l.b16 %v945
  %v1798 = vunpack.c.l.b16 %v946
  %v1799 = vunpack.c.l.b16 %v947
  %v1800 = vunpack.c.l.b16 %v948
  %v1801 = vunpack.c.l.b16 %v949
  %v1802 = vunpack.c.l.b16 %v950
  %v1803 = vunpack.c.l.b16 %v951
  %v1804 = vunpack.c.l.b16 %v952
  %v1805 = vunpack.c.l.b16 %v953
  %v1806 = vunpack.c.l.b16 %v954
  %v1807 = vunpack.c.l.b16 %v955
  %v1808 = vunpack.c.l.b16 %v956
  %v1809 = vunpack.c.l.b16 %v957
  %v1810 = vunpack.c.l.b16 %v958
  %v1811 = vunpack.c.l.b16 %v959
  %v1812 = vunpack.c.l.b16 %v960
  %v1813 = vunpack.c.l.b16 %v961
  %v1814 = vunpack.c.l.b16 %v962
  %v1815 = vunpack.c.l.b16 %v963
  %v1816 = vunpack.c.l.b16 %v964
  %v1817 = vunpack.c.l.b16 %v965
  %v1818 = vunpack.c.l.b16 %v966
  %v1819 = vunpack.c.l.b16 %v967
  %v1820 = vunpack.c.l.b16 %v968
  %v1821 = vunpack.c.l.b16 %v969
  %v1822 = vunpack.c.l.b16 %v970
  %v1823 = vunpack.c.l.b16 %v971
  %v1824 = vunpack.c.l.b16 %v972
  %v1825 = vunpack.c.l.b16 %v973
  %v1826 = vunpack.c.l.b16 %v974
  %v1827 = vunpack.c.l.b16 %v975
  %v1828 = vunpack.c.l.b16 %v976
  %v1829 = vunpack.c.l.b16 %v977
  %v1830 = vunpack.c.l.b16 %v978
  %v1831 = vunpack.c.l.b16 %v979
  %v1832 = vunpack.c.l.b16 %v980
  %v1833 = vunpack.c.l.b16 %v981
  %v1834 = vunpack.c.l.b16 %v982
  %v1835 = vunpack.c.l.b16 %v983
  %v1836 = vunpack.c.l.b16 %v984
  %v1837 = vunpack.c.l.b16 %v985
  %v1838 = vunpack.c.l.b16 %v986
  %v1839 = vunpack.c.l.b16 %v987
  %v1840 = vunpack.c.l.b16 %v988
  %v1841 = vunpack.c.l.b16 %v989
  %v1842 = vunpack.c.l.b16 %v990
  %v1843 = vunpack.c.l.b16 %v991
  %v1844 = vunpack.c.l.b16 %v992
  %v1845 = vunpack.c.l.b16 %v993
  %v1846 = vunpack.c.l.b16 %v994
  %v1847 = vunpack.c.l.b16 %v995
  %v1848 = vunpack.c.l.b16 %v996
  %v1849 = vunpack.c.l.b16 %v997
  %v1850 = vunpack.c.l.b16 %v998
  %v1851 = vunpack.c.l.b16 %v999
  %v1852 = vunpack.c.l.b16 %v1000
  %v1853 = vunpack.c.l.b16 %v1001
  %v1854 = vunpack.c.l.b16 %v1002
  %v1855 = vunpack.c.l.b16 %v1003
  %v1856 = vunpack.c.l.b16 %v1004
  %v1857 = vunpack.c.l.b16 %v1005
  %v1858 = vunpack.c.l.b16 %v1006
  %v1859 = vunpack.c.l.b16 %v1007
  %v1860 = vunpack.c.l.b16 %v1008
  %v1861 = vunpack.c.l.b16 %v1009
  %v1862 = vunpack.c.l.b16 %v1010
  %v1863 = vunpack.c.l.b16 %v1011
  %v1864 = vunpack.c.l.b16 %v1012
  %v1865 = vunpack.c.l.b16 %v1013
  %v1866 = vunpack.c.l.b16 %v1014
  %v1867 = vunpack.c.l.b16 %v1015
  %v1868 = vunpack.c.l.b16 %v1016
  %v1869 = vunpack.c.l.b16 %v1017
  %v1870 = vunpack.c.l.b16 %v1018
  %v1871 = vunpack.c.l.b16 %v1019
  %v1872 = vunpack.c.l.b16 %v1020
  %v1873 = vunpack.c.l.b16 %v1021
  %v1874 = vunpack.c.l.b16 %v1022
  %v1875 = vunpack.c.l.b16 %v1023
  %v1876 = vunpack.c.l.b16 %v1024
  %v1877 = vunpack.c.l.b16 %v1025
  %v1878 = vunpack.c.l.b16 %v1026
  %v1879 = vunpack.c.l.b16 %v1027
  %v1880 = vunpack.c.l.b16 %v1028
  %v1881 = vunpack.c.l.b16 %v1029
  %v1882 = vunpack.c.l.b16 %v1030
  %v1883 = vunpack.c.l.b16 %v1031
  %v1884 = vunpack.c.l.b16 %v1032
  %v1885 = vunpack.c.l.b16 %v1033
  %v1886 = vunpack.c.l.b16 %v1034
  %v1887 = vunpack.c.l.b16 %v1035
  %v1888 = vunpack.c.l.b16 %v1036
  %v1889 = vunpack.c.l.b16 %v1037
  %v1890 = vunpack.c.l.b16 %v1038
  %v1891 = vunpack.c.l.b16 %v1039
  %v1892 = vunpack.c.l.b16 %v1040
  %v1893 = vunpack.c.l.b16 %v1041
  %v1894 = vunpack.c.l.b16 %v1042
  %v1895 = vunpack.c.l.b16 %v1043
  %v1896 = vunpack.c.l.b16 %v1044
  %v1897 = vunpack.c.l.b16 %v1045
  %v1898 = vunpack.c.l.b16 %v1046
  %v1899 = vunpack.c.l.b16 %v1047
  %v1900 = vunpack.c.l.b16 %v1048
  %v1901 = vunpack.c.l.b16 %v1049
  %v1902 = vunpack.c.l.b16 %v1050
  %v1903 = vunpack.c.l.b16 %v1051
  %v1904 = vunpack.c.l.b16 %v1052
  %v1905 = vunpack.c.l.b16 %v1053
  %v1906 = vunpack.c.l.b16 %v1054
  %v1907 = vunpack.c.l.b16 %v1055
  %v1908 = vunpack.c.l.b16 %v1056
  %v1909 = vunpack.c.l.b16 %v1057
  %v1910 = vunpack.c.l.b16 %v1058
  %v1911 = vunpack.c.l.b16 %v1059
  %v1912 = vunpack.c.l.b16 %v1060
  %v1913 = vunpack.c.l.b16 %v1061
  %v1914 = vunpack.c.l.b16 %v1062
  %v1915 = vunpack.c.l.b16 %v1063
  %v1916 = vunpack.c.l.b16 %v1064
  %v1917 = vunpack.c.l.b16 %v1065
  %v1918 = vunpack.c.l.b16 %v1066
  %v1919 = vunpack.c.l.b16 %v1067
  %v1920 = vunpack.c.l.b16 %v1068
  %v1921 = vunpack.c.l.b16 %v1069
  %v1922 = vunpack.c.l.b16 %v1070
  %v1923 = vunpack.c.l.b16 %v1071
  %v1924 = vunpack.c.l.b16 %v1072
  %v1925 = vunpack.c.l.b16 %v1073
  %v1926 = vunpack.c.l.b16 %v1074
  %v1927 = vunpack.c.l.b16 %v1075
  %v1928 = vunpack.c.l.b16 %v1076
  %v1929 = vunpack.c.l.b16 %v1077
  %v1930 = vunpack.c.l.b16 %v1078
  %v1931 = vunpack.c.l.b16 %v1079
  %v1932 = vunpack.c.l.b16 %v1080
  %v1933 = vunpack.c.l.b16 %v1081
  %v1934 = vunpack.c.l.b16 %v1082
  %v1935 = vunpack.c.l.b16 %v1083
  %v1936 = vunpack.c.l.b16 %v1084
  %v1937 = vunpack.c.l.b16 %v1085
  %v1938 = vunpack.c.l.b16 %v1086
  %v1939 = vunpack.c.l.b16 %v1087
  %v1940 = vunpack.c.l.b16 %v1088
  %v1941 = vunpack.c.l.b16 %v1089
  %v1942 = vunpack.c.l.b16 %v1090
  %v1943 = vunpack.c.l.b16 %v1091
  %v1944 = vunpack.c.l.b16 %v1092
  %v1945 = vunpack.c.l.b16 %v1093
  %v1946 = vunpack.c.l.b16 %v1094
  %v1947 = vunpack.c.l.b16 %v1095
  %v1948 = vunpack.c.l.b16 %v1096
  %v1949 = vunpack.c.l.b16 %v1097
  %v1950 = vunpack.c.l.b16 %v1098
  %v1951 = vunpack.c.l.b16 %v1099
  %v1952 = vunpack.c.l.b16 %v1100
  %v1953 = vunpack.c.l.b16 %v1101
  %v1954 = vunpack.c.l.b16 %v1102
  %v1955 = vunpack.c.l.b16 %v1103
  %v1956 = vunpack.c.l.b16 %v1104
  %v1957 = vunpack.c.l.b16 %v1105
  %v1958 = vunpack.c.l.b16 %v1106
  %v1959 = vunpack.c.l.b16 %v1107
  %v1960 = vunpack.c.l.b16 %v1108
  %v1961 = vunpack.c.l.b16 %v1109
  %v1962 = vunpack.c.l.b16 %v1110
  %v1963 = vunpack.c.l.b16 %v1111
  %v1964 = vunpack.c.l.b16 %v1112
  %v1965 = vunpack.c.l.b16 %v1113
  %v1966 = vunpack.c.l.b16 %v1114
  %v1967 = vunpack.c.l.b16 %v1115
  %v1968 = vunpack.c.l.b16 %v1116
  %v1969 = vunpack.c.l.b16 %v1117
  %v1970 = vunpack.c.l.b16 %v1118
  %v1971 = vunpack.c.l.b16 %v1119
  %v1972 = vunpack.c.l.b16 %v1120
  %v1973 = vunpack.c.l.b16 %v1121
  %v1974 = vunpack.c.l.b16 %v1122
  %v1975 = vunpack.c.l.b16 %v1123
  %v1976 = vunpack.c.l.b16 %v1124
  %v1977 = vunpack.c.l.b16 %v1125
  %v1978 = vunpack.c.l.b16 %v1126
  %v1979 = vunpack.c.l.b16 %v1127
  %v1980 = vunpack.c.l.b16 %v1128
  %v1981 = vunpack.c.l.b16 %v1129
  %v1982 = vunpack.c.l.b16 %v1130
  %v1983 = vunpack.c.l.b16 %v1131
  %v1984 = vunpack.c.l.b16 %v1132
  %v1985 = vunpack.c.l.b16 %v1133
  %v1986 = vunpack.c.l.b16 %v1134
  %v1987 = vunpack.c.l.b16 %v1135
  %v1988 = vunpack.c.l.b16 %v1136
  %v1989 = vunpack.c.l.b16 %v1137
  %v1990 = vunpack.c.l.b16 %v1138
  %v1991 = vunpack.c.l.b16 %v1139
  %v1992 = vunpack.c.l.b16 %v1140
  %v1993 = vunpack.c.l.b16 %v1141
  %v1994 = vunpack.c.l.b16 %v1142
  %v1995 = vunpack.c.l.b16 %v1143
  %v1996 = vunpack.c.l.b16 %v1144
  %v1997 = vunpack.c.l.b16 %v1145
  %v1998 = vunpack.c.l.b16 %v1146
  %v1999 = vunpack.c.l.b16 %v1147
  %v2000 = vunpack.c.l.b16 %v1148
  %v2001 = vunpack.c.l.b16 %v1149
  %v2002 = vunpack.c.l.b16 %v1150
  %v2003 = vunpack.c.l.b16 %v1151
  %v2004 = vunpack.c.l.b16 %v1152
  %v2005 = vunpack.c.l.b16 %v1153
  %v2006 = vunpack.c.l.b16 %v1154
  %v2007 = vunpack.c.l.b16 %v1155
  %v2008 = vunpack.c.l.b16 %v1156
  %v2009 = vunpack.c.l.b16 %v1157
  %v2010 = vunpack.c.l.b16 %v1158
  %v2011 = vunpack.c.l.b16 %v1159
  %v2012 = vunpack.c.l.b16 %v1160
  %v2013 = vunpack.c.l.b16 %v1161
  %v2014 = vunpack.c.l.b16 %v1162
  %v2015 = vunpack.c.l.b16 %v1163
  %v2016 = vunpack.c.l.b16 %v1164
  %v2017 = vunpack.c.l.b16 %v1165
  %v2018 = vunpack.c.l.b16 %v1166
  %v2019 = vunpack.c.l.b16 %v1167
  %v2020 = vunpack.c.l.b16 %v1168
  %v2021 = vunpack.c.l.b16 %v1169
  %v2022 = vunpack.c.l.b16 %v1170
  %v2023 = vunpack.c.l.b16 %v1171
  %v2024 = vunpack.c.l.b16 %v1172
  %v2025 = vunpack.c.l.b16 %v1173
  %v2026 = vunpack.c.l.b16 %v1174
  %v2027 = vunpack.c.l.b16 %v1175
  %v2028 = vunpack.c.l.b16 %v1176
  %v2029 = vunpack.c.l.b16 %v1177
  %v2030 = vunpack.c.l.b16 %v1178
  %v2031 = vunpack.c.l.b16 %v1179
  %v2032 = vunpack.c.l.b16 %v1180
  %v2033 = vunpack.c.l.b16 %v1181
  %v2034 = vunpack.c.l.b16 %v1182
  %v2035 = vunpack.c.l.b16 %v1183
  %v2036 = vunpack.c.l.b16 %v1184
  %v2037 = vunpack.c.l.b16 %v1185
  %v2038 = vunpack.c.l.b16 %v1186
  %v2039 = vunpack.c.l.b16 %v1187
  %v2040 = vunpack.c.l.b16 %v1188
  %v2041 = vunpack.c.l.b16 %v1189
  %v2042 = vunpack.c.l.b16 %v1190
  %v2043 = vunpack.c.l.b16 %v1191
  %v2044 = vunpack.c.l.b16 %v1192
  %v2045 = vunpack.c.l.b16 %v1193
  %v2046 = vunpack.c.l.b16 %v1194
  %v2047 = vunpack.c.l.b16 %v1195
  %v2048 = vunpack.c.l.b16 %v1196
  %v2049 = vunpack.c.l.b16 %v1197
  %v2050 = vunpack.c.l.b16 %v1198
  %v2051 = vunpack.c.l.b16 %v1199
  %v2052 = vunpack.c.l.b16 %v1200
  %v2053 = vunpack.c.l.b16 %v1201
  %v2054 = vunpack.c.l.b16 %v1202
  %v2055 = vunpack.c.l.b16 %v1203
  %v2056 = vunpack.c.l.b16 %v1204
  %v2057 = vunpack.c.l.b16 %v1205
  %v2058 = vunpack.c.l.b16 %v1206
  %v2059 = vunpack.c.l.b16 %v1207
  %v2060 = vunpack.c.l.b16 %v1208
  %v2061 = vunpack.c.l.b16 %v1209
  %v2062 = vunpack.c.l.b16 %v1210
  %v2063 = vunpack.c.l.b16 %v1211
  %v2064 = vunpack.c.l.b16 %v1212
  %v2065 = vunpack.c.l.b16 %v1213
  %v2066 = vpack.c.b16 %v1683, %v1682
  %v2067 = vpack.c.b16 %v1685, %v1684
  %v2068 = vpack.c.b16 %v1687, %v1686
  %v2069 = vpack.c.b16 %v1689, %v1688
  %v2070 = vpack.c.b16 %v1691, %v1690
  %v2071 = vpack.c.b16 %v1693, %v1692
  %v2072 = vpack.c.b16 %v1695, %v1694
  %v2073 = vpack.c.b16 %v1697, %v1696
  %v2074 = vpack.c.b16 %v1699, %v1698
  %v2075 = vpack.c.b16 %v1701, %v1700
  %v2076 = vpack.c.b16 %v1703, %v1702
  %v2077 = vpack.c.b16 %v1705, %v1704
  %v2078 = vpack.c.b16 %v1707, %v1706
  %v2079 = vpack.c.b16 %v1709, %v1708
  %v2080 = vpack.c.b16 %v1711, %v1710
  %v2081 = vpack.c.b16 %v1713, %v1712
  %v2082 = vpack.c.b16 %v1715, %v1714
  %v2083 = vpack.c.b16 %v1717, %v1716
  %v2084 = vpack.c.b16 %v1719, %v1718
  %v2085 = vpack.c.b16 %v1721, %v1720
  %v2086 = vpack.c.b16 %v1723, %v1722
  %v2087 = vpack.c.b16 %v1725, %v1724
  %v2088 = vpack.c.b16 %v1727, %v1726
  %v2089 = vpack.c.b16 %v1729, %v1728
  %v2090 = vpack.c.b16 %v1731, %v1730
  %v2091 = vpack.c.b16 %v1733, %v1732
  %v2092 = vpack.c.b16 %v1735, %v1734
  %v2093 = vpack.c.b16 %v1737, %v1736
  %v2094 = vpack.c.b16 %v1739, %v1738
  %v2095 = vpack.c.b16 %v1741, %v1740
  %v2096 = vpack.c.b16 %v1743, %v1742
  %v2097 = vpack.c.b16 %v1745, %v1744
  %v2098 = vpack.c.b16 %v1747, %v1746
  %v2099 = vpack.c.b16 %v1749, %v1748
  %v2100 = vpack.c.b16 %v1751, %v1750
  %v2101 = vpack.c.b16 %v1753, %v1752
  %v2102 = vpack.c.b16 %v1755, %v1754
  %v2103 = vpack.c.b16 %v1757, %v1756
  %v2104 = vpack.c.b16 %v1759, %v1758
  %v2105 = vpack.c.b16 %v1761, %v1760
  %v2106 = vpack.c.b16 %v1763, %v1762
  %v2107 = vpack.c.b16 %v1765, %v1764
  %v2108 = vpack.c.b16 %v1767, %v1766
  %v2109 = vpack.c.b16 %v1769, %v1768
  %v2110 = vpack.c.b16 %v1771, %v1770
  %v2111 = vpack.c.b16 %v1773, %v1772
  %v2112 = vpack.c.b16 %v1775, %v1774
  %v2113 = vpack.c.b16 %v1777, %v1776
  %v2114 = vpack.c.b16 %v1779, %v1778
  %v2115 = vpack.c.b16 %v1781, %v1780
  %v2116 = vpack.c.b16 %v1783, %v1782
  %v2117 = vpack.c.b16 %v1785, %v1784
  %v2118 = vpack.c.b16 %v1787, %v1786
  %v2119 = vpack.c.b16 %v1789, %v1788
  %v2120 = vpack.c.b16 %v1791, %v1790
  %v2121 = vpack.c.b16 %v1793, %v1792
  %v2122 = vpack.c.b16 %v1795, %v1794
  %v2123 = vpack.c.b16 %v1797, %v1796
  %v2124 = vpack.c.b16 %v1799, %v1798
  %v2125 = vpack.c.b16 %v1801, %v1800
  %v2126 = vpack.c.b16 %v1803, %v1802
  %v2127 = vpack.c.b16 %v1805, %v1804
  %v2128 = vpack.c.b16 %v1807, %v1806
  %v2129 = vpack.c.b16 %v1809, %v1808
  %v2130 = vpack.c.b16 %v1811, %v1810
  %v2131 = vpack.c.b16 %v1813, %v1812
  %v2132 = vpack.c.b16 %v1815, %v1814
  %v2133 = vpack.c.b16 %v1817, %v1816
  %v2134 = vpack.c.b16 %v1819, %v1818
  %v2135 = vpack.c.b16 %v1821, %v1820
  %v2136 = vpack.c.b16 %v1823, %v1822
  %v2137 = vpack.c.b16 %v1825, %v1824
  %v2138 = vpack.c.b16 %v1827, %v1826
  %v2139 = vpack.c.b16 %v1829, %v1828
  %v2140 = vpack.c.b16 %v1831, %v1830
  %v2141 = vpack.c.b16 %v1833, %v1832
  %v2142 = vpack.c.b16 %v1835, %v1834
  %v2143 = vpack.c.b16 %v1837, %v1836
  %v2144 = vpack.c.b16 %v1839, %v1838
  %v2145 = vpack.c.b16 %v1841, %v1840
  %v2146 = vpack.c.b16 %v1843, %v1842
  %v2147 = vpack.c.b16 %v1845, %v1844
  %v2148 = vpack.c.b16 %v1847, %v1846
  %v2149 = vpack.c.b16 %v1849, %v1848
  %v2150 = vpack.c.b16 %v1851, %v1850
  %v2151 = vpack.c.b16 %v1853, %v1852
  %v2152 = vpack.c.b16 %v1855, %v1854
  %v2153 = vpack.c.b16 %v1857, %v1856
  %v2154 = vpack.c.b16 %v1859, %v1858
  %v2155 = vpack.c.b16 %v1861, %v1860
  %v2156 = vpack.c.b16 %v1863, %v1862
  %v2157 = vpack.c.b16 %v1865, %v1864
  %v2158 = vpack.c.b16 %v1867, %v1866
  %v2159 = vpack.c.b16 %v1869, %v1868
  %v2160 = vpack.c.b16 %v1871, %v1870
  %v2161 = vpack.c.b16 %v1873, %v1872
  %v2162 = vpack.c.b16 %v1875, %v1874
  %v2163 = vpack.c.b16 %v1877, %v1876
  %v2164 = vpack.c.b16 %v1879, %v1878
  %v2165 = vpack.c.b16 %v1881, %v1880
  %v2166 = vpack.c.b16 %v1883, %v1882
  %v2167 = vpack.c.b16 %v1885, %v1884
  %v2168 = vpack.c.b16 %v1887, %v1886
  %v2169 = vpack.c.b16 %v1889, %v1888
  %v2170 = vpack.c.b16 %v1891, %v1890
  %v2171 = vpack.c.b16 %v1893, %v1892
  %v2172 = vpack.c.b16 %v1895, %v1894
  %v2173 = vpack.c.b16 %v1897, %v1896
  %v2174 = vpack.c.b16 %v1899, %v1898
  %v2175 = vpack.c.b16 %v1901, %v1900
  %v2176 = vpack.c.b16 %v1903, %v1902
  %v2177 = vpack.c.b16 %v1905, %v1904
  %v2178 = vpack.c.b16 %v1907, %v1906
  %v2179 = vpack.c.b16 %v1909, %v1908
  %v2180 = vpack.c.b16 %v1911, %v1910
  %v2181 = vpack.c.b16 %v1913, %v1912
  %v2182 = vpack.c.b16 %v1915, %v1914
  %v2183 = vpack.c.b16 %v1917, %v1916
  %v2184 = vpack.c.b16 %v1919, %v1918
  %v2185 = vpack.c.b16 %v1921, %v1920
  %v2186 = vpack.c.b16 %v1923, %v1922
  %v2187 = vpack.c.b16 %v1925, %v1924
  %v2188 = vpack.c.b16 %v1927, %v1926
  %v2189 = vpack.c.b16 %v1929, %v1928
  %v2190 = vpack.c.b16 %v1931, %v1930
  %v2191 = vpack.c.b16 %v1933, %v1932
  %v2192 = vpack.c.b16 %v1935, %v1934
  %v2193 = vpack.c.b16 %v1937, %v1936
  %v2194 = vpack.c.b16 %v1939, %v1938
  %v2195 = vpack.c.b16 %v1941, %v1940
  %v2196 = vpack.c.b16 %v1943, %v1942
  %v2197 = vpack.c.b16 %v1945, %v1944
  %v2198 = vpack.c.b16 %v1947, %v1946
  %v2199 = vpack.c.b16 %v1949, %v1948
  %v2200 = vpack.c.b16 %v1951, %v1950
  %v2201 = vpack.c.b16 %v1953, %v1952
  %v2202 = vpack.c.b16 %v1955, %v1954
  %v2203 = vpack.c.b16 %v1957, %v1956
  %v2204 = vpack.c.b16 %v1959, %v1958
  %v2205 = vpack.c.b16 %v1961, %v1960
  %v2206 = vpack.c.b16 %v1963, %v1962
  %v2207 = vpack.c.b16 %v1965, %v1964
  %v2208 = vpack.c.b16 %v1967, %v1966
  %v2209 = vpack.c.b16 %v1969, %v1968
  %v2210 = vpack.c.b16 %v1971, %v1970
  %v2211 = vpack.c.b16 %v1973, %v1972
  %v2212 = vpack.c.b16 %v1975, %v1974
  %v2213 = vpack.c.b16 %v1977, %v1976
  %v2214 = vpack.c.b16 %v1979, %v1978
  %v2215 = vpack.c.b16 %v1981, %v1980
  %v2216 = vpack.c.b16 %v1983, %v1982
  %v2217 = vpack.c.b16 %v1985, %v1984
  %v2218 = vpack.c.b16 %v1987, %v1986
  %v2219 = vpack.c.b16 %v1989, %v1988
  %v2220 = vpack.c.b16 %v1991, %v1990
  %v2221 = vpack.c.b16 %v1993, %v1992
  %v2222 = vpack.c.b16 %v1995, %v1994
  %v2223 = vpack.c.b16 %v1997, %v1996
  %v2224 = vpack.c.b16 %v1999, %v1998
  %v2225 = vpack.c.b16 %v2001, %v2000
  %v2226 = vpack.c.b16 %v2003, %v2002
  %v2227 = vpack.c.b16 %v2005, %v2004
  %v2228 = vpack.c.b16 %v2007, %v2006
  %v2229 = vpack.c.b16 %v2009, %v2008
  %v2230 = vpack.c.b16 %v2011, %v2010
  %v2231 = vpack.c.b16 %v2013, %v2012
  %v2232 = vpack.c.b16 %v2015, %v2014
  %v2233 = vpack.c.b16 %v2017, %v2016
  %v2234 = vpack.c.b16 %v2019, %v2018
  %v2235 = vpack.c.b16 %v2021, %v2020
  %v2236 = vpack.c.b16 %v2023, %v2022
  %v2237 = vpack.c.b16 %v2025, %v2024
  %v2238 = vpack.c.b16 %v2027, %v2026
  %v2239 = vpack.c.b16 %v2029, %v2028
  %v2240 = vpack.c.b16 %v2031, %v2030
  %v2241 = vpack.c.b16 %v2033, %v2032
  %v2242 = vpack.c.b16 %v2035, %v2034
  %v2243 = vpack.c.b16 %v2037, %v2036
  %v2244 = vpack.c.b16 %v2039, %v2038
  %v2245 = vpack.c.b16 %v2041, %v2040
  %v2246 = vpack.c.b16 %v2043, %v2042
  %v2247 = vpack.c.b16 %v2045, %v2044
  %v2248 = vpack.c.b16 %v2047, %v2046
  %v2249 = vpack.c.b16 %v2049, %v2048
  %v2250 = vpack.c.b16 %v2051, %v2050
  %v2251 = vpack.c.b16 %v2053, %v2052
  %v2252 = vpack.c.b16 %v2055, %v2054
  %v2253 = vpack.c.b16 %v2057, %v2056
  %v2254 = vpack.c.b16 %v2059, %v2058
  %v2255 = vpack.c.b16 %v2061, %v2060
  %v2256 = vpack.c.b16 %v2063, %v2062
  %v2257 = vpack.c.b16 %v2065, %v2064
  %2450 = vmatprep.subr.bf16.mxu0 0
  %2451 = vmatpush1.bf16.msra.mxu0 %v2066
  %2452 = vmatprep.subr.bf16.mxu0 0
  %2453 = vmatpush1.bf16.msra.mxu0 %v2067
  %2454 = vmatprep.subr.bf16.mxu0 0
  %2455 = vmatpush1.bf16.msra.mxu0 %v2068
  %2456 = vmatprep.subr.bf16.mxu0 0
  %2457 = vmatpush1.bf16.msra.mxu0 %v2069
  %2458 = vmatprep.subr.bf16.mxu0 0
  %2459 = vmatpush1.bf16.msra.mxu0 %v2070
  %2460 = vmatprep.subr.bf16.mxu0 0
  %2461 = vmatpush1.bf16.msra.mxu0 %v2071
  %2462 = vmatprep.subr.bf16.mxu0 0
  %2463 = vmatpush1.bf16.msra.mxu0 %v2072
  %2464 = vmatprep.subr.bf16.mxu0 0
  %2465 = vmatpush1.bf16.msra.mxu0 %v2073
  %2466 = vmatprep.subr.bf16.mxu0 0
  %2467 = vmatpush1.bf16.msra.mxu0 %v2074
  %2468 = vmatprep.subr.bf16.mxu0 0
  %2469 = vmatpush1.bf16.msra.mxu0 %v2075
  %2470 = vmatprep.subr.bf16.mxu0 0
  %2471 = vmatpush1.bf16.msra.mxu0 %v2076
  %2472 = vmatprep.subr.bf16.mxu0 0
  %2473 = vmatpush1.bf16.msra.mxu0 %v2077
  %2474 = vmatprep.subr.bf16.mxu0 0
  %2475 = vmatpush1.bf16.msra.mxu0 %v2078
  %2476 = vmatprep.subr.bf16.mxu0 0
  %2477 = vmatpush1.bf16.msra.mxu0 %v2079
  %2478 = vmatprep.subr.bf16.mxu0 0
  %2479 = vmatpush1.bf16.msra.mxu0 %v2080
  %2480 = vmatprep.subr.bf16.mxu0 0
  %2481 = vmatpush1.bf16.msra.mxu0 %v2081
  %2482 = vmatprep.mubr.bf16.mxu0 %v1251
  %2483 = vmatmul.mubr.bf16.gmra.mrb[0].mxu0 %v1250
  %v2484 = vpop.f32.mrb[0].mxu0
  %v2485 = vadd.f32 0.0, %v2484
  %v2486 = vpop.f32.mrb[0].mxu0
  %v2487 = vpop.f32.mrb[0].mxu0
  %v2488 = vpop.f32.mrb[0].mxu0
  %2489 = vdwg.mxu0
  %2490 = vmatprep.subr.bf16.mxu0 0
  %2491 = vmatpush1.bf16.msra.mxu0 %v2082
  %2492 = vmatprep.subr.bf16.mxu0 0
  %2493 = vmatpush1.bf16.msra.mxu0 %v2083
  %2494 = vmatprep.subr.bf16.mxu0 0
  %2495 = vmatpush1.bf16.msra.mxu0 %v2084
  %2496 = vmatprep.subr.bf16.mxu0 0
  %2497 = vmatpush1.bf16.msra.mxu0 %v2085
  %2498 = vmatprep.subr.bf16.mxu0 0
  %2499 = vmatpush1.bf16.msra.mxu0 %v2086
  %2500 = vmatprep.subr.bf16.mxu0 0
  %2501 = vmatpush1.bf16.msra.mxu0 %v2087
  %2502 = vmatprep.subr.bf16.mxu0 0
  %2503 = vmatpush1.bf16.msra.mxu0 %v2088
  %2504 = vmatprep.subr.bf16.mxu0 0
  %2505 = vmatpush1.bf16.msra.mxu0 %v2089
  %2506 = vmatprep.subr.bf16.mxu0 0
  %2507 = vmatpush1.bf16.msra.mxu0 %v2090
  %2508 = vmatprep.subr.bf16.mxu0 0
  %2509 = vmatpush1.bf16.msra.mxu0 %v2091
  %2510 = vmatprep.subr.bf16.mxu0 0
  %2511 = vmatpush1.bf16.msra.mxu0 %v2092
  %2512 = vmatprep.subr.bf16.mxu0 0
  %2513 = vmatpush1.bf16.msra.mxu0 %v2093
  %2514 = vmatprep.subr.bf16.mxu0 0
  %2515 = vmatpush1.bf16.msra.mxu0 %v2094
  %2516 = vmatprep.subr.bf16.mxu0 0
  %2517 = vmatpush1.bf16.msra.mxu0 %v2095
  %2518 = vmatprep.subr.bf16.mxu0 0
  %2519 = vmatpush1.bf16.msra.mxu0 %v2096
  %2520 = vmatprep.subr.bf16.mxu0 0
  %2521 = vmatpush1.bf16.msra.mxu0 %v2097
  %2522 = vmatprep.mubr.bf16.mxu0 %v1253
  %2523 = vmatmul.mubr.bf16.gmra.mrb[0].mxu0 %v1252
  %v2524 = vpop.f32.mrb[0].mxu0
  %v2525 = vadd.f32 %v2485, %v2524
  %v2526 = vpop.f32.mrb[0].mxu0
  %v2527 = vpop.f32.mrb[0].mxu0
  %v2528 = vpop.f32.mrb[0].mxu0
  %2529 = vdwg.mxu0
  %2530 = vmatprep.subr.bf16.mxu0 0
  %2531 = vmatpush1.bf16.msra.mxu0 %v2098
  %2532 = vmatprep.subr.bf16.mxu0 0
  %2533 = vmatpush1.bf16.msra.mxu0 %v2099
  %2534 = vmatprep.subr.bf16.mxu0 0
  %2535 = vmatpush1.bf16.msra.mxu0 %v2100
  %2536 = vmatprep.subr.bf16.mxu0 0
  %2537 = vmatpush1.bf16.msra.mxu0 %v2101
  %2538 = vmatprep.subr.bf16.mxu0 0
  %2539 = vmatpush1.bf16.msra.mxu0 %v2102
  %2540 = vmatprep.subr.bf16.mxu0 0
  %2541 = vmatpush1.bf16.msra.mxu0 %v2103
  %2542 = vmatprep.subr.bf16.mxu0 0
  %2543 = vmatpush1.bf16.msra.mxu0 %v2104
  %2544 = vmatprep.subr.bf16.mxu0 0
  %2545 = vmatpush1.bf16.msra.mxu0 %v2105
  %2546 = vmatprep.subr.bf16.mxu0 0
  %2547 = vmatpush1.bf16.msra.mxu0 %v2106
  %2548 = vmatprep.subr.bf16.mxu0 0
  %2549 = vmatpush1.bf16.msra.mxu0 %v2107
  %2550 = vmatprep.subr.bf16.mxu0 0
  %2551 = vmatpush1.bf16.msra.mxu0 %v2108
  %2552 = vmatprep.subr.bf16.mxu0 0
  %2553 = vmatpush1.bf16.msra.mxu0 %v2109
  %2554 = vmatprep.subr.bf16.mxu0 0
  %2555 = vmatpush1.bf16.msra.mxu0 %v2110
  %2556 = vmatprep.subr.bf16.mxu0 0
  %2557 = vmatpush1.bf16.msra.mxu0 %v2111
  %2558 = vmatprep.subr.bf16.mxu0 0
  %2559 = vmatpush1.bf16.msra.mxu0 %v2112
  %2560 = vmatprep.subr.bf16.mxu0 0
  %2561 = vmatpush1.bf16.msra.mxu0 %v2113
  %2562 = vmatprep.mubr.bf16.mxu0 %v1255
  %2563 = vmatmul.mubr.bf16.gmra.mrb[0].mxu0 %v1254
  %v2564 = vpop.f32.mrb[0].mxu0
  %v2565 = vadd.f32 %v2525, %v2564
  %v2566 = vpop.f32.mrb[0].mxu0
  %v2567 = vpop.f32.mrb[0].mxu0
  %v2568 = vpop.f32.mrb[0].mxu0
  %2569 = vdwg.mxu0
  %2570 = vmatprep.subr.bf16.mxu0 0
  %2571 = vmatpush1.bf16.msra.mxu0 %v2114
  %2572 = vmatprep.subr.bf16.mxu0 0
  %2573 = vmatpush1.bf16.msra.mxu0 %v2115
  %2574 = vmatprep.subr.bf16.mxu0 0
  %2575 = vmatpush1.bf16.msra.mxu0 %v2116
  %2576 = vmatprep.subr.bf16.mxu0 0
  %2577 = vmatpush1.bf16.msra.mxu0 %v2117
  %2578 = vmatprep.subr.bf16.mxu0 0
  %2579 = vmatpush1.bf16.msra.mxu0 %v2118
  %2580 = vmatprep.subr.bf16.mxu0 0
  %2581 = vmatpush1.bf16.msra.mxu0 %v2119
  %2582 = vmatprep.subr.bf16.mxu0 0
  %2583 = vmatpush1.bf16.msra.mxu0 %v2120
  %2584 = vmatprep.subr.bf16.mxu0 0
  %2585 = vmatpush1.bf16.msra.mxu0 %v2121
  %2586 = vmatprep.subr.bf16.mxu0 0
  %2587 = vmatpush1.bf16.msra.mxu0 %v2122
  %2588 = vmatprep.subr.bf16.mxu0 0
  %2589 = vmatpush1.bf16.msra.mxu0 %v2123
  %2590 = vmatprep.subr.bf16.mxu0 0
  %2591 = vmatpush1.bf16.msra.mxu0 %v2124
  %2592 = vmatprep.subr.bf16.mxu0 0
  %2593 = vmatpush1.bf16.msra.mxu0 %v2125
  %2594 = vmatprep.subr.bf16.mxu0 0
  %2595 = vmatpush1.bf16.msra.mxu0 %v2126
  %2596 = vmatprep.subr.bf16.mxu0 0
  %2597 = vmatpush1.bf16.msra.mxu0 %v2127
  %2598 = vmatprep.subr.bf16.mxu0 0
  %2599 = vmatpush1.bf16.msra.mxu0 %v2128
  %2600 = vmatprep.subr.bf16.mxu0 0
  %2601 = vmatpush1.bf16.msra.mxu0 %v2129
  %2602 = vmatprep.mubr.bf16.mxu0 %v1257
  %2603 = vmatmul.mubr.bf16.gmra.mrb[0].mxu0 %v1256
  %v2604 = vpop.f32.mrb[0].mxu0
  %v2605 = vadd.f32 %v2565, %v2604
  %v2606 = vpop.f32.mrb[0].mxu0
  %v2607 = vpop.f32.mrb[0].mxu0
  %v2608 = vpop.f32.mrb[0].mxu0
  %2609 = vdwg.mxu0
  %2610 = vmatprep.subr.bf16.mxu0 0
  %2611 = vmatpush1.bf16.msra.mxu0 %v2130
  %2612 = vmatprep.subr.bf16.mxu0 0
  %2613 = vmatpush1.bf16.msra.mxu0 %v2131
  %2614 = vmatprep.subr.bf16.mxu0 0
  %2615 = vmatpush1.bf16.msra.mxu0 %v2132
  %2616 = vmatprep.subr.bf16.mxu0 0
  %2617 = vmatpush1.bf16.msra.mxu0 %v2133
  %2618 = vmatprep.subr.bf16.mxu0 0
  %2619 = vmatpush1.bf16.msra.mxu0 %v2134
  %2620 = vmatprep.subr.bf16.mxu0 0
  %2621 = vmatpush1.bf16.msra.mxu0 %v2135
  %2622 = vmatprep.subr.bf16.mxu0 0
  %2623 = vmatpush1.bf16.msra.mxu0 %v2136
  %2624 = vmatprep.subr.bf16.mxu0 0
  %2625 = vmatpush1.bf16.msra.mxu0 %v2137
  %2626 = vmatprep.subr.bf16.mxu0 0
  %2627 = vmatpush1.bf16.msra.mxu0 %v2138
  %2628 = vmatprep.subr.bf16.mxu0 0
  %2629 = vmatpush1.bf16.msra.mxu0 %v2139
  %2630 = vmatprep.subr.bf16.mxu0 0
  %2631 = vmatpush1.bf16.msra.mxu0 %v2140
  %2632 = vmatprep.subr.bf16.mxu0 0
  %2633 = vmatpush1.bf16.msra.mxu0 %v2141
  %2634 = vmatprep.subr.bf16.mxu0 0
  %2635 = vmatpush1.bf16.msra.mxu0 %v2142
  %2636 = vmatprep.subr.bf16.mxu0 0
  %2637 = vmatpush1.bf16.msra.mxu0 %v2143
  %2638 = vmatprep.subr.bf16.mxu0 0
  %2639 = vmatpush1.bf16.msra.mxu0 %v2144
  %2640 = vmatprep.subr.bf16.mxu0 0
  %2641 = vmatpush1.bf16.msra.mxu0 %v2145
  %2642 = vmatprep.mubr.bf16.mxu0 %v1259
  %2643 = vmatmul.mubr.bf16.gmra.mrb[0].mxu0 %v1258
  %v2644 = vpop.f32.mrb[0].mxu0
  %v2645 = vadd.f32 %v2605, %v2644
  %v2646 = vpop.f32.mrb[0].mxu0
  %v2647 = vpop.f32.mrb[0].mxu0
  %v2648 = vpop.f32.mrb[0].mxu0
  %2649 = vdwg.mxu0
  %2650 = vmatprep.subr.bf16.mxu0 0
  %2651 = vmatpush1.bf16.msra.mxu0 %v2146
  %2652 = vmatprep.subr.bf16.mxu0 0
  %2653 = vmatpush1.bf16.msra.mxu0 %v2147
  %2654 = vmatprep.subr.bf16.mxu0 0
  %2655 = vmatpush1.bf16.msra.mxu0 %v2148
  %2656 = vmatprep.subr.bf16.mxu0 0
  %2657 = vmatpush1.bf16.msra.mxu0 %v2149
  %2658 = vmatprep.subr.bf16.mxu0 0
  %2659 = vmatpush1.bf16.msra.mxu0 %v2150
  %2660 = vmatprep.subr.bf16.mxu0 0
  %2661 = vmatpush1.bf16.msra.mxu0 %v2151
  %2662 = vmatprep.subr.bf16.mxu0 0
  %2663 = vmatpush1.bf16.msra.mxu0 %v2152
  %2664 = vmatprep.subr.bf16.mxu0 0
  %2665 = vmatpush1.bf16.msra.mxu0 %v2153
  %2666 = vmatprep.subr.bf16.mxu0 0
  %2667 = vmatpush1.bf16.msra.mxu0 %v2154
  %2668 = vmatprep.subr.bf16.mxu0 0
  %2669 = vmatpush1.bf16.msra.mxu0 %v2155
  %2670 = vmatprep.subr.bf16.mxu0 0
  %2671 = vmatpush1.bf16.msra.mxu0 %v2156
  %2672 = vmatprep.subr.bf16.mxu0 0
  %2673 = vmatpush1.bf16.msra.mxu0 %v2157
  %2674 = vmatprep.subr.bf16.mxu0 0
  %2675 = vmatpush1.bf16.msra.mxu0 %v2158
  %2676 = vmatprep.subr.bf16.mxu0 0
  %2677 = vmatpush1.bf16.msra.mxu0 %v2159
  %2678 = vmatprep.subr.bf16.mxu0 0
  %2679 = vmatpush1.bf16.msra.mxu0 %v2160
  %2680 = vmatprep.subr.bf16.mxu0 0
  %2681 = vmatpush1.bf16.msra.mxu0 %v2161
  %2682 = vmatprep.mubr.bf16.mxu0 %v1261
  %2683 = vmatmul.mubr.bf16.gmra.mrb[0].mxu0 %v1260
  %v2684 = vpop.f32.mrb[0].mxu0
  %v2685 = vadd.f32 %v2645, %v2684
  %v2686 = vpop.f32.mrb[0].mxu0
  %v2687 = vpop.f32.mrb[0].mxu0
  %v2688 = vpop.f32.mrb[0].mxu0
  %2689 = vdwg.mxu0
  %2690 = vmatprep.subr.bf16.mxu0 0
  %2691 = vmatpush1.bf16.msra.mxu0 %v2162
  %2692 = vmatprep.subr.bf16.mxu0 0
  %2693 = vmatpush1.bf16.msra.mxu0 %v2163
  %2694 = vmatprep.subr.bf16.mxu0 0
  %2695 = vmatpush1.bf16.msra.mxu0 %v2164
  %2696 = vmatprep.subr.bf16.mxu0 0
  %2697 = vmatpush1.bf16.msra.mxu0 %v2165
  %2698 = vmatprep.subr.bf16.mxu0 0
  %2699 = vmatpush1.bf16.msra.mxu0 %v2166
  %2700 = vmatprep.subr.bf16.mxu0 0
  %2701 = vmatpush1.bf16.msra.mxu0 %v2167
  %2702 = vmatprep.subr.bf16.mxu0 0
  %2703 = vmatpush1.bf16.msra.mxu0 %v2168
  %2704 = vmatprep.subr.bf16.mxu0 0
  %2705 = vmatpush1.bf16.msra.mxu0 %v2169
  %2706 = vmatprep.subr.bf16.mxu0 0
  %2707 = vmatpush1.bf16.msra.mxu0 %v2170
  %2708 = vmatprep.subr.bf16.mxu0 0
  %2709 = vmatpush1.bf16.msra.mxu0 %v2171
  %2710 = vmatprep.subr.bf16.mxu0 0
  %2711 = vmatpush1.bf16.msra.mxu0 %v2172
  %2712 = vmatprep.subr.bf16.mxu0 0
  %2713 = vmatpush1.bf16.msra.mxu0 %v2173
  %2714 = vmatprep.subr.bf16.mxu0 0
  %2715 = vmatpush1.bf16.msra.mxu0 %v2174
  %2716 = vmatprep.subr.bf16.mxu0 0
  %2717 = vmatpush1.bf16.msra.mxu0 %v2175
  %2718 = vmatprep.subr.bf16.mxu0 0
  %2719 = vmatpush1.bf16.msra.mxu0 %v2176
  %2720 = vmatprep.subr.bf16.mxu0 0
  %2721 = vmatpush1.bf16.msra.mxu0 %v2177
  %2722 = vmatprep.mubr.bf16.mxu0 %v1263
  %2723 = vmatmul.mubr.bf16.gmra.mrb[0].mxu0 %v1262
  %v2724 = vpop.f32.mrb[0].mxu0
  %v2725 = vadd.f32 %v2685, %v2724
  %v2726 = vpop.f32.mrb[0].mxu0
  %v2727 = vpop.f32.mrb[0].mxu0
  %v2728 = vpop.f32.mrb[0].mxu0
  %2729 = vdwg.mxu0
  %2730 = vmatprep.subr.bf16.mxu0 0
  %2731 = vmatpush1.bf16.msra.mxu0 %v2178
  %2732 = vmatprep.subr.bf16.mxu0 0
  %2733 = vmatpush1.bf16.msra.mxu0 %v2179
  %2734 = vmatprep.subr.bf16.mxu0 0
  %2735 = vmatpush1.bf16.msra.mxu0 %v2180
  %2736 = vmatprep.subr.bf16.mxu0 0
  %2737 = vmatpush1.bf16.msra.mxu0 %v2181
  %2738 = vmatprep.subr.bf16.mxu0 0
  %2739 = vmatpush1.bf16.msra.mxu0 %v2182
  %2740 = vmatprep.subr.bf16.mxu0 0
  %2741 = vmatpush1.bf16.msra.mxu0 %v2183
  %2742 = vmatprep.subr.bf16.mxu0 0
  %2743 = vmatpush1.bf16.msra.mxu0 %v2184
  %2744 = vmatprep.subr.bf16.mxu0 0
  %2745 = vmatpush1.bf16.msra.mxu0 %v2185
  %2746 = vmatprep.subr.bf16.mxu0 0
  %2747 = vmatpush1.bf16.msra.mxu0 %v2186
  %2748 = vmatprep.subr.bf16.mxu0 0
  %2749 = vmatpush1.bf16.msra.mxu0 %v2187
  %2750 = vmatprep.subr.bf16.mxu0 0
  %2751 = vmatpush1.bf16.msra.mxu0 %v2188
  %2752 = vmatprep.subr.bf16.mxu0 0
  %2753 = vmatpush1.bf16.msra.mxu0 %v2189
  %2754 = vmatprep.subr.bf16.mxu0 0
  %2755 = vmatpush1.bf16.msra.mxu0 %v2190
  %2756 = vmatprep.subr.bf16.mxu0 0
  %2757 = vmatpush1.bf16.msra.mxu0 %v2191
  %2758 = vmatprep.subr.bf16.mxu0 0
  %2759 = vmatpush1.bf16.msra.mxu0 %v2192
  %2760 = vmatprep.subr.bf16.mxu0 0
  %2761 = vmatpush1.bf16.msra.mxu0 %v2193
  %2762 = vmatprep.mubr.bf16.mxu0 %v1265
  %2763 = vmatmul.mubr.bf16.gmra.mrb[0].mxu0 %v1264
  %v2764 = vpop.f32.mrb[0].mxu0
  %v2765 = vadd.f32 %v2725, %v2764
  %v2766 = vpop.f32.mrb[0].mxu0
  %v2767 = vpop.f32.mrb[0].mxu0
  %v2768 = vpop.f32.mrb[0].mxu0
  %2769 = vdwg.mxu0
  %2770 = vmatprep.subr.bf16.mxu0 0
  %2771 = vmatpush1.bf16.msra.mxu0 %v2194
  %2772 = vmatprep.subr.bf16.mxu0 0
  %2773 = vmatpush1.bf16.msra.mxu0 %v2195
  %2774 = vmatprep.subr.bf16.mxu0 0
  %2775 = vmatpush1.bf16.msra.mxu0 %v2196
  %2776 = vmatprep.subr.bf16.mxu0 0
  %2777 = vmatpush1.bf16.msra.mxu0 %v2197
  %2778 = vmatprep.subr.bf16.mxu0 0
  %2779 = vmatpush1.bf16.msra.mxu0 %v2198
  %2780 = vmatprep.subr.bf16.mxu0 0
  %2781 = vmatpush1.bf16.msra.mxu0 %v2199
  %2782 = vmatprep.subr.bf16.mxu0 0
  %2783 = vmatpush1.bf16.msra.mxu0 %v2200
  %2784 = vmatprep.subr.bf16.mxu0 0
  %2785 = vmatpush1.bf16.msra.mxu0 %v2201
  %2786 = vmatprep.subr.bf16.mxu0 0
  %2787 = vmatpush1.bf16.msra.mxu0 %v2202
  %2788 = vmatprep.subr.bf16.mxu0 0
  %2789 = vmatpush1.bf16.msra.mxu0 %v2203
  %2790 = vmatprep.subr.bf16.mxu0 0
  %2791 = vmatpush1.bf16.msra.mxu0 %v2204
  %2792 = vmatprep.subr.bf16.mxu0 0
  %2793 = vmatpush1.bf16.msra.mxu0 %v2205
  %2794 = vmatprep.subr.bf16.mxu0 0
  %2795 = vmatpush1.bf16.msra.mxu0 %v2206
  %2796 = vmatprep.subr.bf16.mxu0 0
  %2797 = vmatpush1.bf16.msra.mxu0 %v2207
  %2798 = vmatprep.subr.bf16.mxu0 0
  %2799 = vmatpush1.bf16.msra.mxu0 %v2208
  %2800 = vmatprep.subr.bf16.mxu0 0
  %2801 = vmatpush1.bf16.msra.mxu0 %v2209
  %2802 = vmatprep.mubr.bf16.mxu0 %v1267
  %2803 = vmatmul.mubr.bf16.gmra.mrb[0].mxu0 %v1266
  %v2804 = vpop.f32.mrb[0].mxu0
  %v2805 = vadd.f32 %v2765, %v2804
  %v2806 = vpop.f32.mrb[0].mxu0
  %v2807 = vpop.f32.mrb[0].mxu0
  %v2808 = vpop.f32.mrb[0].mxu0
  %2809 = vdwg.mxu0
  %2810 = vmatprep.subr.bf16.mxu0 0
  %2811 = vmatpush1.bf16.msra.mxu0 %v2210
  %2812 = vmatprep.subr.bf16.mxu0 0
  %2813 = vmatpush1.bf16.msra.mxu0 %v2211
  %2814 = vmatprep.subr.bf16.mxu0 0
  %2815 = vmatpush1.bf16.msra.mxu0 %v2212
  %2816 = vmatprep.subr.bf16.mxu0 0
  %2817 = vmatpush1.bf16.msra.mxu0 %v2213
  %2818 = vmatprep.subr.bf16.mxu0 0
  %2819 = vmatpush1.bf16.msra.mxu0 %v2214
  %2820 = vmatprep.subr.bf16.mxu0 0
  %2821 = vmatpush1.bf16.msra.mxu0 %v2215
  %2822 = vmatprep.subr.bf16.mxu0 0
  %2823 = vmatpush1.bf16.msra.mxu0 %v2216
  %2824 = vmatprep.subr.bf16.mxu0 0
  %2825 = vmatpush1.bf16.msra.mxu0 %v2217
  %2826 = vmatprep.subr.bf16.mxu0 0
  %2827 = vmatpush1.bf16.msra.mxu0 %v2218
  %2828 = vmatprep.subr.bf16.mxu0 0
  %2829 = vmatpush1.bf16.msra.mxu0 %v2219
  %2830 = vmatprep.subr.bf16.mxu0 0
  %2831 = vmatpush1.bf16.msra.mxu0 %v2220
  %2832 = vmatprep.subr.bf16.mxu0 0
  %2833 = vmatpush1.bf16.msra.mxu0 %v2221
  %2834 = vmatprep.subr.bf16.mxu0 0
  %2835 = vmatpush1.bf16.msra.mxu0 %v2222
  %2836 = vmatprep.subr.bf16.mxu0 0
  %2837 = vmatpush1.bf16.msra.mxu0 %v2223
  %2838 = vmatprep.subr.bf16.mxu0 0
  %2839 = vmatpush1.bf16.msra.mxu0 %v2224
  %2840 = vmatprep.subr.bf16.mxu0 0
  %2841 = vmatpush1.bf16.msra.mxu0 %v2225
  %2842 = vmatprep.mubr.bf16.mxu0 %v1269
  %2843 = vmatmul.mubr.bf16.gmra.mrb[0].mxu0 %v1268
  %v2844 = vpop.f32.mrb[0].mxu0
  %v2845 = vadd.f32 %v2805, %v2844
  %v2846 = vpop.f32.mrb[0].mxu0
  %v2847 = vpop.f32.mrb[0].mxu0
  %v2848 = vpop.f32.mrb[0].mxu0
  %2849 = vdwg.mxu0
  %2850 = vmatprep.subr.bf16.mxu0 0
  %2851 = vmatpush1.bf16.msra.mxu0 %v2226
  %2852 = vmatprep.subr.bf16.mxu0 0
  %2853 = vmatpush1.bf16.msra.mxu0 %v2227
  %2854 = vmatprep.subr.bf16.mxu0 0
  %2855 = vmatpush1.bf16.msra.mxu0 %v2228
  %2856 = vmatprep.subr.bf16.mxu0 0
  %2857 = vmatpush1.bf16.msra.mxu0 %v2229
  %2858 = vmatprep.subr.bf16.mxu0 0
  %2859 = vmatpush1.bf16.msra.mxu0 %v2230
  %2860 = vmatprep.subr.bf16.mxu0 0
  %2861 = vmatpush1.bf16.msra.mxu0 %v2231
  %2862 = vmatprep.subr.bf16.mxu0 0
  %2863 = vmatpush1.bf16.msra.mxu0 %v2232
  %2864 = vmatprep.subr.bf16.mxu0 0
  %2865 = vmatpush1.bf16.msra.mxu0 %v2233
  %2866 = vmatprep.subr.bf16.mxu0 0
  %2867 = vmatpush1.bf16.msra.mxu0 %v2234
  %2868 = vmatprep.subr.bf16.mxu0 0
  %2869 = vmatpush1.bf16.msra.mxu0 %v2235
  %2870 = vmatprep.subr.bf16.mxu0 0
  %2871 = vmatpush1.bf16.msra.mxu0 %v2236
  %2872 = vmatprep.subr.bf16.mxu0 0
  %2873 = vmatpush1.bf16.msra.mxu0 %v2237
  %2874 = vmatprep.subr.bf16.mxu0 0
  %2875 = vmatpush1.bf16.msra.mxu0 %v2238
  %2876 = vmatprep.subr.bf16.mxu0 0
  %2877 = vmatpush1.bf16.msra.mxu0 %v2239
  %2878 = vmatprep.subr.bf16.mxu0 0
  %2879 = vmatpush1.bf16.msra.mxu0 %v2240
  %2880 = vmatprep.subr.bf16.mxu0 0
  %2881 = vmatpush1.bf16.msra.mxu0 %v2241
  %2882 = vmatprep.mubr.bf16.mxu0 %v1271
  %2883 = vmatmul.mubr.bf16.gmra.mrb[0].mxu0 %v1270
  %v2884 = vpop.f32.mrb[0].mxu0
  %v2885 = vadd.f32 %v2845, %v2884
  %v2886 = vpop.f32.mrb[0].mxu0
  %v2887 = vpop.f32.mrb[0].mxu0
  %v2888 = vpop.f32.mrb[0].mxu0
  %2889 = vdwg.mxu0
  %2890 = vmatprep.subr.bf16.mxu0 0
  %2891 = vmatpush1.bf16.msra.mxu0 %v2242
  %2892 = vmatprep.subr.bf16.mxu0 0
  %2893 = vmatpush1.bf16.msra.mxu0 %v2243
  %2894 = vmatprep.subr.bf16.mxu0 0
  %2895 = vmatpush1.bf16.msra.mxu0 %v2244
  %2896 = vmatprep.subr.bf16.mxu0 0
  %2897 = vmatpush1.bf16.msra.mxu0 %v2245
  %2898 = vmatprep.subr.bf16.mxu0 0
  %2899 = vmatpush1.bf16.msra.mxu0 %v2246
  %2900 = vmatprep.subr.bf16.mxu0 0
  %2901 = vmatpush1.bf16.msra.mxu0 %v2247
  %2902 = vmatprep.subr.bf16.mxu0 0
  %2903 = vmatpush1.bf16.msra.mxu0 %v2248
  %2904 = vmatprep.subr.bf16.mxu0 0
  %2905 = vmatpush1.bf16.msra.mxu0 %v2249
  %2906 = vmatprep.subr.bf16.mxu0 0
  %2907 = vmatpush1.bf16.msra.mxu0 %v2250
  %2908 = vmatprep.subr.bf16.mxu0 0
  %2909 = vmatpush1.bf16.msra.mxu0 %v2251
  %2910 = vmatprep.subr.bf16.mxu0 0
  %2911 = vmatpush1.bf16.msra.mxu0 %v2252
  %2912 = vmatprep.subr.bf16.mxu0 0
  %2913 = vmatpush1.bf16.msra.mxu0 %v2253
  %2914 = vmatprep.subr.bf16.mxu0 0
  %2915 = vmatpush1.bf16.msra.mxu0 %v2254
  %2916 = vmatprep.subr.bf16.mxu0 0
  %2917 = vmatpush1.bf16.msra.mxu0 %v2255
  %2918 = vmatprep.subr.bf16.mxu0 0
  %2919 = vmatpush1.bf16.msra.mxu0 %v2256
  %2920 = vmatprep.subr.bf16.mxu0 0
  %2921 = vmatpush1.bf16.msra.mxu0 %v2257
  %2922 = vmatprep.mubr.bf16.mxu0 %v1273
  %2923 = vmatmul.mubr.bf16.gmra.mrb[0].mxu0 %v1272
  %v2924 = vpop.f32.mrb[0].mxu0
  %v2925 = vadd.f32 %v2885, %v2924
  %v2926 = vpop.f32.mrb[0].mxu0
  %v2927 = vpop.f32.mrb[0].mxu0
  %v2928 = vpop.f32.mrb[0].mxu0
  %2929 = vdwg.mxu0
  %v2930 = vadd.f32 %v829, %v2925
  %2931 = vst [vmem:[#allocation2] sm:$0xff] %v2930
  // Predicated region
  $region38: #{vit_feature_extractor.12} parent=0 // pred_check
    %p2932 = pneg %p27
  $region39: #{vit_feature_extractor.12} parent=0 // pred_check_branch
    %2934 = sbr.rel (%p2932) target = $region41
  $region40: #{vit_feature_extractor.12} parent=0 // pred_region
    %v2935 = vld [vmem:[#allocation2] sm:$0xff]
    %v2936 = vld [vmem:[%s4] sm:$0x1]
    %v2937 = vunpack.c.l.bf16 %v2936
    %v2938 = vlaneseq
    %v2939 = vshrl.u32 %v2938, 7
    %v2940 = vsub.s32 0, %v2939
    %v2941 = vrot.slane %v2937, %v2940
    %v2942 = vadd.f32 %v2935, %v2941
    %2943 = vadd.xlane.f32.xlu0 %v2942
    %v2944 = vpop.xlane.xlu0 %2943
    %v2945 = vrcp.pop 128.0
    %v2946 = vmul.f32 %v2944, %v2945
    %v2947 = vsub.f32 %v2942, %v2946
    %v2948 = vmul.f32 %v2947, %v2947
    %2949 = vadd.xlane.f32.xlu0 %v2948
    %v2950 = vpop.xlane.xlu0 %2949
    %v2951 = vmul.f32 %v2950, %v2945
    %v2952 = vadd.f32 %v2951, 1e-05
    %v2953 = vrsqrt.pop %v2952
    %v2954 = vmul.f32 %v2947, %v2953
    %v2955 = vld [vmem:[%s5] sm:$0x1]
    %v2956 = vunpack.c.l.bf16 %v2955
    %v2957 = vlaneseq
    %v2958 = vshrl.u32 %v2957, 7
    %v2959 = vsub.s32 0, %v2958
    %v2960 = vrot.slane %v2956, %v2959
    %v2961 = vmul.f32 %v2954, %v2960
    %v2962 = vld [vmem:[%s6] sm:$0x1]
    %v2963 = vunpack.c.l.bf16 %v2962
    %v2964 = vlaneseq
    %v2965 = vshrl.u32 %v2964, 7
    %v2966 = vsub.s32 0, %v2965
    %v2967 = vrot.slane %v2963, %v2966
    %v2968 = vadd.f32 %v2961, %v2967
    %v2969 = vpack.c.bf16 %v2968, %v2968
    %2970 = vst [vmem:[%s7] sm:$0xf] %v2969
  $region41: #{vit_feature_extractor.12} parent=0 // pred_fallthru
    _
  // Predicated region
  $region42: #{vit_feature_extractor.12} parent=0 // pred_check
    _
  $region43: #{vit_feature_extractor.12} parent=0 // pred_check_branch
    %2972 = sbr.rel (0) target = $region45
  $region44: #{vit_feature_extractor.12} parent=0 // pred_region
    _
  $region45: #{vit_feature_extractor.12} parent=0 // pred_fallthru
    _
  // Predicated region
  $region46: #{vit_feature_extractor.12} parent=0 // pred_check
    _
  $region47: #{vit_feature_extractor.12} parent=0 // pred_check_branch
    %2974 = sbr.rel (0) target = $region49
  $region48: #{vit_feature_extractor.12} parent=0 // pred_region
    _
  $region49: #{vit_feature_extractor.12} parent=0 // pred_fallthru
    _

// kernel: vit_feature_extractor.14
$region0: #{vit_feature_extractor.14}
  #allocation0 [shape = 'u32[]', space=smem, size = 0x4, offset = 0x4, fixed_abs, tag = 'smem constant byte address 0x4 - core index']
  #allocation1 [shape = 'u32[144,128]{1,0:T(1,128)}', space=vmem, size = 0x12000, scoped, tag = 'internal scratch']
  %s0 = inlined_call_operand.vmem [shape: bf16[2,5,384], index: 0, kind: input, shape index: {}, may-alias: {0,1,2}]
  %s1 = inlined_call_operand.vmem [shape: bf16[2,5,384], index: 1, kind: input, shape index: {}, may-alias: {0,1,2}]
  %s2 = inlined_call_operand.vmem [shape: bf16[2,5,384], index: 2, kind: input, shape index: {}, may-alias: {0,1,2}]
  %s3 = inlined_call_operand.vmem [shape: bf16[2,5,128], index: 3, kind: output, shape index: {}]
  %s4 = sld [smem:[#allocation0]]
  $region45: #{vit_feature_extractor.14} parent=0
    _
  %s6 = ssub.s32 1, %s4
  %s7 = scalar_select 0, %s6, %s4
  loop: start=0, step=1, limit=4
  $region2: #{vit_feature_extractor.14} parent=0 // loop_pre_header
    _
  $region3: #{vit_feature_extractor.14} parent=0 // loop_header
    %s9 = sphi 0, %s13
    %p10 = scmp.ge.s32.totalorder %s9, 4
    %s16 = sphi 0, %s28
    %s17 = sphi 0, %s24
    %s18 = sphi 0, %s16
    %s19 = sphi 0, %s17
    %s20 = sphi 0, %s18
    %s21 = sphi 0, %s19
    %s33 = sphi 0, %s35
    %s36 = sphi 0, %s33
    %s37 = sphi 0, %s36
    %s53 = sphi 0, %s37
    %s63 = sphi 0, %s65
    %s66 = sphi 0, %s63
    %s67 = sphi 0, %s66
    %s83 = sphi 0, %s67
    %s93 = sphi 0, %s95
    %s96 = sphi 0, %s93
    %s97 = sphi 0, %s96
    %s113 = sphi 0, %s97
    %s121 = sphi 0, %s123
    %s124 = sphi 0, %s121
    %s125 = sphi 0, %s124
    %s141 = sphi 0, %s125
  $region4: #{vit_feature_extractor.14} parent=0 // loop_header_branch
    %12 = sbr.rel (%p10) target = $region8
  $region5: #{vit_feature_extractor.14} parent=0 // loop_body
    %s14 = ssub.s32 %s9, 1
    %s15 = ssub.s32 %s9, 2
    %s22 = sadd.s32 1, %s17
    %p23 = scmp.ge.s32.totalorder %s22, 1
    %s24 = scalar_select %p23, 0, %s22
    %s25 = sadd.s32 1, %s16
    %s26 = scalar_select %p23, %s25, %s16
    %p27 = scmp.ge.s32.totalorder %s26, 2
    %s28 = scalar_select %p27, 0, %s26
    %s29 = ssub.s32 %s16, %s28
    %s30 = ssub.s32 %s17, %s24
    %s31 = sor.u32 %s29, %s30
    %p32 = scmp.eq.s32.totalorder %s31, 0
    %s34 = sadd.s32 %s33, 1
    %s35 = scalar_select %p32, %s33, %s34
    %p38 = pneg %p32
    %p39 = scmp.eq.s32.totalorder %s9, 1
    %p40 = por %p38, %p39
    %p41 = scmp.ne.s32.totalorder %s33, %s36
    %p42 = scmp.eq.s32.totalorder %s9, 0
    %p43 = por %p41, %p42
    %p44 = scmp.ne.s32.totalorder %s33, %s36
    %p45 = scmp.eq.s32.totalorder %s14, 1
    %p46 = por %p44, %p45
    %p47 = scmp.ne.s32.totalorder %s36, %s37
    %p48 = scmp.eq.s32.totalorder %s14, 0
    %p49 = por %p47, %p48
    %p50 = scmp.ne.s32.totalorder %s36, %s37
    %p51 = scmp.eq.s32.totalorder %s15, 1
    %p52 = por %p50, %p51
    %p54 = scmp.ne.s32.totalorder %s37, %s53
    %p55 = scmp.eq.s32.totalorder %s15, 0
    %p56 = por %p54, %p55
    %s57 = sadd.s32 %s17, 1
    %s58 = sadd.s32 %s24, 1
    %s59 = ssub.s32 %s16, %s28
    %s60 = ssub.s32 %s57, %s58
    %s61 = sor.u32 %s59, %s60
    %p62 = scmp.eq.s32.totalorder %s61, 0
    %s64 = sadd.s32 %s63, 1
    %s65 = scalar_select %p62, %s63, %s64
    %p68 = pneg %p62
    %p69 = scmp.eq.s32.totalorder %s9, 1
    %p70 = por %p68, %p69
    %p71 = scmp.ne.s32.totalorder %s63, %s66
    %p72 = scmp.eq.s32.totalorder %s9, 0
    %p73 = por %p71, %p72
    %p74 = scmp.ne.s32.totalorder %s63, %s66
    %p75 = scmp.eq.s32.totalorder %s14, 1
    %p76 = por %p74, %p75
    %p77 = scmp.ne.s32.totalorder %s66, %s67
    %p78 = scmp.eq.s32.totalorder %s14, 0
    %p79 = por %p77, %p78
    %p80 = scmp.ne.s32.totalorder %s66, %s67
    %p81 = scmp.eq.s32.totalorder %s15, 1
    %p82 = por %p80, %p81
    %p84 = scmp.ne.s32.totalorder %s67, %s83
    %p85 = scmp.eq.s32.totalorder %s15, 0
    %p86 = por %p84, %p85
    %s87 = sadd.s32 %s17, 2
    %s88 = sadd.s32 %s24, 2
    %s89 = ssub.s32 %s16, %s28
    %s90 = ssub.s32 %s87, %s88
    %s91 = sor.u32 %s89, %s90
    %p92 = scmp.eq.s32.totalorder %s91, 0
    %s94 = sadd.s32 %s93, 1
    %s95 = scalar_select %p92, %s93, %s94
    %p98 = pneg %p92
    %p99 = scmp.eq.s32.totalorder %s9, 1
    %p100 = por %p98, %p99
    %p101 = scmp.ne.s32.totalorder %s93, %s96
    %p102 = scmp.eq.s32.totalorder %s9, 0
    %p103 = por %p101, %p102
    %p104 = scmp.ne.s32.totalorder %s93, %s96
    %p105 = scmp.eq.s32.totalorder %s14, 1
    %p106 = por %p104, %p105
    %p107 = scmp.ne.s32.totalorder %s96, %s97
    %p108 = scmp.eq.s32.totalorder %s14, 0
    %p109 = por %p107, %p108
    %p110 = scmp.ne.s32.totalorder %s96, %s97
    %p111 = scmp.eq.s32.totalorder %s15, 1
    %p112 = por %p110, %p111
    %p114 = scmp.ne.s32.totalorder %s97, %s113
    %p115 = scmp.eq.s32.totalorder %s15, 0
    %p116 = por %p114, %p115
    %s117 = ssub.s32 %s16, %s28
    %s118 = ssub.s32 %s17, %s24
    %s119 = sor.u32 %s117, %s118
    %p120 = scmp.eq.s32.totalorder %s119, 0
    %s122 = sadd.s32 %s121, 1
    %s123 = scalar_select %p120, %s121, %s122
    %p126 = pneg %p120
    %p127 = scmp.eq.s32.totalorder %s9, 1
    %p128 = por %p126, %p127
    %p129 = scmp.ne.s32.totalorder %s121, %s124
    %p130 = scmp.eq.s32.totalorder %s9, 0
    %p131 = por %p129, %p130
    %p132 = scmp.ne.s32.totalorder %s121, %s124
    %p133 = scmp.eq.s32.totalorder %s14, 1
    %p134 = por %p132, %p133
    %p135 = scmp.ne.s32.totalorder %s124, %s125
    %p136 = scmp.eq.s32.totalorder %s14, 0
    %p137 = por %p135, %p136
    %p138 = scmp.ne.s32.totalorder %s124, %s125
    %p139 = scmp.eq.s32.totalorder %s15, 1
    %p140 = por %p138, %p139
    %p142 = scmp.ne.s32.totalorder %s125, %s141
    %p143 = scmp.eq.s32.totalorder %s15, 0
    %p144 = por %p142, %p143
    %p145 = scmp.le.s32.totalorder 1, %s9
    %p146 = scmp.lt.s32.totalorder %s9, 3
    %p147 = pnand %p145, %p146
    %p148 = pneg %p147
    // Predicated region
    $region9: #{vit_feature_extractor.14} parent=5 // pred_check
      _
    $region10: #{vit_feature_extractor.14} parent=5 // pred_check_branch
      %150 = sbr.rel (%p147) target = $region12
    $region11: #{vit_feature_extractor.14} parent=5 // pred_region
      %s151 = ssub.s32 %s9, 1
    $region12: #{vit_feature_extractor.14} parent=5 // pred_fallthru
      _
    %p152 = scmp.lt.s32.totalorder %s9, 2
    // Predicated region
    $region13: #{vit_feature_extractor.14} parent=5 // pred_check
      %p153 = pneg %p152
    $region14: #{vit_feature_extractor.14} parent=5 // pred_check_branch
      %155 = sbr.rel (%p153) target = $region16
    $region15: #{vit_feature_extractor.14} parent=5 // pred_region
      // Predicated region
      $region17: #{vit_feature_extractor.14} parent=15 // pred_check
        %p156 = pneg %p43
      $region18: #{vit_feature_extractor.14} parent=15 // pred_check_branch
        %158 = sbr.rel (%p156) target = $region20
      $region19: #{vit_feature_extractor.14} parent=15 // pred_region
        %p159 = scmp.lt.s32.totalorder %s16, 1
        %s160 = scalar_select %p159, %s16, 1
        %p161 = scmp.lt.s32.totalorder %s17, 2
        %s162 = scalar_select %p161, %s17, 2
        %s163 = smul.addr %s160, 3
        %s164 = sadd.s32 %s162, %s163
        %s165 = smul.addr %s164, 4
        %s166 = scalar_lea.vmem %s0, %s165
      $region20: #{vit_feature_extractor.14} parent=15 // pred_fallthru
        _
      // Predicated region
      $region21: #{vit_feature_extractor.14} parent=15 // pred_check
        %p167 = pneg %p73
      $region22: #{vit_feature_extractor.14} parent=15 // pred_check_branch
        %169 = sbr.rel (%p167) target = $region24
      $region23: #{vit_feature_extractor.14} parent=15 // pred_region
        %s170 = sadd.s32 %s17, 1
        %p171 = scmp.lt.s32.totalorder %s16, 1
        %s172 = scalar_select %p171, %s16, 1
        %p173 = scmp.lt.s32.totalorder %s170, 2
        %s174 = scalar_select %p173, %s170, 2
        %s175 = smul.addr %s172, 3
        %s176 = sadd.s32 %s174, %s175
        %s177 = smul.addr %s176, 4
        %s178 = scalar_lea.vmem %s1, %s177
        %s179 = sadd.s32 %s17, 1
      $region24: #{vit_feature_extractor.14} parent=15 // pred_fallthru
        _
      // Predicated region
      $region25: #{vit_feature_extractor.14} parent=15 // pred_check
        %p180 = pneg %p103
      $region26: #{vit_feature_extractor.14} parent=15 // pred_check_branch
        %182 = sbr.rel (%p180) target = $region28
      $region27: #{vit_feature_extractor.14} parent=15 // pred_region
        %s183 = sadd.s32 %s17, 2
        %p184 = scmp.lt.s32.totalorder %s16, 1
        %s185 = scalar_select %p184, %s16, 1
        %p186 = scmp.lt.s32.totalorder %s183, 2
        %s187 = scalar_select %p186, %s183, 2
        %s188 = smul.addr %s185, 3
        %s189 = sadd.s32 %s187, %s188
        %s190 = smul.addr %s189, 4
        %s191 = scalar_lea.vmem %s2, %s190
        %s192 = sadd.s32 %s17, 2
      $region28: #{vit_feature_extractor.14} parent=15 // pred_fallthru
        _
    $region16: #{vit_feature_extractor.14} parent=5 // pred_fallthru
      _
    %p193 = scmp.le.s32.totalorder 1, %s9
    %p194 = scmp.lt.s32.totalorder %s9, 3
    %p195 = pnand %p193, %p194
    %p196 = pneg %p195
    // Predicated region
    $region29: #{vit_feature_extractor.14} parent=5 // pred_check
      _
    $region30: #{vit_feature_extractor.14} parent=5 // pred_check_branch
      %198 = sbr.rel (%p195) target = $region32
    $region31: #{vit_feature_extractor.14} parent=5 // pred_region
      %s199 = ssub.s32 %s9, 1
      %p200 = scmp.lt.s32.totalorder %s18, 1
      %s201 = scalar_select %p200, %s18, 1
      %p202 = scmp.lt.s32.totalorder %s19, 2
      %s203 = scalar_select %p202, %s19, 2
      %s204 = smul.addr %s201, 3
      %s205 = sadd.s32 %s203, %s204
      %s206 = smul.addr %s205, 4
      %s207 = scalar_lea.vmem %s0, %s206
      %p208 = pneg %p49
      %p209 = pneg %p46
      %s210 = sadd.s32 %s19, 1
      %p211 = scmp.lt.s32.totalorder %s18, 1
      %s212 = scalar_select %p211, %s18, 1
      %p213 = scmp.lt.s32.totalorder %s210, 2
      %s214 = scalar_select %p213, %s210, 2
      %s215 = smul.addr %s212, 3
      %s216 = sadd.s32 %s214, %s215
      %s217 = smul.addr %s216, 4
      %s218 = scalar_lea.vmem %s1, %s217
      %p219 = pneg %p79
      %p220 = pneg %p76
      %s221 = sadd.s32 %s19, 2
      %p222 = scmp.lt.s32.totalorder %s18, 1
      %s223 = scalar_select %p222, %s18, 1
      %p224 = scmp.lt.s32.totalorder %s221, 2
      %s225 = scalar_select %p224, %s221, 2
      %s226 = smul.addr %s223, 3
      %s227 = sadd.s32 %s225, %s226
      %s228 = smul.addr %s227, 4
      %s229 = scalar_lea.vmem %s2, %s228
      %p230 = pneg %p109
      %p231 = pneg %p106
      %p232 = pneg %p137
      %p233 = pneg %p134
      %p234 = scmp.lt.s32.totalorder %s18, 1
      %s235 = scalar_select %p234, %s18, 1
      %p236 = scmp.lt.s32.totalorder %s19, 0
      %s237 = scalar_select %p236, %s19, 0
      %s238 = sadd.s32 %s237, %s235
      %s239 = smul.addr %s238, 4
      %s240 = scalar_lea.vmem %s3, %s239
      %p241 = scmp.lt.s32.totalorder %s18, 1
      %s242 = scalar_select %p241, %s18, 1
      %p243 = scmp.lt.s32.totalorder %s19, 2
      %s244 = scalar_select %p243, %s19, 2
      %s245 = smul.addr %s242, 3
      %s246 = sadd.s32 %s244, %s245
      %s247 = smul.addr %s246, 4
      %s248 = scalar_lea.vmem %s0, %s247
      %s249 = sadd.s32 %s19, 1
      %p250 = scmp.lt.s32.totalorder %s18, 1
      %s251 = scalar_select %p250, %s18, 1
      %p252 = scmp.lt.s32.totalorder %s249, 2
      %s253 = scalar_select %p252, %s249, 2
      %s254 = smul.addr %s251, 3
      %s255 = sadd.s32 %s253, %s254
      %s256 = smul.addr %s255, 4
      %s257 = scalar_lea.vmem %s1, %s256
      %s258 = sadd.s32 %s19, 1
      %s259 = sadd.s32 %s19, 2
      %p260 = scmp.lt.s32.totalorder %s18, 1
      %s261 = scalar_select %p260, %s18, 1
      %p262 = scmp.lt.s32.totalorder %s259, 2
      %s263 = scalar_select %p262, %s259, 2
      %s264 = smul.addr %s261, 3
      %s265 = sadd.s32 %s263, %s264
      %s266 = smul.addr %s265, 4
      %s267 = scalar_lea.vmem %s2, %s266
      %s268 = sadd.s32 %s19, 2
      %p269 = scmp.lt.s32.totalorder %s18, 1
      %s270 = scalar_select %p269, %s18, 1
      %p271 = scmp.lt.s32.totalorder %s19, 0
      %s272 = scalar_select %p271, %s19, 0
      %s273 = sadd.s32 %s272, %s270
      %s274 = smul.addr %s273, 4
      %s275 = scalar_lea.vmem %s3, %s274
      %v278 = vld [vmem:[%s248] sm:$0x7]
      %v279 = vmul.bf16 %v278, 1043676725
      %v280 = vld [vmem:[%s257] sm:$0x7]
      %v281 = vld [vmem:[%s267] sm:$0x7]
      %vm282 = vcmask 261120
      %v284 = vsel %vm282, %v279, 0
      %v287 = vsel %vm282, %v280, 0
      %289 = vmatprep.subr.bf16.mxu0 0
      %290 = vmatpush1.bf16.xpose.msra.mxu0 %v287
      %291 = vmatprep.subr.bf16.mxu0 0
      %292 = vmatpush1.bf16.xpose.msra.mxu0 0
      %293 = vmatprep.subr.bf16.mxu0 0
      %294 = vmatpush1.bf16.xpose.msra.mxu0 0
      %295 = vmatprep.subr.bf16.mxu0 0
      %296 = vmatpush1.bf16.xpose.msra.mxu0 0
      %297 = vmatprep.subr.bf16.mxu0 0
      %298 = vmatpush1.bf16.xpose.msra.mxu0 0
      %299 = vmatprep.subr.bf16.mxu0 0
      %300 = vmatpush1.bf16.xpose.msra.mxu0 0
      %301 = vmatprep.subr.bf16.mxu0 0
      %302 = vmatpush1.bf16.xpose.msra.mxu0 0
      %303 = vmatprep.subr.bf16.mxu0 0
      %304 = vmatpush1.bf16.xpose.msra.mxu0 0
      %305 = vmatprep.subr.bf16.mxu0 0
      %306 = vmatpush1.bf16.xpose.msra.mxu0 0
      %307 = vmatprep.subr.bf16.mxu0 0
      %308 = vmatpush1.bf16.xpose.msra.mxu0 0
      %309 = vmatprep.subr.bf16.mxu0 0
      %310 = vmatpush1.bf16.xpose.msra.mxu0 0
      %311 = vmatprep.subr.bf16.mxu0 0
      %312 = vmatpush1.bf16.xpose.msra.mxu0 0
      %313 = vmatprep.subr.bf16.mxu0 0
      %314 = vmatpush1.bf16.xpose.msra.mxu0 0
      %315 = vmatprep.subr.bf16.mxu0 0
      %316 = vmatpush1.bf16.xpose.msra.mxu0 0
      %317 = vmatprep.subr.bf16.mxu0 0
      %318 = vmatpush1.bf16.xpose.msra.mxu0 0
      %319 = vmatprep.subr.bf16.mxu0 0
      %320 = vmatpush1.bf16.xpose.msra.mxu0 0
      %321 = vmatprep.mubr.bf16.mxu0 0
      %322 = vmatmul.mubr.bf16.gmra.mrb[0].mxu0 %v284
      %v323 = vpop.f32.mrb[0].mxu0
      %v324 = vadd.f32 0.0, %v323
      %v325 = vpop.f32.mrb[0].mxu0
      %v326 = vpop.f32.mrb[0].mxu0
      %v327 = vpop.f32.mrb[0].mxu0
      %328 = vdwg.mxu0
      %vm329 = vcmask 36864
      %v330 = vsel %vm329, %v324, -inf
      %331 = vmax.xlane.f32.xlu0 %v330
      %v332 = vpop.xlane.xlu0 %331
      %v333 = vsub.f32 %v324, %v332
      %v334 = vmul.f32 %v333, 1.442695
      %v335 = vpow.pop %v334
      %v336 = vsel %vm329, %v335, 0.0
      %337 = vadd.xlane.f32.xlu0 %v336
      %v338 = vpop.xlane.xlu0 %337
      %v339 = vrcp.pop %v338
      %v340 = vmul.f32 %v335, %v339
      %v341 = vpack.c.bf16 %v340, %v340
      %vm342 = vcmask 39936
      %v344 = vsel %vm342, %v341, 0
      %vm346 = vcmask 1041408
      %vm347 = vcmask 1042432
      %v348 = vsel %vm346, 4294967295, 65535
      %v349 = vsel %vm347, %v348, 0
      %v351 = vand.u32 %v281, %v349
      %353 = vmatprep.subr.bf16.mxu0 0
      %354 = vmatpush1.bf16.msra.mxu0 %v351
      %355 = vmatprep.subr.bf16.mxu0 0
      %356 = vmatpush1.bf16.msra.mxu0 0
      %357 = vmatprep.subr.bf16.mxu0 0
      %358 = vmatpush1.bf16.msra.mxu0 0
      %359 = vmatprep.subr.bf16.mxu0 0
      %360 = vmatpush1.bf16.msra.mxu0 0
      %361 = vmatprep.subr.bf16.mxu0 0
      %362 = vmatpush1.bf16.msra.mxu0 0
      %363 = vmatprep.subr.bf16.mxu0 0
      %364 = vmatpush1.bf16.msra.mxu0 0
      %365 = vmatprep.subr.bf16.mxu0 0
      %366 = vmatpush1.bf16.msra.mxu0 0
      %367 = vmatprep.subr.bf16.mxu0 0
      %368 = vmatpush1.bf16.msra.mxu0 0
      %369 = vmatprep.subr.bf16.mxu0 0
      %370 = vmatpush1.bf16.msra.mxu0 0
      %371 = vmatprep.subr.bf16.mxu0 0
      %372 = vmatpush1.bf16.msra.mxu0 0
      %373 = vmatprep.subr.bf16.mxu0 0
      %374 = vmatpush1.bf16.msra.mxu0 0
      %375 = vmatprep.subr.bf16.mxu0 0
      %376 = vmatpush1.bf16.msra.mxu0 0
      %377 = vmatprep.subr.bf16.mxu0 0
      %378 = vmatpush1.bf16.msra.mxu0 0
      %379 = vmatprep.subr.bf16.mxu0 0
      %380 = vmatpush1.bf16.msra.mxu0 0
      %381 = vmatprep.subr.bf16.mxu0 0
      %382 = vmatpush1.bf16.msra.mxu0 0
      %383 = vmatprep.subr.bf16.mxu0 0
      %384 = vmatpush1.bf16.msra.mxu0 0
      %385 = vmatprep.mubr.bf16.mxu0 0
      %386 = vmatmul.mubr.bf16.gmra.mrb[0].mxu0 %v344
      %v387 = vpop.f32.mrb[0].mxu0
      %v388 = vadd.f32 0.0, %v387
      %v389 = vpop.f32.mrb[0].mxu0
      %v390 = vpop.f32.mrb[0].mxu0
      %v391 = vpop.f32.mrb[0].mxu0
      %392 = vdwg.mxu0
      %v393 = vpack.c.bf16 %v388, %v388
      %v395 = vunpack.c.l.b16 %v279
      %v396 = vpack.c.b16 %v395, %v395
      %397 = vrot.lane.b32.xlu0 %v396, 96
      %v398 = vpop.permute.xlu0 %397
      %v400 = vunpack.c.l.b16 %v280
      %v401 = vpack.c.b16 %v400, %v400
      %402 = vrot.lane.b32.xlu0 %v401, 96
      %v403 = vpop.permute.xlu0 %402
      %v405 = vsel %vm282, %v398, 0
      %v408 = vsel %vm282, %v403, 0
      %410 = vmatprep.subr.bf16.mxu0 0
      %411 = vmatpush1.bf16.xpose.msra.mxu0 %v408
      %412 = vmatprep.subr.bf16.mxu0 0
      %413 = vmatpush1.bf16.xpose.msra.mxu0 0
      %414 = vmatprep.subr.bf16.mxu0 0
      %415 = vmatpush1.bf16.xpose.msra.mxu0 0
      %416 = vmatprep.subr.bf16.mxu0 0
      %417 = vmatpush1.bf16.xpose.msra.mxu0 0
      %418 = vmatprep.subr.bf16.mxu0 0
      %419 = vmatpush1.bf16.xpose.msra.mxu0 0
      %420 = vmatprep.subr.bf16.mxu0 0
      %421 = vmatpush1.bf16.xpose.msra.mxu0 0
      %422 = vmatprep.subr.bf16.mxu0 0
      %423 = vmatpush1.bf16.xpose.msra.mxu0 0
      %424 = vmatprep.subr.bf16.mxu0 0
      %425 = vmatpush1.bf16.xpose.msra.mxu0 0
      %426 = vmatprep.subr.bf16.mxu0 0
      %427 = vmatpush1.bf16.xpose.msra.mxu0 0
      %428 = vmatprep.subr.bf16.mxu0 0
      %429 = vmatpush1.bf16.xpose.msra.mxu0 0
      %430 = vmatprep.subr.bf16.mxu0 0
      %431 = vmatpush1.bf16.xpose.msra.mxu0 0
      %432 = vmatprep.subr.bf16.mxu0 0
      %433 = vmatpush1.bf16.xpose.msra.mxu0 0
      %434 = vmatprep.subr.bf16.mxu0 0
      %435 = vmatpush1.bf16.xpose.msra.mxu0 0
      %436 = vmatprep.subr.bf16.mxu0 0
      %437 = vmatpush1.bf16.xpose.msra.mxu0 0
      %438 = vmatprep.subr.bf16.mxu0 0
      %439 = vmatpush1.bf16.xpose.msra.mxu0 0
      %440 = vmatprep.subr.bf16.mxu0 0
      %441 = vmatpush1.bf16.xpose.msra.mxu0 0
      %442 = vmatprep.mubr.bf16.mxu0 0
      %443 = vmatmul.mubr.bf16.gmra.mrb[0].mxu0 %v405
      %v444 = vpop.f32.mrb[0].mxu0
      %v445 = vadd.f32 0.0, %v444
      %v446 = vpop.f32.mrb[0].mxu0
      %v447 = vpop.f32.mrb[0].mxu0
      %v448 = vpop.f32.mrb[0].mxu0
      %449 = vdwg.mxu0
      %v450 = vsel %vm329, %v445, -inf
      %451 = vmax.xlane.f32.xlu0 %v450
      %v452 = vpop.xlane.xlu0 %451
      %v453 = vsub.f32 %v445, %v452
      %v454 = vmul.f32 %v453, 1.442695
      %v455 = vpow.pop %v454
      %v456 = vsel %vm329, %v455, 0.0
      %457 = vadd.xlane.f32.xlu0 %v456
      %v458 = vpop.xlane.xlu0 %457
      %v459 = vrcp.pop %v458
      %v460 = vmul.f32 %v455, %v459
      %v461 = vpack.c.bf16 %v460, %v460
      %v463 = vunpack.c.l.b16 %v281
      %v464 = vpack.c.b16 %v463, %v463
      %465 = vrot.lane.b32.xlu0 %v464, 96
      %v466 = vpop.permute.xlu0 %465
      %v468 = vsel %vm342, %v461, 0
      %v471 = vand.u32 %v466, %v349
      %473 = vmatprep.subr.bf16.mxu0 0
      %474 = vmatpush1.bf16.msra.mxu0 %v471
      %475 = vmatprep.subr.bf16.mxu0 0
      %476 = vmatpush1.bf16.msra.mxu0 0
      %477 = vmatprep.subr.bf16.mxu0 0
      %478 = vmatpush1.bf16.msra.mxu0 0
      %479 = vmatprep.subr.bf16.mxu0 0
      %480 = vmatpush1.bf16.msra.mxu0 0
      %481 = vmatprep.subr.bf16.mxu0 0
      %482 = vmatpush1.bf16.msra.mxu0 0
      %483 = vmatprep.subr.bf16.mxu0 0
      %484 = vmatpush1.bf16.msra.mxu0 0
      %485 = vmatprep.subr.bf16.mxu0 0
      %486 = vmatpush1.bf16.msra.mxu0 0
      %487 = vmatprep.subr.bf16.mxu0 0
      %488 = vmatpush1.bf16.msra.mxu0 0
      %489 = vmatprep.subr.bf16.mxu0 0
      %490 = vmatpush1.bf16.msra.mxu0 0
      %491 = vmatprep.subr.bf16.mxu0 0
      %492 = vmatpush1.bf16.msra.mxu0 0
      %493 = vmatprep.subr.bf16.mxu0 0
      %494 = vmatpush1.bf16.msra.mxu0 0
      %495 = vmatprep.subr.bf16.mxu0 0
      %496 = vmatpush1.bf16.msra.mxu0 0
      %497 = vmatprep.subr.bf16.mxu0 0
      %498 = vmatpush1.bf16.msra.mxu0 0
      %499 = vmatprep.subr.bf16.mxu0 0
      %500 = vmatpush1.bf16.msra.mxu0 0
      %501 = vmatprep.subr.bf16.mxu0 0
      %502 = vmatpush1.bf16.msra.mxu0 0
      %503 = vmatprep.subr.bf16.mxu0 0
      %504 = vmatpush1.bf16.msra.mxu0 0
      %505 = vmatprep.mubr.bf16.mxu0 0
      %506 = vmatmul.mubr.bf16.gmra.mrb[0].mxu0 %v468
      %v507 = vpop.f32.mrb[0].mxu0
      %v508 = vadd.f32 0.0, %v507
      %v509 = vpop.f32.mrb[0].mxu0
      %v510 = vpop.f32.mrb[0].mxu0
      %v511 = vpop.f32.mrb[0].mxu0
      %512 = vdwg.mxu0
      %v513 = vpack.c.bf16 %v508, %v508
      %514 = vrot.lane.b32.xlu0 %v396, 64
      %v515 = vpop.permute.xlu0 %514
      %516 = vrot.lane.b32.xlu0 %v401, 64
      %v517 = vpop.permute.xlu0 %516
      %v519 = vsel %vm282, %v515, 0
      %v522 = vsel %vm282, %v517, 0
      %524 = vmatprep.subr.bf16.mxu0 0
      %525 = vmatpush1.bf16.xpose.msra.mxu0 %v522
      %526 = vmatprep.subr.bf16.mxu0 0
      %527 = vmatpush1.bf16.xpose.msra.mxu0 0
      %528 = vmatprep.subr.bf16.mxu0 0
      %529 = vmatpush1.bf16.xpose.msra.mxu0 0
      %530 = vmatprep.subr.bf16.mxu0 0
      %531 = vmatpush1.bf16.xpose.msra.mxu0 0
      %532 = vmatprep.subr.bf16.mxu0 0
      %533 = vmatpush1.bf16.xpose.msra.mxu0 0
      %534 = vmatprep.subr.bf16.mxu0 0
      %535 = vmatpush1.bf16.xpose.msra.mxu0 0
      %536 = vmatprep.subr.bf16.mxu0 0
      %537 = vmatpush1.bf16.xpose.msra.mxu0 0
      %538 = vmatprep.subr.bf16.mxu0 0
      %539 = vmatpush1.bf16.xpose.msra.mxu0 0
      %540 = vmatprep.subr.bf16.mxu0 0
      %541 = vmatpush1.bf16.xpose.msra.mxu0 0
      %542 = vmatprep.subr.bf16.mxu0 0
      %543 = vmatpush1.bf16.xpose.msra.mxu0 0
      %544 = vmatprep.subr.bf16.mxu0 0
      %545 = vmatpush1.bf16.xpose.msra.mxu0 0
      %546 = vmatprep.subr.bf16.mxu0 0
      %547 = vmatpush1.bf16.xpose.msra.mxu0 0
      %548 = vmatprep.subr.bf16.mxu0 0
      %549 = vmatpush1.bf16.xpose.msra.mxu0 0
      %550 = vmatprep.subr.bf16.mxu0 0
      %551 = vmatpush1.bf16.xpose.msra.mxu0 0
      %552 = vmatprep.subr.bf16.mxu0 0
      %553 = vmatpush1.bf16.xpose.msra.mxu0 0
      %554 = vmatprep.subr.bf16.mxu0 0
      %555 = vmatpush1.bf16.xpose.msra.mxu0 0
      %556 = vmatprep.mubr.bf16.mxu0 0
      %557 = vmatmul.mubr.bf16.gmra.mrb[0].mxu0 %v519
      %v558 = vpop.f32.mrb[0].mxu0
      %v559 = vadd.f32 0.0, %v558
      %v560 = vpop.f32.mrb[0].mxu0
      %v561 = vpop.f32.mrb[0].mxu0
      %v562 = vpop.f32.mrb[0].mxu0
      %563 = vdwg.mxu0
      %v564 = vsel %vm329, %v559, -inf
      %565 = vmax.xlane.f32.xlu0 %v564
      %v566 = vpop.xlane.xlu0 %565
      %v567 = vsub.f32 %v559, %v566
      %v568 = vmul.f32 %v567, 1.442695
      %v569 = vpow.pop %v568
      %v570 = vsel %vm329, %v569, 0.0
      %571 = vadd.xlane.f32.xlu0 %v570
      %v572 = vpop.xlane.xlu0 %571
      %v573 = vrcp.pop %v572
      %v574 = vmul.f32 %v569, %v573
      %v575 = vpack.c.bf16 %v574, %v574
      %576 = vrot.lane.b32.xlu0 %v464, 64
      %v577 = vpop.permute.xlu0 %576
      %v579 = vsel %vm342, %v575, 0
      %v582 = vand.u32 %v577, %v349
      %584 = vmatprep.subr.bf16.mxu0 0
      %585 = vmatpush1.bf16.msra.mxu0 %v582
      %586 = vmatprep.subr.bf16.mxu0 0
      %587 = vmatpush1.bf16.msra.mxu0 0
      %588 = vmatprep.subr.bf16.mxu0 0
      %589 = vmatpush1.bf16.msra.mxu0 0
      %590 = vmatprep.subr.bf16.mxu0 0
      %591 = vmatpush1.bf16.msra.mxu0 0
      %592 = vmatprep.subr.bf16.mxu0 0
      %593 = vmatpush1.bf16.msra.mxu0 0
      %594 = vmatprep.subr.bf16.mxu0 0
      %595 = vmatpush1.bf16.msra.mxu0 0
      %596 = vmatprep.subr.bf16.mxu0 0
      %597 = vmatpush1.bf16.msra.mxu0 0
      %598 = vmatprep.subr.bf16.mxu0 0
      %599 = vmatpush1.bf16.msra.mxu0 0
      %600 = vmatprep.subr.bf16.mxu0 0
      %601 = vmatpush1.bf16.msra.mxu0 0
      %602 = vmatprep.subr.bf16.mxu0 0
      %603 = vmatpush1.bf16.msra.mxu0 0
      %604 = vmatprep.subr.bf16.mxu0 0
      %605 = vmatpush1.bf16.msra.mxu0 0
      %606 = vmatprep.subr.bf16.mxu0 0
      %607 = vmatpush1.bf16.msra.mxu0 0
      %608 = vmatprep.subr.bf16.mxu0 0
      %609 = vmatpush1.bf16.msra.mxu0 0
      %610 = vmatprep.subr.bf16.mxu0 0
      %611 = vmatpush1.bf16.msra.mxu0 0
      %612 = vmatprep.subr.bf16.mxu0 0
      %613 = vmatpush1.bf16.msra.mxu0 0
      %614 = vmatprep.subr.bf16.mxu0 0
      %615 = vmatpush1.bf16.msra.mxu0 0
      %616 = vmatprep.mubr.bf16.mxu0 0
      %617 = vmatmul.mubr.bf16.gmra.mrb[0].mxu0 %v579
      %v618 = vpop.f32.mrb[0].mxu0
      %v619 = vadd.f32 0.0, %v618
      %v620 = vpop.f32.mrb[0].mxu0
      %v621 = vpop.f32.mrb[0].mxu0
      %v622 = vpop.f32.mrb[0].mxu0
      %623 = vdwg.mxu0
      %v624 = vpack.c.bf16 %v619, %v619
      %625 = vrot.lane.b32.xlu0 %v396, 32
      %v626 = vpop.permute.xlu0 %625
      %627 = vrot.lane.b32.xlu0 %v401, 32
      %v628 = vpop.permute.xlu0 %627
      %v630 = vsel %vm282, %v626, 0
      %v633 = vsel %vm282, %v628, 0
      %635 = vmatprep.subr.bf16.mxu0 0
      %636 = vmatpush1.bf16.xpose.msra.mxu0 %v633
      %637 = vmatprep.subr.bf16.mxu0 0
      %638 = vmatpush1.bf16.xpose.msra.mxu0 0
      %639 = vmatprep.subr.bf16.mxu0 0
      %640 = vmatpush1.bf16.xpose.msra.mxu0 0
      %641 = vmatprep.subr.bf16.mxu0 0
      %642 = vmatpush1.bf16.xpose.msra.mxu0 0
      %643 = vmatprep.subr.bf16.mxu0 0
      %644 = vmatpush1.bf16.xpose.msra.mxu0 0
      %645 = vmatprep.subr.bf16.mxu0 0
      %646 = vmatpush1.bf16.xpose.msra.mxu0 0
      %647 = vmatprep.subr.bf16.mxu0 0
      %648 = vmatpush1.bf16.xpose.msra.mxu0 0
      %649 = vmatprep.subr.bf16.mxu0 0
      %650 = vmatpush1.bf16.xpose.msra.mxu0 0
      %651 = vmatprep.subr.bf16.mxu0 0
      %652 = vmatpush1.bf16.xpose.msra.mxu0 0
      %653 = vmatprep.subr.bf16.mxu0 0
      %654 = vmatpush1.bf16.xpose.msra.mxu0 0
      %655 = vmatprep.subr.bf16.mxu0 0
      %656 = vmatpush1.bf16.xpose.msra.mxu0 0
      %657 = vmatprep.subr.bf16.mxu0 0
      %658 = vmatpush1.bf16.xpose.msra.mxu0 0
      %659 = vmatprep.subr.bf16.mxu0 0
      %660 = vmatpush1.bf16.xpose.msra.mxu0 0
      %661 = vmatprep.subr.bf16.mxu0 0
      %662 = vmatpush1.bf16.xpose.msra.mxu0 0
      %663 = vmatprep.subr.bf16.mxu0 0
      %664 = vmatpush1.bf16.xpose.msra.mxu0 0
      %665 = vmatprep.subr.bf16.mxu0 0
      %666 = vmatpush1.bf16.xpose.msra.mxu0 0
      %667 = vmatprep.mubr.bf16.mxu0 0
      %668 = vmatmul.mubr.bf16.gmra.mrb[0].mxu0 %v630
      %v669 = vpop.f32.mrb[0].mxu0
      %v670 = vadd.f32 0.0, %v669
      %v671 = vpop.f32.mrb[0].mxu0
      %v672 = vpop.f32.mrb[0].mxu0
      %v673 = vpop.f32.mrb[0].mxu0
      %674 = vdwg.mxu0
      %v675 = vsel %vm329, %v670, -inf
      %676 = vmax.xlane.f32.xlu0 %v675
      %v677 = vpop.xlane.xlu0 %676
      %v678 = vsub.f32 %v670, %v677
      %v679 = vmul.f32 %v678, 1.442695
      %v680 = vpow.pop %v679
      %v681 = vsel %vm329, %v680, 0.0
      %682 = vadd.xlane.f32.xlu0 %v681
      %v683 = vpop.xlane.xlu0 %682
      %v684 = vrcp.pop %v683
      %v685 = vmul.f32 %v680, %v684
      %v686 = vpack.c.bf16 %v685, %v685
      %687 = vrot.lane.b32.xlu0 %v464, 32
      %v688 = vpop.permute.xlu0 %687
      %v690 = vsel %vm342, %v686, 0
      %v693 = vand.u32 %v688, %v349
      %695 = vmatprep.subr.bf16.mxu0 0
      %696 = vmatpush1.bf16.msra.mxu0 %v693
      %697 = vmatprep.subr.bf16.mxu0 0
      %698 = vmatpush1.bf16.msra.mxu0 0
      %699 = vmatprep.subr.bf16.mxu0 0
      %700 = vmatpush1.bf16.msra.mxu0 0
      %701 = vmatprep.subr.bf16.mxu0 0
      %702 = vmatpush1.bf16.msra.mxu0 0
      %703 = vmatprep.subr.bf16.mxu0 0
      %704 = vmatpush1.bf16.msra.mxu0 0
      %705 = vmatprep.subr.bf16.mxu0 0
      %706 = vmatpush1.bf16.msra.mxu0 0
      %707 = vmatprep.subr.bf16.mxu0 0
      %708 = vmatpush1.bf16.msra.mxu0 0
      %709 = vmatprep.subr.bf16.mxu0 0
      %710 = vmatpush1.bf16.msra.mxu0 0
      %711 = vmatprep.subr.bf16.mxu0 0
      %712 = vmatpush1.bf16.msra.mxu0 0
      %713 = vmatprep.subr.bf16.mxu0 0
      %714 = vmatpush1.bf16.msra.mxu0 0
      %715 = vmatprep.subr.bf16.mxu0 0
      %716 = vmatpush1.bf16.msra.mxu0 0
      %717 = vmatprep.subr.bf16.mxu0 0
      %718 = vmatpush1.bf16.msra.mxu0 0
      %719 = vmatprep.subr.bf16.mxu0 0
      %720 = vmatpush1.bf16.msra.mxu0 0
      %721 = vmatprep.subr.bf16.mxu0 0
      %722 = vmatpush1.bf16.msra.mxu0 0
      %723 = vmatprep.subr.bf16.mxu0 0
      %724 = vmatpush1.bf16.msra.mxu0 0
      %725 = vmatprep.subr.bf16.mxu0 0
      %726 = vmatpush1.bf16.msra.mxu0 0
      %727 = vmatprep.mubr.bf16.mxu0 0
      %728 = vmatmul.mubr.bf16.gmra.mrb[0].mxu0 %v690
      %v729 = vpop.f32.mrb[0].mxu0
      %v730 = vadd.f32 0.0, %v729
      %v731 = vpop.f32.mrb[0].mxu0
      %v732 = vpop.f32.mrb[0].mxu0
      %v733 = vpop.f32.mrb[0].mxu0
      %734 = vdwg.mxu0
      %v735 = vpack.c.bf16 %v730, %v730
      %737 = vrot.lane.b32.xlu0 %v513, 32
      %v738 = vpop.permute.xlu0 %737
      %740 = vrot.lane.b32.xlu0 %v624, 64
      %v741 = vpop.permute.xlu0 %740
      %743 = vrot.lane.b32.xlu0 %v735, 96
      %v744 = vpop.permute.xlu0 %743
      %v747 = vsel %vm282, %v393, %v738
      %vm748 = vcmask 523264
      %v750 = vsel %vm748, %v747, %v741
      %vm751 = vcmask 785408
      %v753 = vsel %vm751, %v750, %v744
      %vm755 = vcmask 1042432
      %vm756 = vsmask.f32 2304
      %vm757 = vmand %vm755, %vm756
      %v758 = vld [vmem:[%s275] sm:$0x7]
      %v759 = vsel %vm757, %v753, %v758
      %760 = vst [vmem:[%s275] sm:$0x7] %v759
      %p761 = scmp.lt.s32.totalorder %s18, 1
      %s762 = scalar_select %p761, %s18, 1
      %p763 = scmp.lt.s32.totalorder %s19, 0
      %s764 = scalar_select %p763, %s19, 0
      %s765 = sadd.s32 %s764, %s762
      %s766 = smul.addr %s765, 4
      %s767 = scalar_lea.vmem %s3, %s766
      // Predicated region
      $region33: #{vit_feature_extractor.14} parent=31 // pred_check
        %p768 = pneg %p134
      $region34: #{vit_feature_extractor.14} parent=31 // pred_check_branch
        %770 = sbr.rel (%p768) target = $region36
      $region35: #{vit_feature_extractor.14} parent=31 // pred_region
        _
      $region36: #{vit_feature_extractor.14} parent=31 // pred_fallthru
        _
    $region32: #{vit_feature_extractor.14} parent=5 // pred_fallthru
      _
    %p771 = scmp.le.s32.totalorder 2, %s9
    // Predicated region
    $region37: #{vit_feature_extractor.14} parent=5 // pred_check
      %p772 = pneg %p771
    $region38: #{vit_feature_extractor.14} parent=5 // pred_check_branch
      %774 = sbr.rel (%p772) target = $region40
    $region39: #{vit_feature_extractor.14} parent=5 // pred_region
      %s775 = ssub.s32 %s9, 2
      // Predicated region
      $region41: #{vit_feature_extractor.14} parent=39 // pred_check
        %p776 = pneg %p140
      $region42: #{vit_feature_extractor.14} parent=39 // pred_check_branch
        %778 = sbr.rel (%p776) target = $region44
      $region43: #{vit_feature_extractor.14} parent=39 // pred_region
        %p779 = scmp.lt.s32.totalorder %s20, 1
        %s780 = scalar_select %p779, %s20, 1
        %p781 = scmp.lt.s32.totalorder %s21, 0
        %s782 = scalar_select %p781, %s21, 0
        %s783 = sadd.s32 %s782, %s780
        %s784 = smul.addr %s783, 4
        %s785 = scalar_lea.vmem %s3, %s784
      $region44: #{vit_feature_extractor.14} parent=39 // pred_fallthru
        _
    $region40: #{vit_feature_extractor.14} parent=5 // pred_fallthru
      _
  $region6: #{vit_feature_extractor.14} parent=0 // loop_footer
    %s13 = sadd.s32 1, %s9
  $region7: #{vit_feature_extractor.14} parent=0 // loop_footer_branch
    %8 = sbr.rel target = $region3
  $region8: #{vit_feature_extractor.14} parent=0 // loop_exit
    _

// kernel: vit_feature_extractor.15
$region0: #{vit_feature_extractor.15}
  #allocation0 [shape = 'u32[]', space=smem, size = 0x4, offset = 0x4, fixed_abs, tag = 'smem constant byte address 0x4 - core index']
  #allocation1 [shape = 'u32[144,128]{1,0:T(1,128)}', space=vmem, size = 0x12000, scoped, tag = 'internal scratch']
  #allocation2 [shape = 'f32[16,128]{1,0:T(8,128)}', space=vmem, size = 0x2000, scoped, tag = 'scratch operand']
  %s0 = inlined_call_operand.vmem [shape: bf16[16,128], index: 0, kind: input, shape index: {}]
  %s1 = inlined_call_operand.vmem [shape: bf16[128,128], index: 1, kind: input, shape index: {}]
  %s2 = inlined_call_operand.vmem [shape: bf16[1,128], index: 2, kind: input, shape index: {}]
  %s3 = inlined_call_operand.vmem [shape: bf16[16,128], index: 3, kind: input, shape index: {}]
  %s4 = inlined_call_operand.vmem [shape: bf16[16,128], index: 4, kind: output, shape index: {}]
  %s5 = sld [smem:[#allocation0]]
  $region34: #{vit_feature_extractor.15} parent=0
    _
  %s7 = ssub.s32 1, %s5
  %s8 = scalar_select 0, %s7, %s5
  // Predicated region
  $region2: #{vit_feature_extractor.15} parent=0 // pred_check
    _
  $region3: #{vit_feature_extractor.15} parent=0 // pred_check_branch
    %10 = sbr.rel (0) target = $region5
  $region4: #{vit_feature_extractor.15} parent=0 // pred_region
    _
  $region5: #{vit_feature_extractor.15} parent=0 // pred_fallthru
    _
  // Predicated region
  $region6: #{vit_feature_extractor.15} parent=0 // pred_check
    _
  $region7: #{vit_feature_extractor.15} parent=0 // pred_check_branch
    %12 = sbr.rel (0) target = $region9
  $region8: #{vit_feature_extractor.15} parent=0 // pred_region
    _
  $region9: #{vit_feature_extractor.15} parent=0 // pred_fallthru
    _
  // Predicated region
  $region10: #{vit_feature_extractor.15} parent=0 // pred_check
    _
  $region11: #{vit_feature_extractor.15} parent=0 // pred_check_branch
    %14 = sbr.rel (0) target = $region13
  $region12: #{vit_feature_extractor.15} parent=0 // pred_region
    _
  $region13: #{vit_feature_extractor.15} parent=0 // pred_fallthru
    _
  // Predicated region
  $region14: #{vit_feature_extractor.15} parent=0 // pred_check
    _
  $region15: #{vit_feature_extractor.15} parent=0 // pred_check_branch
    %16 = sbr.rel (0) target = $region17
  $region16: #{vit_feature_extractor.15} parent=0 // pred_region
    _
  $region17: #{vit_feature_extractor.15} parent=0 // pred_fallthru
    _
  %p18 = scmp.eq.s32.totalorder 0, 0
  // Predicated region
  $region18: #{vit_feature_extractor.15} parent=0 // pred_check
    %p19 = pneg %p18
  $region19: #{vit_feature_extractor.15} parent=0 // pred_check_branch
    %21 = sbr.rel (%p19) target = $region21
  $region20: #{vit_feature_extractor.15} parent=0 // pred_region
    %22 = vst [vmem:[#allocation2] sm:$0xff] 0.0
    %23 = vst [vmem:[#allocation2 + $0x8] sm:$0xff] 0.0
  $region21: #{vit_feature_extractor.15} parent=0 // pred_fallthru
    _
  %v24 = vld [vmem:[%s0] sm:$0xf]
  %v25 = vld [vmem:[%s0 + $0x4] sm:$0xf]
  %v26 = vld [vmem:[#allocation2] sm:$0xff]
  %v27 = vld [vmem:[#allocation2 + $0x8] sm:$0xff]
  %v28 = vld [vmem:[%s1] sm:$0xf]
  %v29 = vld [vmem:[%s1 + $0x4] sm:$0xf]
  %v30 = vld [vmem:[%s1 + $0x8] sm:$0xf]
  %v31 = vld [vmem:[%s1 + $0xc] sm:$0xf]
  %v32 = vld [vmem:[%s1 + $0x10] sm:$0xf]
  %v33 = vld [vmem:[%s1 + $0x14] sm:$0xf]
  %v34 = vld [vmem:[%s1 + $0x18] sm:$0xf]
  %v35 = vld [vmem:[%s1 + $0x1c] sm:$0xf]
  %v36 = vld [vmem:[%s1 + $0x20] sm:$0xf]
  %v37 = vld [vmem:[%s1 + $0x24] sm:$0xf]
  %v38 = vld [vmem:[%s1 + $0x28] sm:$0xf]
  %v39 = vld [vmem:[%s1 + $0x2c] sm:$0xf]
  %v40 = vld [vmem:[%s1 + $0x30] sm:$0xf]
  %v41 = vld [vmem:[%s1 + $0x34] sm:$0xf]
  %v42 = vld [vmem:[%s1 + $0x38] sm:$0xf]
  %v43 = vld [vmem:[%s1 + $0x3c] sm:$0xf]
  %v46 = vunpack.c.l.b16 %v24
  %v47 = vunpack.c.l.b16 %v25
  %v48 = vpack.c.b16 %v47, %v46
  %v66 = vunpack.c.l.b16 %v28
  %v67 = vunpack.c.l.b16 %v29
  %v68 = vunpack.c.l.b16 %v30
  %v69 = vunpack.c.l.b16 %v31
  %v70 = vunpack.c.l.b16 %v32
  %v71 = vunpack.c.l.b16 %v33
  %v72 = vunpack.c.l.b16 %v34
  %v73 = vunpack.c.l.b16 %v35
  %v74 = vunpack.c.l.b16 %v36
  %v75 = vunpack.c.l.b16 %v37
  %v76 = vunpack.c.l.b16 %v38
  %v77 = vunpack.c.l.b16 %v39
  %v78 = vunpack.c.l.b16 %v40
  %v79 = vunpack.c.l.b16 %v41
  %v80 = vunpack.c.l.b16 %v42
  %v81 = vunpack.c.l.b16 %v43
  %v82 = vpack.c.b16 %v67, %v66
  %v83 = vpack.c.b16 %v69, %v68
  %v84 = vpack.c.b16 %v71, %v70
  %v85 = vpack.c.b16 %v73, %v72
  %v86 = vpack.c.b16 %v75, %v74
  %v87 = vpack.c.b16 %v77, %v76
  %v88 = vpack.c.b16 %v79, %v78
  %v89 = vpack.c.b16 %v81, %v80
  %98 = vmatprep.subr.bf16.mxu0 0
  %99 = vmatpush1.bf16.msra.mxu0 %v82
  %100 = vmatprep.subr.bf16.mxu0 0
  %101 = vmatpush1.bf16.msra.mxu0 %v83
  %102 = vmatprep.subr.bf16.mxu0 0
  %103 = vmatpush1.bf16.msra.mxu0 %v84
  %104 = vmatprep.subr.bf16.mxu0 0
  %105 = vmatpush1.bf16.msra.mxu0 %v85
  %106 = vmatprep.subr.bf16.mxu0 0
  %107 = vmatpush1.bf16.msra.mxu0 %v86
  %108 = vmatprep.subr.bf16.mxu0 0
  %109 = vmatpush1.bf16.msra.mxu0 %v87
  %110 = vmatprep.subr.bf16.mxu0 0
  %111 = vmatpush1.bf16.msra.mxu0 %v88
  %112 = vmatprep.subr.bf16.mxu0 0
  %113 = vmatpush1.bf16.msra.mxu0 %v89
  %114 = vmatprep.subr.bf16.mxu0 0
  %115 = vmatpush1.bf16.msra.mxu0 0
  %116 = vmatprep.subr.bf16.mxu0 0
  %117 = vmatpush1.bf16.msra.mxu0 0
  %118 = vmatprep.subr.bf16.mxu0 0
  %119 = vmatpush1.bf16.msra.mxu0 0
  %120 = vmatprep.subr.bf16.mxu0 0
  %121 = vmatpush1.bf16.msra.mxu0 0
  %122 = vmatprep.subr.bf16.mxu0 0
  %123 = vmatpush1.bf16.msra.mxu0 0
  %124 = vmatprep.subr.bf16.mxu0 0
  %125 = vmatpush1.bf16.msra.mxu0 0
  %126 = vmatprep.subr.bf16.mxu0 0
  %127 = vmatpush1.bf16.msra.mxu0 0
  %128 = vmatprep.subr.bf16.mxu0 0
  %129 = vmatpush1.bf16.msra.mxu0 0
  %130 = vmatprep.mubr.bf16.mxu0 0
  %131 = vmatmul.mubr.bf16.gmra.mrb[0].mxu0 %v48
  %v132 = vpop.f32.mrb[0].mxu0
  %v133 = vadd.f32 0.0, %v132
  %v134 = vpop.f32.mrb[0].mxu0
  %v135 = vpop.f32.mrb[0].mxu0
  %v136 = vadd.f32 0.0, %v135
  %v137 = vpop.f32.mrb[0].mxu0
  %138 = vdwg.mxu0
  %v139 = vadd.f32 %v26, %v133
  %v140 = vadd.f32 %v27, %v136
  %141 = vst [vmem:[#allocation2] sm:$0xff] %v139
  %142 = vst [vmem:[#allocation2 + $0x8] sm:$0xff] %v140
  // Predicated region
  $region22: #{vit_feature_extractor.15} parent=0 // pred_check
    %p143 = pneg %p18
  $region23: #{vit_feature_extractor.15} parent=0 // pred_check_branch
    %145 = sbr.rel (%p143) target = $region25
  $region24: #{vit_feature_extractor.15} parent=0 // pred_region
    %v146 = vld [vmem:[#allocation2] sm:$0xff]
    %v147 = vld [vmem:[#allocation2 + $0x8] sm:$0xff]
    %v148 = vld [vmem:[%s2] sm:$0x1]
    %v149 = vunpack.c.l.bf16 %v148
    %v150 = vlaneseq
    %v151 = vshrl.u32 %v150, 7
    %v152 = vsub.s32 0, %v151
    %v153 = vrot.slane %v149, %v152
    %v154 = vadd.f32 %v146, %v153
    %v155 = vadd.f32 %v147, %v153
    %v156 = vld [vmem:[%s3] sm:$0xf]
    %v157 = vld [vmem:[%s3 + $0x4] sm:$0xf]
    %v158 = vunpack.c.l.bf16 %v156
    %v159 = vunpack.c.l.bf16 %v157
    %v160 = vadd.f32 %v154, %v158
    %v161 = vadd.f32 %v155, %v159
    %v162 = vpack.c.bf16 %v161, %v160
    %v164 = vunpack.c.l.b16 %v162
    %v165 = vunpack.c.h.b16 %v162
    %v166 = vpack.c.b16 %v164, %v164
    %v167 = vpack.c.b16 %v165, %v165
    %170 = vst [vmem:[%s4] sm:$0xf] %v166
    %171 = vst [vmem:[%s4 + $0x4] sm:$0xf] %v167
  $region25: #{vit_feature_extractor.15} parent=0 // pred_fallthru
    _
  // Predicated region
  $region26: #{vit_feature_extractor.15} parent=0 // pred_check
    _
  $region27: #{vit_feature_extractor.15} parent=0 // pred_check_branch
    %173 = sbr.rel (0) target = $region29
  $region28: #{vit_feature_extractor.15} parent=0 // pred_region
    _
  $region29: #{vit_feature_extractor.15} parent=0 // pred_fallthru
    _
  // Predicated region
  $region30: #{vit_feature_extractor.15} parent=0 // pred_check
    _
  $region31: #{vit_feature_extractor.15} parent=0 // pred_check_branch
    %175 = sbr.rel (0) target = $region33
  $region32: #{vit_feature_extractor.15} parent=0 // pred_region
    _
  $region33: #{vit_feature_extractor.15} parent=0 // pred_fallthru
    _

// kernel: vit_feature_extractor.17
$region0: #{vit_feature_extractor.17}
  #allocation0 [shape = 'u32[]', space=smem, size = 0x4, offset = 0x4, fixed_abs, tag = 'smem constant byte address 0x4 - core index']
  #allocation1 [shape = 'u32[144,128]{1,0:T(1,128)}', space=vmem, size = 0x12000, scoped, tag = 'internal scratch']
  #allocation2 [shape = 'f32[16,128]{1,0:T(8,128)}', space=vmem, size = 0x2000, scoped, tag = 'scratch operand']
  %s0 = inlined_call_operand.vmem [shape: bf16[16,256], index: 0, kind: input, shape index: {}]
  %s1 = inlined_call_operand.vmem [shape: bf16[256,128], index: 1, kind: input, shape index: {}]
  %s2 = inlined_call_operand.vmem [shape: bf16[1,128], index: 2, kind: input, shape index: {}]
  %s3 = inlined_call_operand.vmem [shape: bf16[16,128], index: 3, kind: input, shape index: {}]
  %s4 = inlined_call_operand.vmem [shape: bf16[16,128], index: 4, kind: output, shape index: {}]
  %s5 = sld [smem:[#allocation0]]
  $region34: #{vit_feature_extractor.17} parent=0
    _
  %s7 = ssub.s32 1, %s5
  %s8 = scalar_select 0, %s7, %s5
  // Predicated region
  $region2: #{vit_feature_extractor.17} parent=0 // pred_check
    _
  $region3: #{vit_feature_extractor.17} parent=0 // pred_check_branch
    %10 = sbr.rel (0) target = $region5
  $region4: #{vit_feature_extractor.17} parent=0 // pred_region
    _
  $region5: #{vit_feature_extractor.17} parent=0 // pred_fallthru
    _
  // Predicated region
  $region6: #{vit_feature_extractor.17} parent=0 // pred_check
    _
  $region7: #{vit_feature_extractor.17} parent=0 // pred_check_branch
    %12 = sbr.rel (0) target = $region9
  $region8: #{vit_feature_extractor.17} parent=0 // pred_region
    _
  $region9: #{vit_feature_extractor.17} parent=0 // pred_fallthru
    _
  // Predicated region
  $region10: #{vit_feature_extractor.17} parent=0 // pred_check
    _
  $region11: #{vit_feature_extractor.17} parent=0 // pred_check_branch
    %14 = sbr.rel (0) target = $region13
  $region12: #{vit_feature_extractor.17} parent=0 // pred_region
    _
  $region13: #{vit_feature_extractor.17} parent=0 // pred_fallthru
    _
  // Predicated region
  $region14: #{vit_feature_extractor.17} parent=0 // pred_check
    _
  $region15: #{vit_feature_extractor.17} parent=0 // pred_check_branch
    %16 = sbr.rel (0) target = $region17
  $region16: #{vit_feature_extractor.17} parent=0 // pred_region
    _
  $region17: #{vit_feature_extractor.17} parent=0 // pred_fallthru
    _
  %p18 = scmp.eq.s32.totalorder 0, 0
  // Predicated region
  $region18: #{vit_feature_extractor.17} parent=0 // pred_check
    %p19 = pneg %p18
  $region19: #{vit_feature_extractor.17} parent=0 // pred_check_branch
    %21 = sbr.rel (%p19) target = $region21
  $region20: #{vit_feature_extractor.17} parent=0 // pred_region
    %22 = vst [vmem:[#allocation2] sm:$0xff] 0.0
    %23 = vst [vmem:[#allocation2 + $0x8] sm:$0xff] 0.0
  $region21: #{vit_feature_extractor.17} parent=0 // pred_fallthru
    _
  %v24 = vld [vmem:[%s0] sm:$0xff]
  %v25 = vld [vmem:[%s0 + $0x8] sm:$0xff]
  %v26 = vld [vmem:[#allocation2] sm:$0xff]
  %v27 = vld [vmem:[#allocation2 + $0x8] sm:$0xff]
  %v28 = vld [vmem:[%s1] sm:$0xf]
  %v29 = vld [vmem:[%s1 + $0x4] sm:$0xf]
  %v30 = vld [vmem:[%s1 + $0x8] sm:$0xf]
  %v31 = vld [vmem:[%s1 + $0xc] sm:$0xf]
  %v32 = vld [vmem:[%s1 + $0x10] sm:$0xf]
  %v33 = vld [vmem:[%s1 + $0x14] sm:$0xf]
  %v34 = vld [vmem:[%s1 + $0x18] sm:$0xf]
  %v35 = vld [vmem:[%s1 + $0x1c] sm:$0xf]
  %v36 = vld [vmem:[%s1 + $0x20] sm:$0xf]
  %v37 = vld [vmem:[%s1 + $0x24] sm:$0xf]
  %v38 = vld [vmem:[%s1 + $0x28] sm:$0xf]
  %v39 = vld [vmem:[%s1 + $0x2c] sm:$0xf]
  %v40 = vld [vmem:[%s1 + $0x30] sm:$0xf]
  %v41 = vld [vmem:[%s1 + $0x34] sm:$0xf]
  %v42 = vld [vmem:[%s1 + $0x38] sm:$0xf]
  %v43 = vld [vmem:[%s1 + $0x3c] sm:$0xf]
  %v44 = vld [vmem:[%s1 + $0x40] sm:$0xf]
  %v45 = vld [vmem:[%s1 + $0x44] sm:$0xf]
  %v46 = vld [vmem:[%s1 + $0x48] sm:$0xf]
  %v47 = vld [vmem:[%s1 + $0x4c] sm:$0xf]
  %v48 = vld [vmem:[%s1 + $0x50] sm:$0xf]
  %v49 = vld [vmem:[%s1 + $0x54] sm:$0xf]
  %v50 = vld [vmem:[%s1 + $0x58] sm:$0xf]
  %v51 = vld [vmem:[%s1 + $0x5c] sm:$0xf]
  %v52 = vld [vmem:[%s1 + $0x60] sm:$0xf]
  %v53 = vld [vmem:[%s1 + $0x64] sm:$0xf]
  %v54 = vld [vmem:[%s1 + $0x68] sm:$0xf]
  %v55 = vld [vmem:[%s1 + $0x6c] sm:$0xf]
  %v56 = vld [vmem:[%s1 + $0x70] sm:$0xf]
  %v57 = vld [vmem:[%s1 + $0x74] sm:$0xf]
  %v58 = vld [vmem:[%s1 + $0x78] sm:$0xf]
  %v59 = vld [vmem:[%s1 + $0x7c] sm:$0xf]
  %v62 = vunpack.c.l.b16 %v24
  %v63 = vunpack.c.h.b16 %v24
  %v64 = vunpack.c.l.b16 %v25
  %v65 = vunpack.c.h.b16 %v25
  %v66 = vpack.c.b16 %v64, %v62
  %v67 = vpack.c.b16 %v65, %v63
  %v102 = vunpack.c.l.b16 %v28
  %v103 = vunpack.c.l.b16 %v29
  %v104 = vunpack.c.l.b16 %v30
  %v105 = vunpack.c.l.b16 %v31
  %v106 = vunpack.c.l.b16 %v32
  %v107 = vunpack.c.l.b16 %v33
  %v108 = vunpack.c.l.b16 %v34
  %v109 = vunpack.c.l.b16 %v35
  %v110 = vunpack.c.l.b16 %v36
  %v111 = vunpack.c.l.b16 %v37
  %v112 = vunpack.c.l.b16 %v38
  %v113 = vunpack.c.l.b16 %v39
  %v114 = vunpack.c.l.b16 %v40
  %v115 = vunpack.c.l.b16 %v41
  %v116 = vunpack.c.l.b16 %v42
  %v117 = vunpack.c.l.b16 %v43
  %v118 = vunpack.c.l.b16 %v44
  %v119 = vunpack.c.l.b16 %v45
  %v120 = vunpack.c.l.b16 %v46
  %v121 = vunpack.c.l.b16 %v47
  %v122 = vunpack.c.l.b16 %v48
  %v123 = vunpack.c.l.b16 %v49
  %v124 = vunpack.c.l.b16 %v50
  %v125 = vunpack.c.l.b16 %v51
  %v126 = vunpack.c.l.b16 %v52
  %v127 = vunpack.c.l.b16 %v53
  %v128 = vunpack.c.l.b16 %v54
  %v129 = vunpack.c.l.b16 %v55
  %v130 = vunpack.c.l.b16 %v56
  %v131 = vunpack.c.l.b16 %v57
  %v132 = vunpack.c.l.b16 %v58
  %v133 = vunpack.c.l.b16 %v59
  %v134 = vpack.c.b16 %v103, %v102
  %v135 = vpack.c.b16 %v105, %v104
  %v136 = vpack.c.b16 %v107, %v106
  %v137 = vpack.c.b16 %v109, %v108
  %v138 = vpack.c.b16 %v111, %v110
  %v139 = vpack.c.b16 %v113, %v112
  %v140 = vpack.c.b16 %v115, %v114
  %v141 = vpack.c.b16 %v117, %v116
  %v142 = vpack.c.b16 %v119, %v118
  %v143 = vpack.c.b16 %v121, %v120
  %v144 = vpack.c.b16 %v123, %v122
  %v145 = vpack.c.b16 %v125, %v124
  %v146 = vpack.c.b16 %v127, %v126
  %v147 = vpack.c.b16 %v129, %v128
  %v148 = vpack.c.b16 %v131, %v130
  %v149 = vpack.c.b16 %v133, %v132
  %166 = vmatprep.subr.bf16.mxu0 0
  %167 = vmatpush1.bf16.msra.mxu0 %v134
  %168 = vmatprep.subr.bf16.mxu0 0
  %169 = vmatpush1.bf16.msra.mxu0 %v135
  %170 = vmatprep.subr.bf16.mxu0 0
  %171 = vmatpush1.bf16.msra.mxu0 %v136
  %172 = vmatprep.subr.bf16.mxu0 0
  %173 = vmatpush1.bf16.msra.mxu0 %v137
  %174 = vmatprep.subr.bf16.mxu0 0
  %175 = vmatpush1.bf16.msra.mxu0 %v138
  %176 = vmatprep.subr.bf16.mxu0 0
  %177 = vmatpush1.bf16.msra.mxu0 %v139
  %178 = vmatprep.subr.bf16.mxu0 0
  %179 = vmatpush1.bf16.msra.mxu0 %v140
  %180 = vmatprep.subr.bf16.mxu0 0
  %181 = vmatpush1.bf16.msra.mxu0 %v141
  %182 = vmatprep.subr.bf16.mxu0 0
  %183 = vmatpush1.bf16.msra.mxu0 %v142
  %184 = vmatprep.subr.bf16.mxu0 0
  %185 = vmatpush1.bf16.msra.mxu0 %v143
  %186 = vmatprep.subr.bf16.mxu0 0
  %187 = vmatpush1.bf16.msra.mxu0 %v144
  %188 = vmatprep.subr.bf16.mxu0 0
  %189 = vmatpush1.bf16.msra.mxu0 %v145
  %190 = vmatprep.subr.bf16.mxu0 0
  %191 = vmatpush1.bf16.msra.mxu0 %v146
  %192 = vmatprep.subr.bf16.mxu0 0
  %193 = vmatpush1.bf16.msra.mxu0 %v147
  %194 = vmatprep.subr.bf16.mxu0 0
  %195 = vmatpush1.bf16.msra.mxu0 %v148
  %196 = vmatprep.subr.bf16.mxu0 0
  %197 = vmatpush1.bf16.msra.mxu0 %v149
  %198 = vmatprep.mubr.bf16.mxu0 %v67
  %199 = vmatmul.mubr.bf16.gmra.mrb[0].mxu0 %v66
  %v200 = vpop.f32.mrb[0].mxu0
  %v201 = vadd.f32 0.0, %v200
  %v202 = vpop.f32.mrb[0].mxu0
  %v203 = vpop.f32.mrb[0].mxu0
  %v204 = vadd.f32 0.0, %v203
  %v205 = vpop.f32.mrb[0].mxu0
  %206 = vdwg.mxu0
  %v207 = vadd.f32 %v26, %v201
  %v208 = vadd.f32 %v27, %v204
  %209 = vst [vmem:[#allocation2] sm:$0xff] %v207
  %210 = vst [vmem:[#allocation2 + $0x8] sm:$0xff] %v208
  // Predicated region
  $region22: #{vit_feature_extractor.17} parent=0 // pred_check
    %p211 = pneg %p18
  $region23: #{vit_feature_extractor.17} parent=0 // pred_check_branch
    %213 = sbr.rel (%p211) target = $region25
  $region24: #{vit_feature_extractor.17} parent=0 // pred_region
    %v214 = vld [vmem:[#allocation2] sm:$0xff]
    %v215 = vld [vmem:[#allocation2 + $0x8] sm:$0xff]
    %v216 = vld [vmem:[%s2] sm:$0x1]
    %v217 = vunpack.c.l.bf16 %v216
    %v218 = vlaneseq
    %v219 = vshrl.u32 %v218, 7
    %v220 = vsub.s32 0, %v219
    %v221 = vrot.slane %v217, %v220
    %v222 = vadd.f32 %v214, %v221
    %v223 = vadd.f32 %v215, %v221
    %v224 = vld [vmem:[%s3] sm:$0xf]
    %v225 = vld [vmem:[%s3 + $0x4] sm:$0xf]
    %v226 = vunpack.c.l.bf16 %v224
    %v227 = vunpack.c.l.bf16 %v225
    %v228 = vadd.f32 %v222, %v226
    %v229 = vadd.f32 %v223, %v227
    %v230 = vpack.c.bf16 %v229, %v228
    %v232 = vunpack.c.l.b16 %v230
    %v233 = vunpack.c.h.b16 %v230
    %v234 = vpack.c.b16 %v232, %v232
    %v235 = vpack.c.b16 %v233, %v233
    %238 = vst [vmem:[%s4] sm:$0xf] %v234
    %239 = vst [vmem:[%s4 + $0x4] sm:$0xf] %v235
  $region25: #{vit_feature_extractor.17} parent=0 // pred_fallthru
    _
  // Predicated region
  $region26: #{vit_feature_extractor.17} parent=0 // pred_check
    _
  $region27: #{vit_feature_extractor.17} parent=0 // pred_check_branch
    %241 = sbr.rel (0) target = $region29
  $region28: #{vit_feature_extractor.17} parent=0 // pred_region
    _
  $region29: #{vit_feature_extractor.17} parent=0 // pred_fallthru
    _
  // Predicated region
  $region30: #{vit_feature_extractor.17} parent=0 // pred_check
    _
  $region31: #{vit_feature_extractor.17} parent=0 // pred_check_branch
    %243 = sbr.rel (0) target = $region33
  $region32: #{vit_feature_extractor.17} parent=0 // pred_region
    _
  $region33: #{vit_feature_extractor.17} parent=0 // pred_fallthru
    _

// kernel: vit_feature_extractor.23
$region0: #{vit_feature_extractor.23}
  #allocation0 [shape = 'u32[]', space=smem, size = 0x4, offset = 0x4, fixed_abs, tag = 'smem constant byte address 0x4 - core index']
  #allocation1 [shape = 'u32[144,128]{1,0:T(1,128)}', space=vmem, size = 0x12000, scoped, tag = 'internal scratch']
  #allocation2 [shape = 'f32[8,64]{1,0:T(8,128)}', space=vmem, size = 0x1000, scoped, tag = 'scratch operand']
  #allocation3 [shape = 'bf16[8,128]{1,0:T(8,128)(2,1)}', space=vmem, size = 0x800, scoped, tag = 'scratch operand']
  %s0 = inlined_call_operand.vmem [shape: bf16[8,128], index: 0, kind: input, shape index: {}]
  %s1 = inlined_call_operand.vmem [shape: bf16[128,64], index: 1, kind: input, shape index: {}]
  %s2 = inlined_call_operand.vmem [shape: bf16[1,128], index: 2, kind: input, shape index: {}]
  %s3 = inlined_call_operand.vmem [shape: bf16[1,128], index: 3, kind: input, shape index: {}]
  %s4 = inlined_call_operand.vmem [shape: bf16[1,64], index: 4, kind: input, shape index: {}]
  %s5 = inlined_call_operand.vmem [shape: f32[8,64], index: 5, kind: output, shape index: {}]
  %s6 = sld [smem:[#allocation0]]
  $region42: #{vit_feature_extractor.23} parent=0
    _
  %s8 = ssub.s32 1, %s6
  %s9 = scalar_select 0, %s8, %s6
  // Predicated region
  $region2: #{vit_feature_extractor.23} parent=0 // pred_check
    _
  $region3: #{vit_feature_extractor.23} parent=0 // pred_check_branch
    %11 = sbr.rel (0) target = $region5
  $region4: #{vit_feature_extractor.23} parent=0 // pred_region
    _
  $region5: #{vit_feature_extractor.23} parent=0 // pred_fallthru
    _
  // Predicated region
  $region6: #{vit_feature_extractor.23} parent=0 // pred_check
    _
  $region7: #{vit_feature_extractor.23} parent=0 // pred_check_branch
    %13 = sbr.rel (0) target = $region9
  $region8: #{vit_feature_extractor.23} parent=0 // pred_region
    _
  $region9: #{vit_feature_extractor.23} parent=0 // pred_fallthru
    _
  // Predicated region
  $region10: #{vit_feature_extractor.23} parent=0 // pred_check
    _
  $region11: #{vit_feature_extractor.23} parent=0 // pred_check_branch
    %15 = sbr.rel (0) target = $region13
  $region12: #{vit_feature_extractor.23} parent=0 // pred_region
    _
  $region13: #{vit_feature_extractor.23} parent=0 // pred_fallthru
    _
  // Predicated region
  $region14: #{vit_feature_extractor.23} parent=0 // pred_check
    _
  $region15: #{vit_feature_extractor.23} parent=0 // pred_check_branch
    %17 = sbr.rel (0) target = $region17
  $region16: #{vit_feature_extractor.23} parent=0 // pred_region
    _
  $region17: #{vit_feature_extractor.23} parent=0 // pred_fallthru
    _
  // Predicated region
  $region18: #{vit_feature_extractor.23} parent=0 // pred_check
    _
  $region19: #{vit_feature_extractor.23} parent=0 // pred_check_branch
    %19 = sbr.rel (0) target = $region21
  $region20: #{vit_feature_extractor.23} parent=0 // pred_region
    _
  $region21: #{vit_feature_extractor.23} parent=0 // pred_fallthru
    _
  %p21 = scmp.eq.s32.totalorder 0, 0
  // Predicated region
  $region22: #{vit_feature_extractor.23} parent=0 // pred_check
    %p22 = pneg %p21
  $region23: #{vit_feature_extractor.23} parent=0 // pred_check_branch
    %24 = sbr.rel (%p22) target = $region25
  $region24: #{vit_feature_extractor.23} parent=0 // pred_region
    %vm25 = vcmask 523264
    %26 = vst.msk [vmem:[#allocation2] sm:$0xff] %vm25, 0.0
  $region25: #{vit_feature_extractor.23} parent=0 // pred_fallthru
    _
  %p27 = scmp.eq.s32.totalorder 0, 0
  // Predicated region
  $region26: #{vit_feature_extractor.23} parent=0 // pred_check
    %p28 = pneg %p27
  $region27: #{vit_feature_extractor.23} parent=0 // pred_check_branch
    %30 = sbr.rel (%p28) target = $region29
  $region28: #{vit_feature_extractor.23} parent=0 // pred_region
    %v31 = vld [vmem:[%s0] sm:$0xf]
    %v32 = vunpack.c.l.bf16 %v31
    %33 = vadd.xlane.f32.xlu0 %v32
    %v34 = vpop.xlane.xlu0 %33
    %v35 = vrcp.pop 128.0
    %v36 = vmul.f32 %v34, %v35
    %v37 = vsub.f32 %v32, %v36
    %v38 = vmul.f32 %v37, %v37
    %39 = vadd.xlane.f32.xlu0 %v38
    %v40 = vpop.xlane.xlu0 %39
    %v41 = vmul.f32 %v40, %v35
    %v42 = vadd.f32 %v41, 1e-05
    %v43 = vrsqrt.pop %v42
    %v44 = vmul.f32 %v37, %v43
    %v45 = vld [vmem:[%s2] sm:$0x1]
    %v46 = vunpack.c.l.bf16 %v45
    %v47 = vlaneseq
    %v48 = vshrl.u32 %v47, 7
    %v49 = vsub.s32 0, %v48
    %v50 = vrot.slane %v46, %v49
    %v51 = vmul.f32 %v44, %v50
    %v52 = vld [vmem:[%s3] sm:$0x1]
    %v53 = vunpack.c.l.bf16 %v52
    %v54 = vlaneseq
    %v55 = vshrl.u32 %v54, 7
    %v56 = vsub.s32 0, %v55
    %v57 = vrot.slane %v53, %v56
    %v58 = vadd.f32 %v51, %v57
    %v59 = vpack.c.bf16 %v58, %v58
    %60 = vst [vmem:[#allocation3] sm:$0xf] %v59
  $region29: #{vit_feature_extractor.23} parent=0 // pred_fallthru
    _
  %v61 = vld [vmem:[#allocation3] sm:$0xf]
  %v62 = vld [vmem:[#allocation2] sm:$0xff]
  %v63 = vld [vmem:[%s1] sm:$0xf]
  %v64 = vld [vmem:[%s1 + $0x4] sm:$0xf]
  %v65 = vld [vmem:[%s1 + $0x8] sm:$0xf]
  %v66 = vld [vmem:[%s1 + $0xc] sm:$0xf]
  %v67 = vld [vmem:[%s1 + $0x10] sm:$0xf]
  %v68 = vld [vmem:[%s1 + $0x14] sm:$0xf]
  %v69 = vld [vmem:[%s1 + $0x18] sm:$0xf]
  %v70 = vld [vmem:[%s1 + $0x1c] sm:$0xf]
  %v71 = vld [vmem:[%s1 + $0x20] sm:$0xf]
  %v72 = vld [vmem:[%s1 + $0x24] sm:$0xf]
  %v73 = vld [vmem:[%s1 + $0x28] sm:$0xf]
  %v74 = vld [vmem:[%s1 + $0x2c] sm:$0xf]
  %v75 = vld [vmem:[%s1 + $0x30] sm:$0xf]
  %v76 = vld [vmem:[%s1 + $0x34] sm:$0xf]
  %v77 = vld [vmem:[%s1 + $0x38] sm:$0xf]
  %v78 = vld [vmem:[%s1 + $0x3c] sm:$0xf]
  %v95 = vunpack.c.l.b16 %v63
  %v96 = vunpack.c.l.b16 %v64
  %v97 = vunpack.c.l.b16 %v65
  %v98 = vunpack.c.l.b16 %v66
  %v99 = vunpack.c.l.b16 %v67
  %v100 = vunpack.c.l.b16 %v68
  %v101 = vunpack.c.l.b16 %v69
  %v102 = vunpack.c.l.b16 %v70
  %v103 = vunpack.c.l.b16 %v71
  %v104 = vunpack.c.l.b16 %v72
  %v105 = vunpack.c.l.b16 %v73
  %v106 = vunpack.c.l.b16 %v74
  %v107 = vunpack.c.l.b16 %v75
  %v108 = vunpack.c.l.b16 %v76
  %v109 = vunpack.c.l.b16 %v77
  %v110 = vunpack.c.l.b16 %v78
  %v111 = vpack.c.b16 %v96, %v95
  %v112 = vpack.c.b16 %v98, %v97
  %v113 = vpack.c.b16 %v100, %v99
  %v114 = vpack.c.b16 %v102, %v101
  %v115 = vpack.c.b16 %v104, %v103
  %v116 = vpack.c.b16 %v106, %v105
  %v117 = vpack.c.b16 %v108, %v107
  %v118 = vpack.c.b16 %v110, %v109
  %127 = vmatprep.subr.bf16.mxu0 0
  %128 = vmatpush1.bf16.msra.mxu0 %v111
  %129 = vmatprep.subr.bf16.mxu0 0
  %130 = vmatpush1.bf16.msra.mxu0 %v112
  %131 = vmatprep.subr.bf16.mxu0 0
  %132 = vmatpush1.bf16.msra.mxu0 %v113
  %133 = vmatprep.subr.bf16.mxu0 0
  %134 = vmatpush1.bf16.msra.mxu0 %v114
  %135 = vmatprep.subr.bf16.mxu0 0
  %136 = vmatpush1.bf16.msra.mxu0 %v115
  %137 = vmatprep.subr.bf16.mxu0 0
  %138 = vmatpush1.bf16.msra.mxu0 %v116
  %139 = vmatprep.subr.bf16.mxu0 0
  %140 = vmatpush1.bf16.msra.mxu0 %v117
  %141 = vmatprep.subr.bf16.mxu0 0
  %142 = vmatpush1.bf16.msra.mxu0 %v118
  %143 = vmatprep.subr.bf16.mxu0 0
  %144 = vmatpush1.bf16.msra.mxu0 0
  %145 = vmatprep.subr.bf16.mxu0 0
  %146 = vmatpush1.bf16.msra.mxu0 0
  %147 = vmatprep.subr.bf16.mxu0 0
  %148 = vmatpush1.bf16.msra.mxu0 0
  %149 = vmatprep.subr.bf16.mxu0 0
  %150 = vmatpush1.bf16.msra.mxu0 0
  %151 = vmatprep.subr.bf16.mxu0 0
  %152 = vmatpush1.bf16.msra.mxu0 0
  %153 = vmatprep.subr.bf16.mxu0 0
  %154 = vmatpush1.bf16.msra.mxu0 0
  %155 = vmatprep.subr.bf16.mxu0 0
  %156 = vmatpush1.bf16.msra.mxu0 0
  %157 = vmatprep.subr.bf16.mxu0 0
  %158 = vmatpush1.bf16.msra.mxu0 0
  %159 = vmatprep.mubr.bf16.mxu0 0
  %160 = vmatmul.mubr.bf16.gmra.mrb[0].mxu0 %v61
  %v161 = vpop.f32.mrb[0].mxu0
  %v162 = vadd.f32 0.0, %v161
  %v163 = vpop.f32.mrb[0].mxu0
  %v164 = vpop.f32.mrb[0].mxu0
  %v165 = vpop.f32.mrb[0].mxu0
  %166 = vdwg.mxu0
  %v167 = vadd.f32 %v62, %v162
  %vm168 = vcmask 523264
  %169 = vst.msk [vmem:[#allocation2] sm:$0xff] %vm168, %v167
  // Predicated region
  $region30: #{vit_feature_extractor.23} parent=0 // pred_check
    %p170 = pneg %p21
  $region31: #{vit_feature_extractor.23} parent=0 // pred_check_branch
    %172 = sbr.rel (%p170) target = $region33
  $region32: #{vit_feature_extractor.23} parent=0 // pred_region
    %v173 = vld [vmem:[#allocation2] sm:$0xff]
    %v174 = vld [vmem:[%s4] sm:$0x1]
    %v175 = vunpack.c.l.bf16 %v174
    %v176 = vlaneseq
    %v177 = vshrl.u32 %v176, 7
    %v178 = vsub.s32 0, %v177
    %v179 = vrot.slane %v175, %v178
    %v180 = vadd.f32 %v173, %v179
    %181 = vst.msk [vmem:[%s5] sm:$0xff] %vm168, %v180
  $region33: #{vit_feature_extractor.23} parent=0 // pred_fallthru
    _
  // Predicated region
  $region34: #{vit_feature_extractor.23} parent=0 // pred_check
    _
  $region35: #{vit_feature_extractor.23} parent=0 // pred_check_branch
    %183 = sbr.rel (0) target = $region37
  $region36: #{vit_feature_extractor.23} parent=0 // pred_region
    _
  $region37: #{vit_feature_extractor.23} parent=0 // pred_fallthru
    _
  // Predicated region
  $region38: #{vit_feature_extractor.23} parent=0 // pred_check
    _
  $region39: #{vit_feature_extractor.23} parent=0 // pred_check_branch
    %185 = sbr.rel (0) target = $region41
  $region40: #{vit_feature_extractor.23} parent=0 // pred_region
    _
  $region41: #{vit_feature_extractor.23} parent=0 // pred_fallthru
    _

// kernel: vit_feature_extractor.16
$region0: #{vit_feature_extractor.16}
  #allocation0 [shape = 'u32[]', space=smem, size = 0x4, offset = 0x4, fixed_abs, tag = 'smem constant byte address 0x4 - core index']
  #allocation1 [shape = 'u32[144,128]{1,0:T(1,128)}', space=vmem, size = 0x12000, scoped, tag = 'internal scratch']
  #allocation2 [shape = 'f32[16,256]{1,0:T(8,128)}', space=vmem, size = 0x4000, scoped, tag = 'scratch operand']
  #allocation3 [shape = 'bf16[16,128]{1,0:T(16,128)(2,1)}', space=vmem, size = 0x1000, scoped, tag = 'scratch operand']
  %s0 = inlined_call_operand.vmem [shape: bf16[16,128], index: 0, kind: input, shape index: {}]
  %s1 = inlined_call_operand.vmem [shape: bf16[128,256], index: 1, kind: input, shape index: {}]
  %s2 = inlined_call_operand.vmem [shape: bf16[1,128], index: 2, kind: input, shape index: {}]
  %s3 = inlined_call_operand.vmem [shape: bf16[1,128], index: 3, kind: input, shape index: {}]
  %s4 = inlined_call_operand.vmem [shape: bf16[1,256], index: 4, kind: input, shape index: {}]
  %s5 = inlined_call_operand.vmem [shape: bf16[16,256], index: 5, kind: output, shape index: {}]
  %s6 = sld [smem:[#allocation0]]
  $region42: #{vit_feature_extractor.16} parent=0
    _
  %s8 = ssub.s32 1, %s6
  %s9 = scalar_select 0, %s8, %s6
  // Predicated region
  $region2: #{vit_feature_extractor.16} parent=0 // pred_check
    _
  $region3: #{vit_feature_extractor.16} parent=0 // pred_check_branch
    %11 = sbr.rel (0) target = $region5
  $region4: #{vit_feature_extractor.16} parent=0 // pred_region
    _
  $region5: #{vit_feature_extractor.16} parent=0 // pred_fallthru
    _
  // Predicated region
  $region6: #{vit_feature_extractor.16} parent=0 // pred_check
    _
  $region7: #{vit_feature_extractor.16} parent=0 // pred_check_branch
    %13 = sbr.rel (0) target = $region9
  $region8: #{vit_feature_extractor.16} parent=0 // pred_region
    _
  $region9: #{vit_feature_extractor.16} parent=0 // pred_fallthru
    _
  // Predicated region
  $region10: #{vit_feature_extractor.16} parent=0 // pred_check
    _
  $region11: #{vit_feature_extractor.16} parent=0 // pred_check_branch
    %15 = sbr.rel (0) target = $region13
  $region12: #{vit_feature_extractor.16} parent=0 // pred_region
    _
  $region13: #{vit_feature_extractor.16} parent=0 // pred_fallthru
    _
  // Predicated region
  $region14: #{vit_feature_extractor.16} parent=0 // pred_check
    _
  $region15: #{vit_feature_extractor.16} parent=0 // pred_check_branch
    %17 = sbr.rel (0) target = $region17
  $region16: #{vit_feature_extractor.16} parent=0 // pred_region
    _
  $region17: #{vit_feature_extractor.16} parent=0 // pred_fallthru
    _
  // Predicated region
  $region18: #{vit_feature_extractor.16} parent=0 // pred_check
    _
  $region19: #{vit_feature_extractor.16} parent=0 // pred_check_branch
    %19 = sbr.rel (0) target = $region21
  $region20: #{vit_feature_extractor.16} parent=0 // pred_region
    _
  $region21: #{vit_feature_extractor.16} parent=0 // pred_fallthru
    _
  %p21 = scmp.eq.s32.totalorder 0, 0
  // Predicated region
  $region22: #{vit_feature_extractor.16} parent=0 // pred_check
    %p22 = pneg %p21
  $region23: #{vit_feature_extractor.16} parent=0 // pred_check_branch
    %24 = sbr.rel (%p22) target = $region25
  $region24: #{vit_feature_extractor.16} parent=0 // pred_region
    %25 = vst [vmem:[#allocation2] sm:$0xff] 0.0
    %26 = vst [vmem:[#allocation2 + $0x8] sm:$0xff] 0.0
    %27 = vst [vmem:[#allocation2 + $0x10] sm:$0xff] 0.0
    %28 = vst [vmem:[#allocation2 + $0x18] sm:$0xff] 0.0
  $region25: #{vit_feature_extractor.16} parent=0 // pred_fallthru
    _
  %p29 = scmp.eq.s32.totalorder 0, 0
  // Predicated region
  $region26: #{vit_feature_extractor.16} parent=0 // pred_check
    %p30 = pneg %p29
  $region27: #{vit_feature_extractor.16} parent=0 // pred_check_branch
    %32 = sbr.rel (%p30) target = $region29
  $region28: #{vit_feature_extractor.16} parent=0 // pred_region
    %v33 = vld [vmem:[%s0] sm:$0xf]
    %v34 = vld [vmem:[%s0 + $0x4] sm:$0xf]
    %v35 = vunpack.c.l.bf16 %v33
    %v36 = vunpack.c.l.bf16 %v34
    %37 = vadd.xlane.f32.xlu0 %v35
    %v38 = vpop.xlane.xlu0 %37
    %39 = vadd.xlane.f32.xlu0 %v36
    %v40 = vpop.xlane.xlu0 %39
    %v41 = vrcp.pop 128.0
    %v42 = vmul.f32 %v38, %v41
    %v43 = vmul.f32 %v40, %v41
    %v44 = vsub.f32 %v35, %v42
    %v45 = vsub.f32 %v36, %v43
    %v46 = vmul.f32 %v44, %v44
    %v47 = vmul.f32 %v45, %v45
    %48 = vadd.xlane.f32.xlu0 %v46
    %v49 = vpop.xlane.xlu0 %48
    %50 = vadd.xlane.f32.xlu0 %v47
    %v51 = vpop.xlane.xlu0 %50
    %v52 = vmul.f32 %v49, %v41
    %v53 = vmul.f32 %v51, %v41
    %v54 = vadd.f32 %v52, 1e-05
    %v55 = vadd.f32 %v53, 1e-05
    %v56 = vrsqrt.pop %v54
    %v57 = vrsqrt.pop %v55
    %v58 = vmul.f32 %v44, %v56
    %v59 = vmul.f32 %v45, %v57
    %v60 = vld [vmem:[%s2] sm:$0x1]
    %v61 = vunpack.c.l.bf16 %v60
    %v62 = vlaneseq
    %v63 = vshrl.u32 %v62, 7
    %v64 = vsub.s32 0, %v63
    %v65 = vrot.slane %v61, %v64
    %v66 = vmul.f32 %v58, %v65
    %v67 = vmul.f32 %v59, %v65
    %v68 = vld [vmem:[%s3] sm:$0x1]
    %v69 = vunpack.c.l.bf16 %v68
    %v70 = vlaneseq
    %v71 = vshrl.u32 %v70, 7
    %v72 = vsub.s32 0, %v71
    %v73 = vrot.slane %v69, %v72
    %v74 = vadd.f32 %v66, %v73
    %v75 = vadd.f32 %v67, %v73
    %v76 = vpack.c.bf16 %v75, %v74
    %77 = vst [vmem:[#allocation3] sm:$0xff] %v76
  $region29: #{vit_feature_extractor.16} parent=0 // pred_fallthru
    _
  %v78 = vld [vmem:[#allocation3] sm:$0xff]
  %v79 = vld [vmem:[#allocation2] sm:$0xff]
  %v80 = vld [vmem:[#allocation2 + $0x8] sm:$0xff]
  %v81 = vld [vmem:[#allocation2 + $0x10] sm:$0xff]
  %v82 = vld [vmem:[#allocation2 + $0x18] sm:$0xff]
  %v83 = vld [vmem:[%s1] sm:$0xff]
  %v84 = vld [vmem:[%s1 + $0x8] sm:$0xff]
  %v85 = vld [vmem:[%s1 + $0x10] sm:$0xff]
  %v86 = vld [vmem:[%s1 + $0x18] sm:$0xff]
  %v87 = vld [vmem:[%s1 + $0x20] sm:$0xff]
  %v88 = vld [vmem:[%s1 + $0x28] sm:$0xff]
  %v89 = vld [vmem:[%s1 + $0x30] sm:$0xff]
  %v90 = vld [vmem:[%s1 + $0x38] sm:$0xff]
  %v91 = vld [vmem:[%s1 + $0x40] sm:$0xff]
  %v92 = vld [vmem:[%s1 + $0x48] sm:$0xff]
  %v93 = vld [vmem:[%s1 + $0x50] sm:$0xff]
  %v94 = vld [vmem:[%s1 + $0x58] sm:$0xff]
  %v95 = vld [vmem:[%s1 + $0x60] sm:$0xff]
  %v96 = vld [vmem:[%s1 + $0x68] sm:$0xff]
  %v97 = vld [vmem:[%s1 + $0x70] sm:$0xff]
  %v98 = vld [vmem:[%s1 + $0x78] sm:$0xff]
  %v115 = vunpack.c.l.b16 %v83
  %v116 = vunpack.c.h.b16 %v83
  %v117 = vunpack.c.l.b16 %v84
  %v118 = vunpack.c.h.b16 %v84
  %v119 = vunpack.c.l.b16 %v85
  %v120 = vunpack.c.h.b16 %v85
  %v121 = vunpack.c.l.b16 %v86
  %v122 = vunpack.c.h.b16 %v86
  %v123 = vunpack.c.l.b16 %v87
  %v124 = vunpack.c.h.b16 %v87
  %v125 = vunpack.c.l.b16 %v88
  %v126 = vunpack.c.h.b16 %v88
  %v127 = vunpack.c.l.b16 %v89
  %v128 = vunpack.c.h.b16 %v89
  %v129 = vunpack.c.l.b16 %v90
  %v130 = vunpack.c.h.b16 %v90
  %v131 = vunpack.c.l.b16 %v91
  %v132 = vunpack.c.h.b16 %v91
  %v133 = vunpack.c.l.b16 %v92
  %v134 = vunpack.c.h.b16 %v92
  %v135 = vunpack.c.l.b16 %v93
  %v136 = vunpack.c.h.b16 %v93
  %v137 = vunpack.c.l.b16 %v94
  %v138 = vunpack.c.h.b16 %v94
  %v139 = vunpack.c.l.b16 %v95
  %v140 = vunpack.c.h.b16 %v95
  %v141 = vunpack.c.l.b16 %v96
  %v142 = vunpack.c.h.b16 %v96
  %v143 = vunpack.c.l.b16 %v97
  %v144 = vunpack.c.h.b16 %v97
  %v145 = vunpack.c.l.b16 %v98
  %v146 = vunpack.c.h.b16 %v98
  %v147 = vpack.c.b16 %v117, %v115
  %v148 = vpack.c.b16 %v118, %v116
  %v149 = vpack.c.b16 %v121, %v119
  %v150 = vpack.c.b16 %v122, %v120
  %v151 = vpack.c.b16 %v125, %v123
  %v152 = vpack.c.b16 %v126, %v124
  %v153 = vpack.c.b16 %v129, %v127
  %v154 = vpack.c.b16 %v130, %v128
  %v155 = vpack.c.b16 %v133, %v131
  %v156 = vpack.c.b16 %v134, %v132
  %v157 = vpack.c.b16 %v137, %v135
  %v158 = vpack.c.b16 %v138, %v136
  %v159 = vpack.c.b16 %v141, %v139
  %v160 = vpack.c.b16 %v142, %v140
  %v161 = vpack.c.b16 %v145, %v143
  %v162 = vpack.c.b16 %v146, %v144
  %179 = vmatprep.subr.bf16.mxu0 %v148
  %180 = vmatpush1.bf16.msra.mxu0 %v147
  %181 = vmatprep.subr.bf16.mxu0 %v150
  %182 = vmatpush1.bf16.msra.mxu0 %v149
  %183 = vmatprep.subr.bf16.mxu0 %v152
  %184 = vmatpush1.bf16.msra.mxu0 %v151
  %185 = vmatprep.subr.bf16.mxu0 %v154
  %186 = vmatpush1.bf16.msra.mxu0 %v153
  %187 = vmatprep.subr.bf16.mxu0 %v156
  %188 = vmatpush1.bf16.msra.mxu0 %v155
  %189 = vmatprep.subr.bf16.mxu0 %v158
  %190 = vmatpush1.bf16.msra.mxu0 %v157
  %191 = vmatprep.subr.bf16.mxu0 %v160
  %192 = vmatpush1.bf16.msra.mxu0 %v159
  %193 = vmatprep.subr.bf16.mxu0 %v162
  %194 = vmatpush1.bf16.msra.mxu0 %v161
  %195 = vmatprep.subr.bf16.mxu0 0
  %196 = vmatpush1.bf16.msra.mxu0 0
  %197 = vmatprep.subr.bf16.mxu0 0
  %198 = vmatpush1.bf16.msra.mxu0 0
  %199 = vmatprep.subr.bf16.mxu0 0
  %200 = vmatpush1.bf16.msra.mxu0 0
  %201 = vmatprep.subr.bf16.mxu0 0
  %202 = vmatpush1.bf16.msra.mxu0 0
  %203 = vmatprep.subr.bf16.mxu0 0
  %204 = vmatpush1.bf16.msra.mxu0 0
  %205 = vmatprep.subr.bf16.mxu0 0
  %206 = vmatpush1.bf16.msra.mxu0 0
  %207 = vmatprep.subr.bf16.mxu0 0
  %208 = vmatpush1.bf16.msra.mxu0 0
  %209 = vmatprep.subr.bf16.mxu0 0
  %210 = vmatpush1.bf16.msra.mxu0 0
  %211 = vmatprep.mubr.bf16.mxu0 0
  %212 = vmatmul.mubr.bf16.gmra.mrb[0].mxu0 %v78
  %v213 = vpop.f32.mrb[0].mxu0
  %v214 = vadd.f32 0.0, %v213
  %v215 = vpop.f32.mrb[0].mxu0
  %v216 = vadd.f32 0.0, %v215
  %v217 = vpop.f32.mrb[0].mxu0
  %v218 = vadd.f32 0.0, %v217
  %v219 = vpop.f32.mrb[0].mxu0
  %v220 = vadd.f32 0.0, %v219
  %221 = vdwg.mxu0
  %v222 = vadd.f32 %v79, %v214
  %v223 = vadd.f32 %v80, %v216
  %v224 = vadd.f32 %v81, %v218
  %v225 = vadd.f32 %v82, %v220
  %226 = vst [vmem:[#allocation2] sm:$0xff] %v222
  %227 = vst [vmem:[#allocation2 + $0x8] sm:$0xff] %v223
  %228 = vst [vmem:[#allocation2 + $0x10] sm:$0xff] %v224
  %229 = vst [vmem:[#allocation2 + $0x18] sm:$0xff] %v225
  // Predicated region
  $region30: #{vit_feature_extractor.16} parent=0 // pred_check
    %p230 = pneg %p21
  $region31: #{vit_feature_extractor.16} parent=0 // pred_check_branch
    %232 = sbr.rel (%p230) target = $region33
  $region32: #{vit_feature_extractor.16} parent=0 // pred_region
    %v233 = vld [vmem:[#allocation2] sm:$0xff]
    %v234 = vld [vmem:[#allocation2 + $0x8] sm:$0xff]
    %v235 = vld [vmem:[#allocation2 + $0x10] sm:$0xff]
    %v236 = vld [vmem:[#allocation2 + $0x18] sm:$0xff]
    %v237 = vld [vmem:[%s4] sm:$0x3]
    %v238 = vunpack.c.l.bf16 %v237
    %v240 = vlaneseq
    %v241 = vshrl.u32 %v240, 7
    %v242 = vsub.s32 0, %v241
    %v243 = vrot.slane %v238, %v242
    %v244 = vlaneseq
    %v245 = vshrl.u32 %v244, 7
    %v246 = vsub.s32 2, %v245
    %v247 = vrot.slane %v238, %v246
    %v250 = vlaneseq
    %v251 = vshrl.u32 %v250, 7
    %v252 = vsub.s32 0, %v251
    %v253 = vrot.slane %v243, %v252
    %v254 = vlaneseq
    %v255 = vshrl.u32 %v254, 7
    %v256 = vsub.s32 0, %v255
    %v257 = vrot.slane %v247, %v256
    %v258 = vadd.f32 %v233, %v253
    %v259 = vadd.f32 %v234, %v257
    %v260 = vadd.f32 %v235, %v253
    %v261 = vadd.f32 %v236, %v257
    %v262 = vmul.f32 %v258, 0.5
    %v263 = vmul.f32 %v259, 0.5
    %v264 = vmul.f32 %v260, 0.5
    %v265 = vmul.f32 %v261, 0.5
    %v266 = vmul.f32 %v258, 0.70710677
    %v267 = vmul.f32 %v259, 0.70710677
    %v268 = vmul.f32 %v260, 0.70710677
    %v269 = vmul.f32 %v261, 0.70710677
    %v270 = verf.f32.pop %v266
    %v271 = verf.f32.pop %v267
    %v272 = verf.f32.pop %v268
    %v273 = verf.f32.pop %v269
    %v274 = vadd.f32 %v270, 1.0
    %v275 = vadd.f32 %v271, 1.0
    %v276 = vadd.f32 %v272, 1.0
    %v277 = vadd.f32 %v273, 1.0
    %v278 = vmul.f32 %v262, %v274
    %v279 = vmul.f32 %v263, %v275
    %v280 = vmul.f32 %v264, %v276
    %v281 = vmul.f32 %v265, %v277
    %v282 = vpack.c.bf16 %v280, %v278
    %v283 = vpack.c.bf16 %v281, %v279
    %v286 = vunpack.c.l.b16 %v282
    %v287 = vunpack.c.l.b16 %v283
    %v288 = vunpack.c.h.b16 %v282
    %v289 = vunpack.c.h.b16 %v283
    %v290 = vpack.c.b16 %v287, %v286
    %v291 = vpack.c.b16 %v289, %v288
    %294 = vst [vmem:[%s5] sm:$0xff] %v290
    %295 = vst [vmem:[%s5 + $0x8] sm:$0xff] %v291
  $region33: #{vit_feature_extractor.16} parent=0 // pred_fallthru
    _
  // Predicated region
  $region34: #{vit_feature_extractor.16} parent=0 // pred_check
    _
  $region35: #{vit_feature_extractor.16} parent=0 // pred_check_branch
    %297 = sbr.rel (0) target = $region37
  $region36: #{vit_feature_extractor.16} parent=0 // pred_region
    _
  $region37: #{vit_feature_extractor.16} parent=0 // pred_fallthru
    _
  // Predicated region
  $region38: #{vit_feature_extractor.16} parent=0 // pred_check
    _
  $region39: #{vit_feature_extractor.16} parent=0 // pred_check_branch
    %299 = sbr.rel (0) target = $region41
  $region40: #{vit_feature_extractor.16} parent=0 // pred_region
    _
  $region41: #{vit_feature_extractor.16} parent=0 // pred_fallthru
    _

</llo_original>
